<compile_context>
chip_gen: v7x
topology: tpu7x:2x2x1
jax: 0.10.0
libtpu: 0.0.40
codegen_flags: <defaults>
</compile_context>

<pallas_src>
import functools

import jax
import jax.numpy as jnp
from jax.experimental import pallas as pl
from jax.experimental.pallas import tpu as pltpu


def acmil_add_kernel(h_ref, w1_ref, b1_ref, wab_ref, bab_ref, wct_ref, bct_ref,
                     wbagt_ref,
                     a_raw_ref, pre_bag_ref, m_out_ref, l_out_ref, acc_out_ref,
                     m_scr, l_scr, acc_scr,
                     *, n_valid, n_total, d_gate):
    f32 = jnp.float32
    bf16 = jnp.bfloat16
    step = pl.program_id(1)            # tile index within this core's chunk
    tile = h_ref.shape[0]

    @pl.when(step == 0)
    def _init():
        m_scr[...] = jnp.full(m_scr.shape, -1e30, f32)
        l_scr[...] = jnp.zeros(l_scr.shape, f32)
        acc_scr[...] = jnp.zeros(acc_scr.shape, f32)

    # fc: Linear(1024 -> 512) + ReLU  (bf16 operands on the MXU, f32 accumulate)
    h1 = jnp.dot(h_ref[...], w1_ref[...], preferred_element_type=f32) + b1_ref[...]
    h1 = jnp.maximum(h1, 0.0)                                        # (tile, 512) f32
    h1_bf = h1.astype(bf16)             # single bf16 copy reused by all matmuls below

    # fused gated attention: one (512 -> 2*256) matmul, split into tanh / sigmoid halves
    z = jnp.dot(h1_bf, wab_ref[...], preferred_element_type=f32) + bab_ref[...]
    gated = jnp.tanh(z[:, :d_gate]) * jax.nn.sigmoid(z[:, d_gate:])  # (tile, 256) f32

    # attention logits directly in lane-dense (n_token, tile) layout:
    #   A_t[t, n] = sum_d wc^T[t, d] * gated[n, d]
    A_t = jax.lax.dot_general(wct_ref[...], gated,
                              dimension_numbers=(((1,), (1,)), ((), ())),
                              preferred_element_type=f32) + bct_ref[...]

    if n_valid < n_total:   # static: only emitted when the bag was padded
        base = (pl.program_id(0) * pl.num_programs(1) + step) * tile
        col = base + jax.lax.broadcasted_iota(jnp.int32, A_t.shape, 1)
        A_t = jnp.where(col < n_valid, A_t, jnp.float32(-1e30))

    a_raw_ref[...] = A_t                                             # pre-softmax attention

    # online softmax over the patch axis + pooled-feature accumulation
    m_new = jnp.maximum(m_scr[...], jnp.max(A_t, axis=1, keepdims=True))
    alpha = jnp.exp(m_scr[...] - m_new)
    p = jnp.exp(A_t - m_new)                                         # (n_token, tile)
    l_scr[...] = alpha * l_scr[...] + jnp.sum(p, axis=1, keepdims=True)
    acc_scr[...] = alpha * acc_scr[...] + jnp.dot(
        p.astype(bf16), h1_bf, preferred_element_type=f32)
    m_scr[...] = m_new

    # per-patch bag pre-logits, lane-dense (C, tile):  (w_bag^T) contracted with h1 on D1
    pre_bag_ref[...] = jax.lax.dot_general(
        wbagt_ref[...], h1_bf,
        dimension_numbers=(((1,), (1,)), ((), ())),
        preferred_element_type=f32)

    # export this core's softmax statistics + pooled accumulator on its last tile
    @pl.when(step == pl.num_programs(1) - 1)
    def _finalize():
        m_out_ref[...] = m_scr[...]
        l_out_ref[...] = l_scr[...]
        acc_out_ref[...] = acc_scr[...]


def _round_up(x, m):
    return (x + m - 1) // m * m


def acmil_add_forward(h, params, max_tile=1024, n_core_splits=2):
    """Forward pass of ACMIL_ADD.  Returns (stacked head logits, logits_raw, A_raw[None])."""
    N, L = h.shape
    n_token, D1, C = params["w_cls"].shape
    D2 = params["wa"].shape[1]
    f32 = jnp.float32

    # Patch-axis tiling: tile is a multiple of 128 (lane-dense a_raw / pre_bag blocks);
    # the bag is split into n_core_splits contiguous chunks so the outer "parallel"
    # grid axis can be sharded across TensorCores on multi-core chips.
    tile = min(max_tile, _round_up(-(-N // n_core_splits), 128))
    n_pad = _round_up(N, n_core_splits * tile)
    n_tiles_per_core = n_pad // (n_core_splits * tile)
    T = n_tiles_per_core

    # cast before padding (half the pre-kernel HBM traffic); padded rows are exact zeros
    h_bf = h.astype(jnp.bfloat16)
    if n_pad != N:
        h_bf = jnp.pad(h_bf, ((0, n_pad - N), (0, 0)))

    # fused gated-attention projection (wa | wb) and layout-friendly transposes
    w_ab = jnp.concatenate([params["wa"], params["wb"]], axis=1).astype(jnp.bfloat16)
    b_ab = jnp.concatenate([params["ba"], params["bb"]], axis=1)
    wc_t = params["wc"].T                                    # (n_token, D2)
    bc_t = params["bc"].T                                    # (n_token, 1)
    wbag_t = params["w_bag"].T.astype(jnp.bfloat16)          # (C, D1)

    kernel = functools.partial(acmil_add_kernel,
                               n_valid=N, n_total=n_pad, d_gate=D2)

    const2 = lambda c, i: (0, 0)
    in_specs = [
        pl.BlockSpec((tile, L), lambda c, i: (c * T + i, 0)),   # h (streamed)
        pl.BlockSpec((L, D1), const2),                          # w1
        pl.BlockSpec((1, D1), const2),                          # b1
        pl.BlockSpec((D1, 2 * D2), const2),                     # w_ab (fused)
        pl.BlockSpec((1, 2 * D2), const2),                      # b_ab
        pl.BlockSpec((n_token, D2), const2),                    # wc^T
        pl.BlockSpec((n_token, 1), const2),                     # bc^T
        pl.BlockSpec((C, D1), const2),                          # w_bag^T
    ]
    out_specs = (
        pl.BlockSpec((n_token, tile), lambda c, i: (0, c * T + i)),  # A_raw (lane-dense)
        pl.BlockSpec((C, tile), lambda c, i: (0, c * T + i)),        # pre_bag^T (lane-dense)
        pl.BlockSpec((None, n_token, 1), lambda c, i: (c, 0, 0)),    # per-core running max
        pl.BlockSpec((None, n_token, 1), lambda c, i: (c, 0, 0)),    # per-core running sum
        pl.BlockSpec((None, n_token, D1), lambda c, i: (c, 0, 0)),   # per-core pooled acc
    )
    out_shape = (
        jax.ShapeDtypeStruct((n_token, n_pad), f32),
        jax.ShapeDtypeStruct((C, n_pad), f32),
        jax.ShapeDtypeStruct((n_core_splits, n_token, 1), f32),
        jax.ShapeDtypeStruct((n_core_splits, n_token, 1), f32),
        jax.ShapeDtypeStruct((n_core_splits, n_token, D1), f32),
    )

    a_raw_p, pre_bag_t, m_parts, l_parts, acc_parts = pl.pallas_call(
        kernel,
        grid=(n_core_splits, n_tiles_per_core),
        in_specs=in_specs,
        out_specs=out_specs,
        out_shape=out_shape,
        scratch_shapes=[
            pltpu.VMEM((n_token, 1), f32),    # running max
            pltpu.VMEM((n_token, 1), f32),    # running sum
            pltpu.VMEM((n_token, D1), f32),   # pooled-feature accumulator
        ],
        compiler_params=pltpu.CompilerParams(
            dimension_semantics=("parallel", "arbitrary"),
            vmem_limit_bytes=48 * 1024 * 1024,
        ),
    )(h_bf,
      params["w1"].astype(jnp.bfloat16), params["b1"],
      w_ab, b_ab, wc_t, bc_t, wbag_t)

    # ---- tiny wrapper epilogue (O(n_token*D1 + N*(n_token+C)) elementwise) ----
    # combine per-core online-softmax partials; all-padding cores get weight exp(-1e30-m)=0
    m = jnp.max(m_parts, axis=0)                      # (n_token, 1) global max
    scale = jnp.exp(m_parts - m[None])                # (n_cores, n_token, 1)
    l = jnp.sum(l_parts * scale, axis=0)              # (n_token, 1) global sum
    acc = jnp.sum(acc_parts * scale, axis=0)          # (n_token, D1)
    M = acc / l                                       # pooled features

    out_cls = jnp.einsum('ts,tsc->tc', M, params["w_cls"]) + params["b_cls"]

    a_raw = a_raw_p[:, :N]                            # (n_token, N)
    # bag softmax weights from the exported statistics (no extra max/sum pass over a_raw)
    bag_A = jnp.mean(jnp.exp(a_raw - m) / l, axis=0)  # (N,)
    # (bag_A * h1) @ W_bag == bag_A * (h1 @ W_bag); stay in lane-dense (C, N) then transpose
    logits_raw = (bag_A[None, :] * pre_bag_t[:, :N] + params["b_bag"].T).T   # (N, C)
    return out_cls, logits_raw, a_raw[None]


def init_params(key, L=1024, D1=512, D2=256, n_token=1, n_classes=2):
    ks = jax.random.split(key, 7)

    def lin(k, fan_in, fan_out):
        return jax.random.normal(k, (fan_in, fan_out), jnp.float32) / jnp.sqrt(fan_in)

    return dict(
        w1=lin(ks[0], L, D1),  b1=jnp.zeros((1, D1), jnp.float32),
        wa=lin(ks[1], D1, D2), ba=jnp.zeros((1, D2), jnp.float32),
        wb=lin(ks[2], D1, D2), bb=jnp.zeros((1, D2), jnp.float32),
        wc=lin(ks[3], D2, n_token), bc=jnp.zeros((1, n_token), jnp.float32),
        w_cls=jax.random.normal(ks[4], (n_token, D1, n_classes), jnp.float32) / jnp.sqrt(D1),
        b_cls=jnp.zeros((n_token, n_classes), jnp.float32),
        w_bag=lin(ks[5], D1, n_classes), b_bag=jnp.zeros((1, n_classes), jnp.float32),
    )


def acmil_add_reference(h, p):
    """Pure-JAX f32 reference mirroring the torch forward exactly."""
    h1 = jnp.maximum(h @ p["w1"] + p["b1"], 0.0)
    a = jnp.tanh(h1 @ p["wa"] + p["ba"])
    b = jax.nn.sigmoid(h1 @ p["wb"] + p["bb"])
    A = (a * b) @ p["wc"] + p["bc"]                 # (N, n_token)
    A_raw = A.T                                     # (n_token, N)
    A_soft = jax.nn.softmax(A_raw, axis=1)
    M = A_soft @ h1                                 # (n_token, 512)
    outs = jnp.stack([M[i] @ p["w_cls"][i] + p["b_cls"][i]
                      for i in range(A_raw.shape[0])], axis=0)
    bag_A = A_soft.mean(0, keepdims=True).T         # (N, 1)
    logits_raw = (bag_A * h1) @ p["w_bag"] + p["b_bag"]
    return outs, logits_raw, A_raw[None]


def _check(h, params, tol=5e-2):
    out = jax.block_until_ready(acmil_add_forward(h, params))
    ref = acmil_add_reference(h, params)
    for o, r in zip(out, ref):
        assert o.shape == r.shape, (o.shape, r.shape)
        err = float(jnp.max(jnp.abs(o - r)))
        # bf16 MXU operands (h, w1, w_ab, h1, p, w_bag) => ~1e-2-scale absolute error budget
        assert err < tol, err


if __name__ == "__main__":
    key = jax.random.PRNGKey(0)
    k_h, k_p, k_h2, k_p2 = jax.random.split(key, 4)

    # default module config: n_token=1, n_classes=2, small bag of 64 patches
    h = jax.random.normal(k_h, (64, 1024), jnp.float32)
    params = init_params(k_p, n_token=1, n_classes=2)
    _check(h, params)

    # second config: multi-token heads + a bag size exercising padding/masking + both chunks
    h2 = jax.random.normal(k_h2, (200, 1024), jnp.float32)
    params2 = init_params(k_p2, n_token=5, n_classes=2)
    _check(h2, params2)

    print("KERNEL_OK")
</pallas_src>

<mosaic_0001>
module attributes {stable_mosaic.version = 11 : i64} {
  func.func @acmil_add_kernel(%arg0: i32, %arg1: i32, %arg2: memref<128x1024xbf16, #tpu.memory_space<vmem>>, %arg3: memref<1024x512xbf16, #tpu.memory_space<vmem>>, %arg4: memref<1x512xf32, #tpu.memory_space<vmem>>, %arg5: memref<512x512xbf16, #tpu.memory_space<vmem>>, %arg6: memref<1x512xf32, #tpu.memory_space<vmem>>, %arg7: memref<1x256xf32, #tpu.memory_space<vmem>>, %arg8: memref<1x1xf32, #tpu.memory_space<vmem>>, %arg9: memref<2x512xbf16, #tpu.memory_space<vmem>>, %arg10: memref<1x128xf32, #tpu.memory_space<vmem>>, %arg11: memref<2x128xf32, #tpu.memory_space<vmem>>, %arg12: memref<1x1x1xf32, #tpu.memory_space<vmem>>, %arg13: memref<1x1x1xf32, #tpu.memory_space<vmem>>, %arg14: memref<1x1x512xf32, #tpu.memory_space<vmem>>, %arg15: memref<1x1xf32, #tpu.memory_space<vmem>>, %arg16: memref<1x1xf32, #tpu.memory_space<vmem>>, %arg17: memref<1x512xf32, #tpu.memory_space<vmem>>) attributes {dimension_semantics = [#tpu.dimension_semantics<parallel>, #tpu.dimension_semantics<arbitrary>], iteration_bounds = array<i64: 2, 1>, scalar_prefetch = 0 : i64, scratch_operands = 3 : i64, tpu.core_type = #tpu.core_type<tc>, window_params = [{transform_indices = @transform_0, window_bounds = array<i64: 128, 1024>}, {pipeline_mode = #tpu.pipeline_mode<synchronous>, transform_indices = @transform_1, window_bounds = array<i64: 1024, 512>}, {pipeline_mode = #tpu.pipeline_mode<synchronous>, transform_indices = @transform_2, window_bounds = array<i64: 1, 512>}, {pipeline_mode = #tpu.pipeline_mode<synchronous>, transform_indices = @transform_3, window_bounds = array<i64: 512, 512>}, {pipeline_mode = #tpu.pipeline_mode<synchronous>, transform_indices = @transform_4, window_bounds = array<i64: 1, 512>}, {pipeline_mode = #tpu.pipeline_mode<synchronous>, transform_indices = @transform_5, window_bounds = array<i64: 1, 256>}, {pipeline_mode = #tpu.pipeline_mode<synchronous>, transform_indices = @transform_6, window_bounds = array<i64: 1, 1>}, {pipeline_mode = #tpu.pipeline_mode<synchronous>, transform_indices = @transform_7, window_bounds = array<i64: 2, 512>}, {transform_indices = @transform_8, window_bounds = array<i64: 1, 128>}, {transform_indices = @transform_9, window_bounds = array<i64: 2, 128>}, {transform_indices = @transform_10, window_bounds = array<i64: 1, 1, 1>}, {transform_indices = @transform_11, window_bounds = array<i64: 1, 1, 1>}, {transform_indices = @transform_12, window_bounds = array<i64: 1, 1, 512>}]} {
    %c0_i32 = arith.constant 0 : i32
    %0 = arith.cmpi eq, %arg1, %c0_i32 : i32
    %1 = arith.extui %0 : i1 to i32
    %c0_i32_0 = arith.constant 0 : i32
    %2 = arith.cmpi ne, %1, %c0_i32_0 : i32
    scf.if %2 {
      %cst_45 = arith.constant -1.000000e+30 : f32
      %72 = vector.broadcast %cst_45 : f32 to vector<1x1xf32>
      %c0_46 = arith.constant 0 : index
      %c0_47 = arith.constant 0 : index
      %73 = vector.load %arg15[%c0_46, %c0_47] : memref<1x1xf32, #tpu.memory_space<vmem>>, vector<1x1xf32>
      tpu.vector_store %arg15[%c0_46, %c0_47], %72 {strides = array<i32>} : memref<1x1xf32, #tpu.memory_space<vmem>>, vector<1x1xf32>,
      %cst_48 = arith.constant 0.000000e+00 : f32
      %74 = vector.broadcast %cst_48 : f32 to vector<1x1xf32>
      %c0_49 = arith.constant 0 : index
      %c0_50 = arith.constant 0 : index
      %75 = vector.load %arg16[%c0_49, %c0_50] : memref<1x1xf32, #tpu.memory_space<vmem>>, vector<1x1xf32>
      tpu.vector_store %arg16[%c0_49, %c0_50], %74 {strides = array<i32>} : memref<1x1xf32, #tpu.memory_space<vmem>>, vector<1x1xf32>,
      %cst_51 = arith.constant 0.000000e+00 : f32
      %76 = vector.broadcast %cst_51 : f32 to vector<1x512xf32>
      %c0_52 = arith.constant 0 : index
      %c0_53 = arith.constant 0 : index
      %77 = vector.load %arg17[%c0_52, %c0_53] : memref<1x512xf32, #tpu.memory_space<vmem>>, vector<1x512xf32>
      tpu.vector_store %arg17[%c0_52, %c0_53], %76 {strides = array<i32>} : memref<1x512xf32, #tpu.memory_space<vmem>>, vector<1x512xf32>,
    } else {
    }
    %c0 = arith.constant 0 : index
    %c0_1 = arith.constant 0 : index
    %3 = vector.load %arg2[%c0, %c0_1] : memref<128x1024xbf16, #tpu.memory_space<vmem>>, vector<128x1024xbf16>
    %c0_2 = arith.constant 0 : index
    %c0_3 = arith.constant 0 : index
    %4 = vector.load %arg3[%c0_2, %c0_3] : memref<1024x512xbf16, #tpu.memory_space<vmem>>, vector<1024x512xbf16>
    %cst = arith.constant dense<0.000000e+00> : vector<128x512xf32>
    %5 = tpu.matmul %3, %4, %cst {dimension_numbers = #tpu.dot_dimension_numbers<[1], [0], [0], [1], [0, 0, 1, 1], [], []>} : vector<128x1024xbf16>, vector<1024x512xbf16>, vector<128x512xf32> -> vector<128x512xf32>
    %c0_4 = arith.constant 0 : index
    %c0_5 = arith.constant 0 : index
    %6 = vector.load %arg4[%c0_4, %c0_5] : memref<1x512xf32, #tpu.memory_space<vmem>>, vector<1x512xf32>
    %7 = vector.broadcast %6 : vector<1x512xf32> to vector<128x512xf32>
    %8 = arith.addf %5, %7 : vector<128x512xf32>
    %cst_6 = arith.constant 0.000000e+00 : f32
    %9 = vector.broadcast %cst_6 : f32 to vector<128x512xf32>
    %10 = arith.maximumf %8, %9 : vector<128x512xf32>
    %11 = arith.truncf %10 : vector<128x512xf32> to vector<128x512xbf16>
    %c0_7 = arith.constant 0 : index
    %c0_8 = arith.constant 0 : index
    %12 = vector.load %arg5[%c0_7, %c0_8] : memref<512x512xbf16, #tpu.memory_space<vmem>>, vector<512x512xbf16>
    %cst_9 = arith.constant dense<0.000000e+00> : vector<128x512xf32>
    %13 = tpu.matmul %11, %12, %cst_9 {dimension_numbers = #tpu.dot_dimension_numbers<[1], [0], [0], [1], [0, 0, 1, 1], [], []>} : vector<128x512xbf16>, vector<512x512xbf16>, vector<128x512xf32> -> vector<128x512xf32>
    %c0_10 = arith.constant 0 : index
    %c0_11 = arith.constant 0 : index
    %14 = vector.load %arg6[%c0_10, %c0_11] : memref<1x512xf32, #tpu.memory_space<vmem>>, vector<1x512xf32>
    %15 = vector.broadcast %14 : vector<1x512xf32> to vector<128x512xf32>
    %16 = arith.addf %13, %15 : vector<128x512xf32>
    %17 = vector.extract_strided_slice %16 {offsets = [0, 0], sizes = [128, 256], strides = [1, 1]} : vector<128x512xf32> to vector<128x256xf32>
    %18 = math.tanh %17 : vector<128x256xf32>
    %19 = vector.extract_strided_slice %16 {offsets = [0, 256], sizes = [128, 256], strides = [1, 1]} : vector<128x512xf32> to vector<128x256xf32>
    %20 = arith.negf %19 : vector<128x256xf32>
    %21 = math.exp %20 : vector<128x256xf32>
    %cst_12 = arith.constant 1.000000e+00 : f32
    %22 = vector.broadcast %cst_12 : f32 to vector<128x256xf32>
    %23 = arith.addf %22, %21 : vector<128x256xf32>
    %24 = arith.divf %22, %23 : vector<128x256xf32>
    %25 = arith.mulf %18, %24 : vector<128x256xf32>
    %c0_13 = arith.constant 0 : index
    %c0_14 = arith.constant 0 : index
    %26 = vector.load %arg7[%c0_13, %c0_14] : memref<1x256xf32, #tpu.memory_space<vmem>>, vector<1x256xf32>
    %cst_15 = arith.constant dense<0.000000e+00> : vector<1x128xf32>
    %27 = tpu.matmul %26, %25, %cst_15 {dimension_numbers = #tpu.dot_dimension_numbers<[1], [1], [0], [0], [0, 0, 1, 0], [], []>} : vector<1x256xf32>, vector<128x256xf32>, vector<1x128xf32> -> vector<1x128xf32>
    %c0_16 = arith.constant 0 : index
    %c0_17 = arith.constant 0 : index
    %28 = vector.load %arg8[%c0_16, %c0_17] : memref<1x1xf32, #tpu.memory_space<vmem>>, vector<1x1xf32>
    %29 = vector.broadcast %28 : vector<1x1xf32> to vector<1x128xf32>
    %30 = arith.addf %27, %29 : vector<1x128xf32>
    %c1_i32 = arith.constant 1 : i32
    %31 = arith.muli %arg0, %c1_i32 : i32
    %32 = arith.addi %31, %arg1 : i32
    %c128_i32 = arith.constant 128 : i32
    %33 = arith.muli %32, %c128_i32 : i32
    %34 = tpu.iota {dimensions = array<i32: 1>} : vector<1x128xi32>
    %35 = vector.broadcast %33 : i32 to vector<1x128xi32>
    %36 = arith.addi %35, %34 : vector<1x128xi32>
    %c64_i32 = arith.constant 64 : i32
    %37 = vector.broadcast %c64_i32 : i32 to vector<1x128xi32>
    %38 = arith.cmpi slt, %36, %37 : vector<1x128xi32>
    %cst_18 = arith.constant -1.000000e+30 : f32
    %39 = vector.broadcast %cst_18 : f32 to vector<1x128xf32>
    %40 = arith.select %38, %30, %39 : vector<1x128xi1>, vector<1x128xf32>
    %c0_19 = arith.constant 0 : index
    %c0_20 = arith.constant 0 : index
    %41 = vector.load %arg10[%c0_19, %c0_20] : memref<1x128xf32, #tpu.memory_space<vmem>>, vector<1x128xf32>
    tpu.vector_store %arg10[%c0_19, %c0_20], %40 {strides = array<i32>} : memref<1x128xf32, #tpu.memory_space<vmem>>, vector<1x128xf32>,
    %c0_21 = arith.constant 0 : index
    %c0_22 = arith.constant 0 : index
    %42 = vector.load %arg15[%c0_21, %c0_22] : memref<1x1xf32, #tpu.memory_space<vmem>>, vector<1x1xf32>
    %cst_23 = arith.constant dense<0xFF800000> : vector<1xf32>
    %43 = vector.multi_reduction <maximumf>, %40, %cst_23 [1] : vector<1x128xf32> to vector<1xf32>
    %44 = vector.shape_cast %43 : vector<1xf32> to vector<1x1xf32>
    %45 = arith.maximumf %42, %44 : vector<1x1xf32>
    %c0_24 = arith.constant 0 : index
    %c0_25 = arith.constant 0 : index
    %46 = vector.load %arg15[%c0_24, %c0_25] : memref<1x1xf32, #tpu.memory_space<vmem>>, vector<1x1xf32>
    %47 = arith.subf %46, %45 : vector<1x1xf32>
    %48 = math.exp %47 : vector<1x1xf32>
    %49 = vector.broadcast %45 : vector<1x1xf32> to vector<1x128xf32>
    %50 = arith.subf %40, %49 : vector<1x128xf32>
    %51 = math.exp %50 : vector<1x128xf32>
    %c0_26 = arith.constant 0 : index
    %c0_27 = arith.constant 0 : index
    %52 = vector.load %arg16[%c0_26, %c0_27] : memref<1x1xf32, #tpu.memory_space<vmem>>, vector<1x1xf32>
    %53 = arith.mulf %48, %52 : vector<1x1xf32>
    %cst_28 = arith.constant dense<0.000000e+00> : vector<1xf32>
    %54 = vector.multi_reduction <add>, %51, %cst_28 [1] : vector<1x128xf32> to vector<1xf32>
    %55 = vector.shape_cast %54 : vector<1xf32> to vector<1x1xf32>
    %56 = arith.addf %53, %55 : vector<1x1xf32>
    %c0_29 = arith.constant 0 : index
    %c0_30 = arith.constant 0 : index
    %57 = vector.load %arg16[%c0_29, %c0_30] : memref<1x1xf32, #tpu.memory_space<vmem>>, vector<1x1xf32>
    tpu.vector_store %arg16[%c0_29, %c0_30], %56 {strides = array<i32>} : memref<1x1xf32, #tpu.memory_space<vmem>>, vector<1x1xf32>,
    %c0_31 = arith.constant 0 : index
    %c0_32 = arith.constant 0 : index
    %58 = vector.load %arg17[%c0_31, %c0_32] : memref<1x512xf32, #tpu.memory_space<vmem>>, vector<1x512xf32>
    %59 = vector.broadcast %48 : vector<1x1xf32> to vector<1x512xf32>
    %60 = arith.mulf %59, %58 : vector<1x512xf32>
    %61 = arith.truncf %51 : vector<1x128xf32> to vector<1x128xbf16>
    %cst_33 = arith.constant dense<0.000000e+00> : vector<1x512xf32>
    %62 = tpu.matmul %61, %11, %cst_33 {dimension_numbers = #tpu.dot_dimension_numbers<[1], [0], [0], [1], [0, 0, 1, 1], [], []>} : vector<1x128xbf16>, vector<128x512xbf16>, vector<1x512xf32> -> vector<1x512xf32>
    %63 = arith.addf %60, %62 : vector<1x512xf32>
    %c0_34 = arith.constant 0 : index
    %c0_35 = arith.constant 0 : index
    %64 = vector.load %arg17[%c0_34, %c0_35] : memref<1x512xf32, #tpu.memory_space<vmem>>, vector<1x512xf32>
    tpu.vector_store %arg17[%c0_34, %c0_35], %63 {strides = array<i32>} : memref<1x512xf32, #tpu.memory_space<vmem>>, vector<1x512xf32>,
    %c0_36 = arith.constant 0 : index
    %c0_37 = arith.constant 0 : index
    %65 = vector.load %arg15[%c0_36, %c0_37] : memref<1x1xf32, #tpu.memory_space<vmem>>, vector<1x1xf32>
    tpu.vector_store %arg15[%c0_36, %c0_37], %45 {strides = array<i32>} : memref<1x1xf32, #tpu.memory_space<vmem>>, vector<1x1xf32>,
    %c0_38 = arith.constant 0 : index
    %c0_39 = arith.constant 0 : index
    %66 = vector.load %arg9[%c0_38, %c0_39] : memref<2x512xbf16, #tpu.memory_space<vmem>>, vector<2x512xbf16>
    %cst_40 = arith.constant dense<0.000000e+00> : vector<2x128xf32>
    %67 = tpu.matmul %66, %11, %cst_40 {dimension_numbers = #tpu.dot_dimension_numbers<[1], [1], [0], [0], [0, 0, 1, 0], [], []>} : vector<2x512xbf16>, vector<128x512xbf16>, vector<2x128xf32> -> vector<2x128xf32>
    %c0_41 = arith.constant 0 : index
    %c0_42 = arith.constant 0 : index
    %68 = vector.load %arg11[%c0_41, %c0_42] : memref<2x128xf32, #tpu.memory_space<vmem>>, vector<2x128xf32>
    tpu.vector_store %arg11[%c0_41, %c0_42], %67 {strides = array<i32>} : memref<2x128xf32, #tpu.memory_space<vmem>>, vector<2x128xf32>,
    %c0_i32_43 = arith.constant 0 : i32
    %69 = arith.cmpi eq, %arg1, %c0_i32_43 : i32
    %70 = arith.extui %69 : i1 to i32
    %c0_i32_44 = arith.constant 0 : i32
    %71 = arith.cmpi ne, %70, %c0_i32_44 : i32
    scf.if %71 {
      %c0_45 = arith.constant 0 : index
      %c0_46 = arith.constant 0 : index
      %72 = vector.load %arg15[%c0_45, %c0_46] : memref<1x1xf32, #tpu.memory_space<vmem>>, vector<1x1xf32>
      %c0_47 = arith.constant 0 : index
      %c0_48 = arith.constant 0 : index
      %c0_49 = arith.constant 0 : index
      %73 = vector.load %arg12[%c0_47, %c0_48, %c0_49] : memref<1x1x1xf32, #tpu.memory_space<vmem>>, vector<1x1x1xf32>
      %74 = vector.shape_cast %73 : vector<1x1x1xf32> to vector<1x1xf32>
      %75 = vector.shape_cast %72 : vector<1x1xf32> to vector<1x1x1xf32>
      tpu.vector_store %arg12[%c0_47, %c0_48, %c0_49], %75 {strides = array<i32>} : memref<1x1x1xf32, #tpu.memory_space<vmem>>, vector<1x1x1xf32>,
      %c0_50 = arith.constant 0 : index
      %c0_51 = arith.constant 0 : index
      %76 = vector.load %arg16[%c0_50, %c0_51] : memref<1x1xf32, #tpu.memory_space<vmem>>, vector<1x1xf32>
      %c0_52 = arith.constant 0 : index
      %c0_53 = arith.constant 0 : index
      %c0_54 = arith.constant 0 : index
      %77 = vector.load %arg13[%c0_52, %c0_53, %c0_54] : memref<1x1x1xf32, #tpu.memory_space<vmem>>, vector<1x1x1xf32>
      %78 = vector.shape_cast %77 : vector<1x1x1xf32> to vector<1x1xf32>
      %79 = vector.shape_cast %76 : vector<1x1xf32> to vector<1x1x1xf32>
      tpu.vector_store %arg13[%c0_52, %c0_53, %c0_54], %79 {strides = array<i32>} : memref<1x1x1xf32, #tpu.memory_space<vmem>>, vector<1x1x1xf32>,
      %c0_55 = arith.constant 0 : index
      %c0_56 = arith.constant 0 : index
      %80 = vector.load %arg17[%c0_55, %c0_56] : memref<1x512xf32, #tpu.memory_space<vmem>>, vector<1x512xf32>
      %c0_57 = arith.constant 0 : index
      %c0_58 = arith.constant 0 : index
      %c0_59 = arith.constant 0 : index
      %81 = vector.load %arg14[%c0_57, %c0_58, %c0_59] : memref<1x1x512xf32, #tpu.memory_space<vmem>>, vector<1x1x512xf32>
      %82 = vector.shape_cast %81 : vector<1x1x512xf32> to vector<1x512xf32>
      %83 = vector.shape_cast %80 : vector<1x512xf32> to vector<1x1x512xf32>
      tpu.vector_store %arg14[%c0_57, %c0_58, %c0_59], %83 {strides = array<i32>} : memref<1x1x512xf32, #tpu.memory_space<vmem>>, vector<1x1x512xf32>,
    } else {
    }
    return
  }
  func.func @transform_0(%arg0: i32, %arg1: i32) -> (i32, i32) {
    %c1_i32 = arith.constant 1 : i32
    %0 = arith.muli %arg0, %c1_i32 : i32
    %1 = arith.addi %0, %arg1 : i32
    %c0_i32 = arith.constant 0 : i32
    %c0_i32_0 = arith.constant 0 : i32
    return %1, %c0_i32 : i32, i32
  }
  func.func @transform_1(%arg0: i32, %arg1: i32) -> (i32, i32) {
    %c0_i32 = arith.constant 0 : i32
    %c0_i32_0 = arith.constant 0 : i32
    %c0_i32_1 = arith.constant 0 : i32
    return %c0_i32, %c0_i32_0 : i32, i32
  }
  func.func @transform_2(%arg0: i32, %arg1: i32) -> (i32, i32) {
    %c0_i32 = arith.constant 0 : i32
    %c0_i32_0 = arith.constant 0 : i32
    %c0_i32_1 = arith.constant 0 : i32
    return %c0_i32, %c0_i32_0 : i32, i32
  }
  func.func @transform_3(%arg0: i32, %arg1: i32) -> (i32, i32) {
    %c0_i32 = arith.constant 0 : i32
    %c0_i32_0 = arith.constant 0 : i32
    %c0_i32_1 = arith.constant 0 : i32
    return %c0_i32, %c0_i32_0 : i32, i32
  }
  func.func @transform_4(%arg0: i32, %arg1: i32) -> (i32, i32) {
    %c0_i32 = arith.constant 0 : i32
    %c0_i32_0 = arith.constant 0 : i32
    %c0_i32_1 = arith.constant 0 : i32
    return %c0_i32, %c0_i32_0 : i32, i32
  }
  func.func @transform_5(%arg0: i32, %arg1: i32) -> (i32, i32) {
    %c0_i32 = arith.constant 0 : i32
    %c0_i32_0 = arith.constant 0 : i32
    %c0_i32_1 = arith.constant 0 : i32
    return %c0_i32, %c0_i32_0 : i32, i32
  }
  func.func @transform_6(%arg0: i32, %arg1: i32) -> (i32, i32) {
    %c0_i32 = arith.constant 0 : i32
    %c0_i32_0 = arith.constant 0 : i32
    %c0_i32_1 = arith.constant 0 : i32
    return %c0_i32, %c0_i32_0 : i32, i32
  }
  func.func @transform_7(%arg0: i32, %arg1: i32) -> (i32, i32) {
    %c0_i32 = arith.constant 0 : i32
    %c0_i32_0 = arith.constant 0 : i32
    %c0_i32_1 = arith.constant 0 : i32
    return %c0_i32, %c0_i32_0 : i32, i32
  }
  func.func @transform_8(%arg0: i32, %arg1: i32) -> (i32, i32) {
    %c1_i32 = arith.constant 1 : i32
    %0 = arith.muli %arg0, %c1_i32 : i32
    %1 = arith.addi %0, %arg1 : i32
    %c0_i32 = arith.constant 0 : i32
    %c0_i32_0 = arith.constant 0 : i32
    return %c0_i32, %1 : i32, i32
  }
  func.func @transform_9(%arg0: i32, %arg1: i32) -> (i32, i32) {
    %c1_i32 = arith.constant 1 : i32
    %0 = arith.muli %arg0, %c1_i32 : i32
    %1 = arith.addi %0, %arg1 : i32
    %c0_i32 = arith.constant 0 : i32
    %c0_i32_0 = arith.constant 0 : i32
    return %c0_i32, %1 : i32, i32
  }
  func.func @transform_10(%arg0: i32, %arg1: i32) -> (i32, i32, i32) {
    %c0_i32 = arith.constant 0 : i32
    %c0_i32_0 = arith.constant 0 : i32
    %c0_i32_1 = arith.constant 0 : i32
    return %arg0, %c0_i32, %c0_i32_0 : i32, i32, i32
  }
  func.func @transform_11(%arg0: i32, %arg1: i32) -> (i32, i32, i32) {
    %c0_i32 = arith.constant 0 : i32
    %c0_i32_0 = arith.constant 0 : i32
    %c0_i32_1 = arith.constant 0 : i32
    return %arg0, %c0_i32, %c0_i32_0 : i32, i32, i32
  }
  func.func @transform_12(%arg0: i32, %arg1: i32) -> (i32, i32, i32) {
    %c0_i32 = arith.constant 0 : i32
    %c0_i32_0 = arith.constant 0 : i32
    %c0_i32_1 = arith.constant 0 : i32
    return %arg0, %c0_i32, %c0_i32_0 : i32, i32, i32
  }
}

</mosaic_0001>

<llo_original>
// kernel: tpu_custom_call.1
$region0: #{tpu_custom_call.1}
  #allocation0 [shape = 'u32[]', space=smem, size = 0x4, offset = 0x4, fixed_abs, tag = 'smem constant byte address 0x4 - core index']
  #allocation1 [shape = 'u32[144,128]{1,0:T(1,128)}', space=vmem, size = 0x12000, scoped, tag = 'internal scratch']
  #allocation2 [shape = 'f32[1,1]{1,0:T(1,128)}', space=vmem, size = 0x200, scoped, tag = 'scratch operand']
  #allocation3 [shape = 'f32[1,1]{1,0:T(1,128)}', space=vmem, size = 0x200, scoped, tag = 'scratch operand']
  #allocation4 [shape = 'f32[1,512]{1,0:T(1,128)}', space=vmem, size = 0x800, scoped, tag = 'scratch operand']
  #allocation5 [shape = 'f32[1,1]{1,0:T(1,128)S(1)}', space=vmem, size = 0x200, scoped, tag = 'scoped memory for tpu_custom_call.1']
  %s0 = inlined_call_operand.hbm [shape: bf16[256,1024], index: 0, kind: input, shape index: {}]
  %s1 = inlined_call_operand.hbm [shape: bf16[1024,512], index: 1, kind: input, shape index: {}]
  %s2 = inlined_call_operand.vmem [shape: f32[1,512], index: 2, kind: input, shape index: {}]
  %s3 = inlined_call_operand.hbm [shape: bf16[512,512], index: 3, kind: input, shape index: {}]
  %s4 = inlined_call_operand.vmem [shape: f32[1,512], index: 4, kind: input, shape index: {}]
  %s5 = inlined_call_operand.vmem [shape: f32[1,256], index: 5, kind: input, shape index: {}]
  %s6 = inlined_call_operand.<no memory space> [shape: f32[1,1], index: 6, kind: input, shape index: {}]
  %s7 = inlined_call_operand.vmem [shape: bf16[2,512], index: 7, kind: input, shape index: {}]
  %s8 = inlined_call_operand.hbm [shape: f32[1,256], index: 8, kind: output, shape index: {0}]
  %s9 = inlined_call_operand.hbm [shape: f32[2,256], index: 9, kind: output, shape index: {1}]
  %s10 = inlined_call_operand.vmem [shape: f32[2,1,1], index: 10, kind: output, shape index: {2}]
  %s11 = inlined_call_operand.vmem [shape: f32[2,1,1], index: 11, kind: output, shape index: {3}]
  %s12 = inlined_call_operand.hbm [shape: f32[2,1,512], index: 12, kind: output, shape index: {4}]
  %13 = xla_tuple %s8, %s9, %s10, %s11, %s12
  %s14 = sld [smem:[#allocation0]]
  $region117: #{tpu_custom_call.1} parent=0
    _
  %s16 = ssub.s32 1, %s14
  %s17 = scalar_select 0, %s16, %s14
  %v18 = vstv %s6
  %19 = vst [vmem:[#allocation5] sm:$0x1] %v18
  $region1: #{tpu_custom_call.1} parent=0
    #allocation6 [shape = 'u8[524288]{0}', space=vmem, size = 0x80000, scoped, tag = 'input window, operand 0']
    #allocation7 [shape = 's32[2]{0}', space=sflag, size = 0x8, scoped, tag = 'scoped memory for tpu_custom_call.1']
    #allocation8 [shape = 's32[2]{0}', space=sflag, size = 0x8, scoped, tag = 'scoped memory for tpu_custom_call.1']
    #allocation9 [shape = 'u8[1048576]{0}', space=vmem, size = 0x100000, scoped, tag = 'input window, operand 1, single buffered']
    #allocation10 [shape = 's32[1]{0}', space=sflag, size = 0x4, scoped, tag = 'scoped memory for tpu_custom_call.1']
    #allocation11 [shape = 'u8[524288]{0}', space=vmem, size = 0x80000, scoped, tag = 'input window, operand 3, single buffered']
    #allocation12 [shape = 'u8[1024]{0}', space=vmem, size = 0x400, scoped, tag = 'output window, operand 0']
    #allocation13 [shape = 'u8[2048]{0}', space=vmem, size = 0x800, scoped, tag = 'output window, operand 1']
    #allocation14 [shape = 's32[2]{0}', space=sflag, size = 0x8, scoped, tag = 'scoped memory for tpu_custom_call.1']
    #allocation15 [shape = 'u8[4096]{0}', space=vmem, size = 0x1000, scoped, tag = 'output window, operand 4']
    %20 = vsyncpa [#allocation7], 0
    %s21 = scalar_lea.sflag [#allocation7], 1
    %22 = vsyncpa %s21, 0
    %23 = vsyncpa [#allocation10], 0
    %24 = vsyncpa [#allocation8], 0
    %s25 = scalar_lea.sflag [#allocation8], 1
    %26 = vsyncpa %s25, 0
    %27 = vsyncpa [#allocation14], 0
    %s28 = scalar_lea.sflag [#allocation14], 1
    %29 = vsyncpa %s28, 0
    loop: start=0, step=1, limit=4
    $region2: #{tpu_custom_call.1} parent=1 // loop_pre_header
      _
    $region3: #{tpu_custom_call.1} parent=1 // loop_header
      %s31 = sphi 0, %s35
      %p32 = scmp.ge.s32.totalorder %s31, 4
      %s38 = sphi 0, %s50
      %s39 = sphi 0, %s46
      %s40 = sphi 0, %s38
      %s41 = sphi 0, %s39
      %s42 = sphi 0, %s40
      %s43 = sphi 0, %s41
      %s55 = sphi 0, %s57
      %s58 = sphi 0, %s55
      %s59 = sphi 0, %s58
      %s75 = sphi 0, %s59
      %s79 = sphi 0, %s79
      %s81 = sphi 0, %s79
      %s82 = sphi 0, %s81
      %s96 = sphi 0, %s82
      %s100 = sphi 0, %s100
      %s102 = sphi 0, %s100
      %s103 = sphi 0, %s102
      %s117 = sphi 0, %s103
      %s121 = sphi 0, %s121
      %s123 = sphi 0, %s121
      %s124 = sphi 0, %s123
      %s138 = sphi 0, %s124
      %s142 = sphi 0, %s142
      %s144 = sphi 0, %s142
      %s145 = sphi 0, %s144
      %s159 = sphi 0, %s145
      %s163 = sphi 0, %s163
      %s165 = sphi 0, %s163
      %s166 = sphi 0, %s165
      %s180 = sphi 0, %s166
      %s184 = sphi 0, %s184
      %s186 = sphi 0, %s184
      %s187 = sphi 0, %s186
      %s201 = sphi 0, %s187
      %s205 = sphi 0, %s205
      %s207 = sphi 0, %s205
      %s208 = sphi 0, %s207
      %s222 = sphi 0, %s208
      %s230 = sphi 0, %s232
      %s233 = sphi 0, %s230
      %s234 = sphi 0, %s233
      %s250 = sphi 0, %s234
      %s258 = sphi 0, %s260
      %s261 = sphi 0, %s258
      %s262 = sphi 0, %s261
      %s278 = sphi 0, %s262
      %s284 = sphi 0, %s286
      %s287 = sphi 0, %s284
      %s288 = sphi 0, %s287
      %s304 = sphi 0, %s288
      %s310 = sphi 0, %s312
      %s313 = sphi 0, %s310
      %s314 = sphi 0, %s313
      %s330 = sphi 0, %s314
      %s336 = sphi 0, %s338
      %s339 = sphi 0, %s336
      %s340 = sphi 0, %s339
      %s356 = sphi 0, %s340
    $region4: #{tpu_custom_call.1} parent=1 // loop_header_branch
      %34 = sbr.rel (%p32) target = $region8
    $region5: #{tpu_custom_call.1} parent=1 // loop_body
      %s36 = ssub.s32 %s31, 1
      %s37 = ssub.s32 %s31, 2
      %s44 = sadd.s32 1, %s39
      %p45 = scmp.ge.s32.totalorder %s44, 1
      %s46 = scalar_select %p45, 0, %s44
      %s47 = sadd.s32 1, %s38
      %s48 = scalar_select %p45, %s47, %s38
      %p49 = scmp.ge.s32.totalorder %s48, 2
      %s50 = scalar_select %p49, 0, %s48
      %s51 = sadd.s32 %s38, %s39
      %s52 = sadd.s32 %s50, %s46
      %s53 = ssub.s32 %s51, %s52
      %p54 = scmp.eq.s32.totalorder %s53, 0
      %s56 = sadd.s32 %s55, 1
      %s57 = scalar_select %p54, %s55, %s56
      %p60 = pneg %p54
      %p61 = scmp.eq.s32.totalorder %s31, 1
      %p62 = por %p60, %p61
      %p63 = scmp.ne.s32.totalorder %s55, %s58
      %p64 = scmp.eq.s32.totalorder %s31, 0
      %p65 = por %p63, %p64
      %p66 = scmp.ne.s32.totalorder %s55, %s58
      %p67 = scmp.eq.s32.totalorder %s36, 1
      %p68 = por %p66, %p67
      %p69 = scmp.ne.s32.totalorder %s58, %s59
      %p70 = scmp.eq.s32.totalorder %s36, 0
      %p71 = por %p69, %p70
      %p72 = scmp.ne.s32.totalorder %s58, %s59
      %p73 = scmp.eq.s32.totalorder %s37, 1
      %p74 = por %p72, %p73
      %p76 = scmp.ne.s32.totalorder %s59, %s75
      %p77 = scmp.eq.s32.totalorder %s37, 0
      %p78 = por %p76, %p77
      %s80 = sadd.s32 %s79, 1
      %p83 = scmp.eq.s32.totalorder %s31, 1
      %p84 = scmp.ne.s32.totalorder %s79, %s81
      %p85 = scmp.eq.s32.totalorder %s31, 0
      %p86 = por %p84, %p85
      %p87 = scmp.ne.s32.totalorder %s79, %s81
      %p88 = scmp.eq.s32.totalorder %s36, 1
      %p89 = por %p87, %p88
      %p90 = scmp.ne.s32.totalorder %s81, %s82
      %p91 = scmp.eq.s32.totalorder %s36, 0
      %p92 = por %p90, %p91
      %p93 = scmp.ne.s32.totalorder %s81, %s82
      %p94 = scmp.eq.s32.totalorder %s37, 1
      %p95 = por %p93, %p94
      %p97 = scmp.ne.s32.totalorder %s82, %s96
      %p98 = scmp.eq.s32.totalorder %s37, 0
      %p99 = por %p97, %p98
      %s101 = sadd.s32 %s100, 1
      %p104 = scmp.eq.s32.totalorder %s31, 1
      %p105 = scmp.ne.s32.totalorder %s100, %s102
      %p106 = scmp.eq.s32.totalorder %s31, 0
      %p107 = por %p105, %p106
      %p108 = scmp.ne.s32.totalorder %s100, %s102
      %p109 = scmp.eq.s32.totalorder %s36, 1
      %p110 = por %p108, %p109
      %p111 = scmp.ne.s32.totalorder %s102, %s103
      %p112 = scmp.eq.s32.totalorder %s36, 0
      %p113 = por %p111, %p112
      %p114 = scmp.ne.s32.totalorder %s102, %s103
      %p115 = scmp.eq.s32.totalorder %s37, 1
      %p116 = por %p114, %p115
      %p118 = scmp.ne.s32.totalorder %s103, %s117
      %p119 = scmp.eq.s32.totalorder %s37, 0
      %p120 = por %p118, %p119
      %s122 = sadd.s32 %s121, 1
      %p125 = scmp.eq.s32.totalorder %s31, 1
      %p126 = scmp.ne.s32.totalorder %s121, %s123
      %p127 = scmp.eq.s32.totalorder %s31, 0
      %p128 = por %p126, %p127
      %p129 = scmp.ne.s32.totalorder %s121, %s123
      %p130 = scmp.eq.s32.totalorder %s36, 1
      %p131 = por %p129, %p130
      %p132 = scmp.ne.s32.totalorder %s123, %s124
      %p133 = scmp.eq.s32.totalorder %s36, 0
      %p134 = por %p132, %p133
      %p135 = scmp.ne.s32.totalorder %s123, %s124
      %p136 = scmp.eq.s32.totalorder %s37, 1
      %p137 = por %p135, %p136
      %p139 = scmp.ne.s32.totalorder %s124, %s138
      %p140 = scmp.eq.s32.totalorder %s37, 0
      %p141 = por %p139, %p140
      %s143 = sadd.s32 %s142, 1
      %p146 = scmp.eq.s32.totalorder %s31, 1
      %p147 = scmp.ne.s32.totalorder %s142, %s144
      %p148 = scmp.eq.s32.totalorder %s31, 0
      %p149 = por %p147, %p148
      %p150 = scmp.ne.s32.totalorder %s142, %s144
      %p151 = scmp.eq.s32.totalorder %s36, 1
      %p152 = por %p150, %p151
      %p153 = scmp.ne.s32.totalorder %s144, %s145
      %p154 = scmp.eq.s32.totalorder %s36, 0
      %p155 = por %p153, %p154
      %p156 = scmp.ne.s32.totalorder %s144, %s145
      %p157 = scmp.eq.s32.totalorder %s37, 1
      %p158 = por %p156, %p157
      %p160 = scmp.ne.s32.totalorder %s145, %s159
      %p161 = scmp.eq.s32.totalorder %s37, 0
      %p162 = por %p160, %p161
      %s164 = sadd.s32 %s163, 1
      %p167 = scmp.eq.s32.totalorder %s31, 1
      %p168 = scmp.ne.s32.totalorder %s163, %s165
      %p169 = scmp.eq.s32.totalorder %s31, 0
      %p170 = por %p168, %p169
      %p171 = scmp.ne.s32.totalorder %s163, %s165
      %p172 = scmp.eq.s32.totalorder %s36, 1
      %p173 = por %p171, %p172
      %p174 = scmp.ne.s32.totalorder %s165, %s166
      %p175 = scmp.eq.s32.totalorder %s36, 0
      %p176 = por %p174, %p175
      %p177 = scmp.ne.s32.totalorder %s165, %s166
      %p178 = scmp.eq.s32.totalorder %s37, 1
      %p179 = por %p177, %p178
      %p181 = scmp.ne.s32.totalorder %s166, %s180
      %p182 = scmp.eq.s32.totalorder %s37, 0
      %p183 = por %p181, %p182
      %s185 = sadd.s32 %s184, 1
      %p188 = scmp.eq.s32.totalorder %s31, 1
      %p189 = scmp.ne.s32.totalorder %s184, %s186
      %p190 = scmp.eq.s32.totalorder %s31, 0
      %p191 = por %p189, %p190
      %p192 = scmp.ne.s32.totalorder %s184, %s186
      %p193 = scmp.eq.s32.totalorder %s36, 1
      %p194 = por %p192, %p193
      %p195 = scmp.ne.s32.totalorder %s186, %s187
      %p196 = scmp.eq.s32.totalorder %s36, 0
      %p197 = por %p195, %p196
      %p198 = scmp.ne.s32.totalorder %s186, %s187
      %p199 = scmp.eq.s32.totalorder %s37, 1
      %p200 = por %p198, %p199
      %p202 = scmp.ne.s32.totalorder %s187, %s201
      %p203 = scmp.eq.s32.totalorder %s37, 0
      %p204 = por %p202, %p203
      %s206 = sadd.s32 %s205, 1
      %p209 = scmp.eq.s32.totalorder %s31, 1
      %p210 = scmp.ne.s32.totalorder %s205, %s207
      %p211 = scmp.eq.s32.totalorder %s31, 0
      %p212 = por %p210, %p211
      %p213 = scmp.ne.s32.totalorder %s205, %s207
      %p214 = scmp.eq.s32.totalorder %s36, 1
      %p215 = por %p213, %p214
      %p216 = scmp.ne.s32.totalorder %s207, %s208
      %p217 = scmp.eq.s32.totalorder %s36, 0
      %p218 = por %p216, %p217
      %p219 = scmp.ne.s32.totalorder %s207, %s208
      %p220 = scmp.eq.s32.totalorder %s37, 1
      %p221 = por %p219, %p220
      %p223 = scmp.ne.s32.totalorder %s208, %s222
      %p224 = scmp.eq.s32.totalorder %s37, 0
      %p225 = por %p223, %p224
      %s226 = sadd.s32 %s38, %s39
      %s227 = sadd.s32 %s50, %s46
      %s228 = ssub.s32 %s226, %s227
      %p229 = scmp.eq.s32.totalorder %s228, 0
      %s231 = sadd.s32 %s230, 1
      %s232 = scalar_select %p229, %s230, %s231
      %p235 = pneg %p229
      %p236 = scmp.eq.s32.totalorder %s31, 1
      %p237 = por %p235, %p236
      %p238 = scmp.ne.s32.totalorder %s230, %s233
      %p239 = scmp.eq.s32.totalorder %s31, 0
      %p240 = por %p238, %p239
      %p241 = scmp.ne.s32.totalorder %s230, %s233
      %p242 = scmp.eq.s32.totalorder %s36, 1
      %p243 = por %p241, %p242
      %p244 = scmp.ne.s32.totalorder %s233, %s234
      %p245 = scmp.eq.s32.totalorder %s36, 0
      %p246 = por %p244, %p245
      %p247 = scmp.ne.s32.totalorder %s233, %s234
      %p248 = scmp.eq.s32.totalorder %s37, 1
      %p249 = por %p247, %p248
      %p251 = scmp.ne.s32.totalorder %s234, %s250
      %p252 = scmp.eq.s32.totalorder %s37, 0
      %p253 = por %p251, %p252
      %s254 = sadd.s32 %s38, %s39
      %s255 = sadd.s32 %s50, %s46
      %s256 = ssub.s32 %s254, %s255
      %p257 = scmp.eq.s32.totalorder %s256, 0
      %s259 = sadd.s32 %s258, 1
      %s260 = scalar_select %p257, %s258, %s259
      %p263 = pneg %p257
      %p264 = scmp.eq.s32.totalorder %s31, 1
      %p265 = por %p263, %p264
      %p266 = scmp.ne.s32.totalorder %s258, %s261
      %p267 = scmp.eq.s32.totalorder %s31, 0
      %p268 = por %p266, %p267
      %p269 = scmp.ne.s32.totalorder %s258, %s261
      %p270 = scmp.eq.s32.totalorder %s36, 1
      %p271 = por %p269, %p270
      %p272 = scmp.ne.s32.totalorder %s261, %s262
      %p273 = scmp.eq.s32.totalorder %s36, 0
      %p274 = por %p272, %p273
      %p275 = scmp.ne.s32.totalorder %s261, %s262
      %p276 = scmp.eq.s32.totalorder %s37, 1
      %p277 = por %p275, %p276
      %p279 = scmp.ne.s32.totalorder %s262, %s278
      %p280 = scmp.eq.s32.totalorder %s37, 0
      %p281 = por %p279, %p280
      %s282 = ssub.s32 %s38, %s50
      %p283 = scmp.eq.s32.totalorder %s282, 0
      %s285 = sadd.s32 %s284, 1
      %s286 = scalar_select %p283, %s284, %s285
      %p289 = pneg %p283
      %p290 = scmp.eq.s32.totalorder %s31, 1
      %p291 = por %p289, %p290
      %p292 = scmp.ne.s32.totalorder %s284, %s287
      %p293 = scmp.eq.s32.totalorder %s31, 0
      %p294 = por %p292, %p293
      %p295 = scmp.ne.s32.totalorder %s284, %s287
      %p296 = scmp.eq.s32.totalorder %s36, 1
      %p297 = por %p295, %p296
      %p298 = scmp.ne.s32.totalorder %s287, %s288
      %p299 = scmp.eq.s32.totalorder %s36, 0
      %p300 = por %p298, %p299
      %p301 = scmp.ne.s32.totalorder %s287, %s288
      %p302 = scmp.eq.s32.totalorder %s37, 1
      %p303 = por %p301, %p302
      %p305 = scmp.ne.s32.totalorder %s288, %s304
      %p306 = scmp.eq.s32.totalorder %s37, 0
      %p307 = por %p305, %p306
      %s308 = ssub.s32 %s38, %s50
      %p309 = scmp.eq.s32.totalorder %s308, 0
      %s311 = sadd.s32 %s310, 1
      %s312 = scalar_select %p309, %s310, %s311
      %p315 = pneg %p309
      %p316 = scmp.eq.s32.totalorder %s31, 1
      %p317 = por %p315, %p316
      %p318 = scmp.ne.s32.totalorder %s310, %s313
      %p319 = scmp.eq.s32.totalorder %s31, 0
      %p320 = por %p318, %p319
      %p321 = scmp.ne.s32.totalorder %s310, %s313
      %p322 = scmp.eq.s32.totalorder %s36, 1
      %p323 = por %p321, %p322
      %p324 = scmp.ne.s32.totalorder %s313, %s314
      %p325 = scmp.eq.s32.totalorder %s36, 0
      %p326 = por %p324, %p325
      %p327 = scmp.ne.s32.totalorder %s313, %s314
      %p328 = scmp.eq.s32.totalorder %s37, 1
      %p329 = por %p327, %p328
      %p331 = scmp.ne.s32.totalorder %s314, %s330
      %p332 = scmp.eq.s32.totalorder %s37, 0
      %p333 = por %p331, %p332
      %s334 = ssub.s32 %s38, %s50
      %p335 = scmp.eq.s32.totalorder %s334, 0
      %s337 = sadd.s32 %s336, 1
      %s338 = scalar_select %p335, %s336, %s337
      %p341 = pneg %p335
      %p342 = scmp.eq.s32.totalorder %s31, 1
      %p343 = por %p341, %p342
      %p344 = scmp.ne.s32.totalorder %s336, %s339
      %p345 = scmp.eq.s32.totalorder %s31, 0
      %p346 = por %p344, %p345
      %p347 = scmp.ne.s32.totalorder %s336, %s339
      %p348 = scmp.eq.s32.totalorder %s36, 1
      %p349 = por %p347, %p348
      %p350 = scmp.ne.s32.totalorder %s339, %s340
      %p351 = scmp.eq.s32.totalorder %s36, 0
      %p352 = por %p350, %p351
      %p353 = scmp.ne.s32.totalorder %s339, %s340
      %p354 = scmp.eq.s32.totalorder %s37, 1
      %p355 = por %p353, %p354
      %p357 = scmp.ne.s32.totalorder %s340, %s356
      %p358 = scmp.eq.s32.totalorder %s37, 0
      %p359 = por %p357, %p358
      %p360 = scmp.le.s32.totalorder 1, %s31
      %p361 = scmp.lt.s32.totalorder %s31, 3
      %p362 = pnand %p360, %p361
      %p363 = pneg %p362
      // Predicated region
      $region9: #{tpu_custom_call.1} parent=5 // pred_check
        _
      $region10: #{tpu_custom_call.1} parent=5 // pred_check_branch
        %365 = sbr.rel (%p362) target = $region12
      $region11: #{tpu_custom_call.1} parent=5 // pred_region
        %s366 = ssub.s32 %s31, 1
        // Predicated region
        $region13: #{tpu_custom_call.1} parent=11 // pred_check
          %p367 = pneg %p92
        $region14: #{tpu_custom_call.1} parent=11 // pred_check_branch
          %369 = sbr.rel (%p367) target = $region16
        $region15: #{tpu_custom_call.1} parent=11 // pred_region
          %s371 = ssub.s32 32768, 32768
          %372 = vsyncadd [#allocation10], %s371
          %s373 = sshll.u32 [#allocation9], 4
          %s374 = int_to_ptr.vmem [resolvable:$true] %s373
          %379 = dma.hbm_to_vmem [thread:$0]  %s1, 32768, %s374, [#allocation10], 256, 256, 16
        $region16: #{tpu_custom_call.1} parent=11 // pred_fallthru
          _
        // Predicated region
        $region17: #{tpu_custom_call.1} parent=11 // pred_check
          %p380 = pneg %p113
        $region18: #{tpu_custom_call.1} parent=11 // pred_check_branch
          %382 = sbr.rel (%p380) target = $region20
        $region19: #{tpu_custom_call.1} parent=11 // pred_region
          _
        $region20: #{tpu_custom_call.1} parent=11 // pred_fallthru
          _
        // Predicated region
        $region21: #{tpu_custom_call.1} parent=11 // pred_check
          %p383 = pneg %p134
        $region22: #{tpu_custom_call.1} parent=11 // pred_check_branch
          %385 = sbr.rel (%p383) target = $region24
        $region23: #{tpu_custom_call.1} parent=11 // pred_region
          %s387 = ssub.s32 16384, 16384
          %388 = vsyncadd [#allocation10], %s387
          %s389 = sshll.u32 [#allocation11], 4
          %s390 = int_to_ptr.vmem [resolvable:$true] %s389
          %395 = dma.hbm_to_vmem [thread:$0]  %s3, 16384, %s390, [#allocation10], 256, 256, 16
        $region24: #{tpu_custom_call.1} parent=11 // pred_fallthru
          _
        // Predicated region
        $region25: #{tpu_custom_call.1} parent=11 // pred_check
          %p396 = pneg %p155
        $region26: #{tpu_custom_call.1} parent=11 // pred_check_branch
          %398 = sbr.rel (%p396) target = $region28
        $region27: #{tpu_custom_call.1} parent=11 // pred_region
          _
        $region28: #{tpu_custom_call.1} parent=11 // pred_fallthru
          _
        // Predicated region
        $region29: #{tpu_custom_call.1} parent=11 // pred_check
          %p399 = pneg %p176
        $region30: #{tpu_custom_call.1} parent=11 // pred_check_branch
          %401 = sbr.rel (%p399) target = $region32
        $region31: #{tpu_custom_call.1} parent=11 // pred_region
          _
        $region32: #{tpu_custom_call.1} parent=11 // pred_fallthru
          _
        // Predicated region
        $region33: #{tpu_custom_call.1} parent=11 // pred_check
          %p402 = pneg %p197
        $region34: #{tpu_custom_call.1} parent=11 // pred_check_branch
          %404 = sbr.rel (%p402) target = $region36
        $region35: #{tpu_custom_call.1} parent=11 // pred_region
          _
        $region36: #{tpu_custom_call.1} parent=11 // pred_fallthru
          _
        // Predicated region
        $region37: #{tpu_custom_call.1} parent=11 // pred_check
          %p405 = pneg %p218
        $region38: #{tpu_custom_call.1} parent=11 // pred_check_branch
          %407 = sbr.rel (%p405) target = $region40
        $region39: #{tpu_custom_call.1} parent=11 // pred_region
          _
        $region40: #{tpu_custom_call.1} parent=11 // pred_fallthru
          _
      $region12: #{tpu_custom_call.1} parent=5 // pred_fallthru
        _
      %p408 = scmp.lt.s32.totalorder %s31, 2
      // Predicated region
      $region41: #{tpu_custom_call.1} parent=5 // pred_check
        %p409 = pneg %p408
      $region42: #{tpu_custom_call.1} parent=5 // pred_check_branch
        %411 = sbr.rel (%p409) target = $region44
      $region43: #{tpu_custom_call.1} parent=5 // pred_region
        // Predicated region
        $region45: #{tpu_custom_call.1} parent=43 // pred_check
          %p412 = pneg %p65
        $region46: #{tpu_custom_call.1} parent=43 // pred_check_branch
          %414 = sbr.rel (%p412) target = $region48
        $region47: #{tpu_custom_call.1} parent=43 // pred_region
          %s415 = sand.u32 %s55, 1
          %s416 = scalar_lea.sflag [#allocation7], %s415
          %s417 = sand.u32 %s55, 1
          %s418 = smul.addr %s417, 512
          %s419 = scalar_lea.vmem [#allocation6], %s418
          %s420 = sadd.s32 %s38, %s39
          %s421 = smul.u32 16, %s420
          %s423 = ssub.s32 8192, 8192
          %424 = vsyncadd %s416, %s423
          %s425 = smul.addr %s421, 8
          %s426 = smul.addr %s425, 64
          %s427 = scalar_lea.hbm %s0, %s426
          %s428 = sshll.u32 %s419, 4
          %s429 = int_to_ptr.vmem [resolvable:$true] %s428
          %434 = dma.hbm_to_vmem [thread:$0]  %s427, 8192, %s429, %s416, 512, 512, 32
        $region48: #{tpu_custom_call.1} parent=43 // pred_fallthru
          _
      $region44: #{tpu_custom_call.1} parent=5 // pred_fallthru
        _
      %p435 = scmp.le.s32.totalorder 1, %s31
      %p436 = scmp.lt.s32.totalorder %s31, 3
      %p437 = pnand %p435, %p436
      %p438 = pneg %p437
      // Predicated region
      $region49: #{tpu_custom_call.1} parent=5 // pred_check
        _
      $region50: #{tpu_custom_call.1} parent=5 // pred_check_branch
        %440 = sbr.rel (%p437) target = $region52
      $region51: #{tpu_custom_call.1} parent=5 // pred_region
        %s441 = ssub.s32 %s31, 1
        %s442 = sand.u32 %s58, 1
        %s443 = scalar_lea.sflag [#allocation7], %s442
        %s444 = sand.u32 %s58, 1
        %s445 = smul.addr %s444, 512
        %s446 = scalar_lea.vmem [#allocation6], %s445
        // Predicated region
        $region53: #{tpu_custom_call.1} parent=51 // pred_check
          %p447 = pneg %p71
        $region54: #{tpu_custom_call.1} parent=51 // pred_check_branch
          %449 = sbr.rel (%p447) target = $region56
        $region55: #{tpu_custom_call.1} parent=51 // pred_region
          %450 = dma.done %s443, 8192
        $region56: #{tpu_custom_call.1} parent=51 // pred_fallthru
          _
        // Predicated region
        $region57: #{tpu_custom_call.1} parent=51 // pred_check
          %p451 = pneg %p92
        $region58: #{tpu_custom_call.1} parent=51 // pred_check_branch
          %453 = sbr.rel (%p451) target = $region60
        $region59: #{tpu_custom_call.1} parent=51 // pred_region
          %454 = dma.done [#allocation10], 32768
        $region60: #{tpu_custom_call.1} parent=51 // pred_fallthru
          _
        // Predicated region
        $region61: #{tpu_custom_call.1} parent=51 // pred_check
          %p455 = pneg %p134
        $region62: #{tpu_custom_call.1} parent=51 // pred_check_branch
          %457 = sbr.rel (%p455) target = $region64
        $region63: #{tpu_custom_call.1} parent=51 // pred_region
          %458 = dma.done [#allocation10], 16384
        $region64: #{tpu_custom_call.1} parent=51 // pred_fallthru
          _
        %s459 = sand.u32 %s58, 1
        %s460 = scalar_lea.sflag [#allocation7], %s459
        %s461 = sand.u32 %s58, 1
        %s462 = smul.addr %s461, 512
        %s463 = scalar_lea.vmem [#allocation6], %s462
        %p464 = pneg %p71
        %p465 = pneg %p68
        %p466 = pneg %p92
        %p467 = pneg %p89
        %p468 = pneg %p113
        %p469 = pneg %p110
        %p470 = pneg %p134
        %p471 = pneg %p131
        %p472 = pneg %p155
        %p473 = pneg %p152
        %p474 = pneg %p176
        %p475 = pneg %p173
        %p476 = pneg %p197
        %p477 = pneg %p194
        %p478 = pneg %p218
        %p479 = pneg %p215
        %p480 = pneg %p246
        %p481 = pneg %p243
        %s482 = sand.u32 %s233, 1
        %s483 = scalar_lea.sflag [#allocation8], %s482
        %s484 = sand.u32 %s233, 1
        %s485 = scalar_lea.vmem [#allocation12], %s484
        %p486 = pneg %p274
        %p487 = pneg %p271
        %s488 = sand.u32 %s36, 1
        %s489 = scalar_lea.sflag [#allocation14], %s488
        %s490 = sand.u32 %s261, 1
        %s491 = smul.addr %s490, 2
        %s492 = scalar_lea.vmem [#allocation13], %s491
        %p493 = pneg %p300
        %p494 = pneg %p297
        %p495 = scmp.lt.s32.totalorder %s40, 1
        %s496 = scalar_select %p495, %s40, 1
        %s497 = scalar_lea.vmem %s10, %s496
        %p498 = pneg %p326
        %p499 = pneg %p323
        %p500 = scmp.lt.s32.totalorder %s40, 1
        %s501 = scalar_select %p500, %s40, 1
        %s502 = scalar_lea.vmem %s11, %s501
        %p503 = pneg %p352
        %p504 = pneg %p349
        %s505 = sand.u32 %s36, 1
        %s506 = scalar_lea.sflag [#allocation14], %s505
        %s507 = sand.u32 %s339, 1
        %s508 = smul.addr %s507, 4
        %s509 = scalar_lea.vmem [#allocation15], %s508
        %s510 = sadd.s32 %s40, %s41
        %s511 = smul.u32 16, %s510
        %s512 = sadd.s32 %s40, %s41
        %s513 = sadd.s32 %s40, %s41
        %p514 = scmp.lt.s32.totalorder %s40, 1
        %s515 = scalar_select %p514, %s40, 1
        %s516 = scalar_lea.vmem %s10, %s515
        %p517 = scmp.lt.s32.totalorder %s40, 1
        %s518 = scalar_select %p517, %s40, 1
        %s519 = scalar_lea.vmem %s11, %s518
        %p521 = scmp.eq.s32.totalorder %s41, 0
        // Predicated region
        $region65: #{tpu_custom_call.1} parent=51 // pred_check
          %p522 = pneg %p521
        $region66: #{tpu_custom_call.1} parent=51 // pred_check_branch
          %524 = sbr.rel (%p522) target = $region68
        $region67: #{tpu_custom_call.1} parent=51 // pred_region
          %vm525 = vcmask 0
          %526 = vst.msk [vmem:[#allocation2] sm:$0x1] %vm525, -1e+30
          %527 = vst.msk [vmem:[#allocation3] sm:$0x1] %vm525, 0.0
          %v528 = vlaneseq
          %vm529 = vcmp.ge.s32.totalorder %v528, 0
          %vm530 = vcmp.lt.s32.totalorder %v528, 512
          %vm531 = vmand %vm529, %vm530
          %532 = vst.msk [vmem:[#allocation4] sm:$0xf] %vm531, 0.0
        $region68: #{tpu_custom_call.1} parent=51 // pred_fallthru
          _
        %v533 = vld [vmem:[%s446] sm:$0xff]
        %v534 = vld [vmem:[%s446 + $0x8] sm:$0xff]
        %v535 = vld [vmem:[%s446 + $0x10] sm:$0xff]
        %v536 = vld [vmem:[%s446 + $0x18] sm:$0xff]
        %v537 = vld [vmem:[%s446 + $0x20] sm:$0xff]
        %v538 = vld [vmem:[%s446 + $0x28] sm:$0xff]
        %v539 = vld [vmem:[%s446 + $0x30] sm:$0xff]
        %v540 = vld [vmem:[%s446 + $0x38] sm:$0xff]
        %v541 = vld [vmem:[%s446 + $0x40] sm:$0xff]
        %v542 = vld [vmem:[%s446 + $0x48] sm:$0xff]
        %v543 = vld [vmem:[%s446 + $0x50] sm:$0xff]
        %v544 = vld [vmem:[%s446 + $0x58] sm:$0xff]
        %v545 = vld [vmem:[%s446 + $0x60] sm:$0xff]
        %v546 = vld [vmem:[%s446 + $0x68] sm:$0xff]
        %v547 = vld [vmem:[%s446 + $0x70] sm:$0xff]
        %v548 = vld [vmem:[%s446 + $0x78] sm:$0xff]
        %v549 = vld [vmem:[%s446 + $0x80] sm:$0xff]
        %v550 = vld [vmem:[%s446 + $0x88] sm:$0xff]
        %v551 = vld [vmem:[%s446 + $0x90] sm:$0xff]
        %v552 = vld [vmem:[%s446 + $0x98] sm:$0xff]
        %v553 = vld [vmem:[%s446 + $0xa0] sm:$0xff]
        %v554 = vld [vmem:[%s446 + $0xa8] sm:$0xff]
        %v555 = vld [vmem:[%s446 + $0xb0] sm:$0xff]
        %v556 = vld [vmem:[%s446 + $0xb8] sm:$0xff]
        %v557 = vld [vmem:[%s446 + $0xc0] sm:$0xff]
        %v558 = vld [vmem:[%s446 + $0xc8] sm:$0xff]
        %v559 = vld [vmem:[%s446 + $0xd0] sm:$0xff]
        %v560 = vld [vmem:[%s446 + $0xd8] sm:$0xff]
        %v561 = vld [vmem:[%s446 + $0xe0] sm:$0xff]
        %v562 = vld [vmem:[%s446 + $0xe8] sm:$0xff]
        %v563 = vld [vmem:[%s446 + $0xf0] sm:$0xff]
        %v564 = vld [vmem:[%s446 + $0xf8] sm:$0xff]
        %v565 = vld [vmem:[%s446 + $0x100] sm:$0xff]
        %v566 = vld [vmem:[%s446 + $0x108] sm:$0xff]
        %v567 = vld [vmem:[%s446 + $0x110] sm:$0xff]
        %v568 = vld [vmem:[%s446 + $0x118] sm:$0xff]
        %v569 = vld [vmem:[%s446 + $0x120] sm:$0xff]
        %v570 = vld [vmem:[%s446 + $0x128] sm:$0xff]
        %v571 = vld [vmem:[%s446 + $0x130] sm:$0xff]
        %v572 = vld [vmem:[%s446 + $0x138] sm:$0xff]
        %v573 = vld [vmem:[%s446 + $0x140] sm:$0xff]
        %v574 = vld [vmem:[%s446 + $0x148] sm:$0xff]
        %v575 = vld [vmem:[%s446 + $0x150] sm:$0xff]
        %v576 = vld [vmem:[%s446 + $0x158] sm:$0xff]
        %v577 = vld [vmem:[%s446 + $0x160] sm:$0xff]
        %v578 = vld [vmem:[%s446 + $0x168] sm:$0xff]
        %v579 = vld [vmem:[%s446 + $0x170] sm:$0xff]
        %v580 = vld [vmem:[%s446 + $0x178] sm:$0xff]
        %v581 = vld [vmem:[%s446 + $0x180] sm:$0xff]
        %v582 = vld [vmem:[%s446 + $0x188] sm:$0xff]
        %v583 = vld [vmem:[%s446 + $0x190] sm:$0xff]
        %v584 = vld [vmem:[%s446 + $0x198] sm:$0xff]
        %v585 = vld [vmem:[%s446 + $0x1a0] sm:$0xff]
        %v586 = vld [vmem:[%s446 + $0x1a8] sm:$0xff]
        %v587 = vld [vmem:[%s446 + $0x1b0] sm:$0xff]
        %v588 = vld [vmem:[%s446 + $0x1b8] sm:$0xff]
        %v589 = vld [vmem:[%s446 + $0x1c0] sm:$0xff]
        %v590 = vld [vmem:[%s446 + $0x1c8] sm:$0xff]
        %v591 = vld [vmem:[%s446 + $0x1d0] sm:$0xff]
        %v592 = vld [vmem:[%s446 + $0x1d8] sm:$0xff]
        %v593 = vld [vmem:[%s446 + $0x1e0] sm:$0xff]
        %v594 = vld [vmem:[%s446 + $0x1e8] sm:$0xff]
        %v595 = vld [vmem:[%s446 + $0x1f0] sm:$0xff]
        %v596 = vld [vmem:[%s446 + $0x1f8] sm:$0xff]
        %v597 = vld [vmem:[#allocation9] sm:$0xff]
        %v598 = vld [vmem:[#allocation9 + $0x8] sm:$0xff]
        %v599 = vld [vmem:[#allocation9 + $0x10] sm:$0xff]
        %v600 = vld [vmem:[#allocation9 + $0x18] sm:$0xff]
        %v601 = vld [vmem:[#allocation9 + $0x20] sm:$0xff]
        %v602 = vld [vmem:[#allocation9 + $0x28] sm:$0xff]
        %v603 = vld [vmem:[#allocation9 + $0x30] sm:$0xff]
        %v604 = vld [vmem:[#allocation9 + $0x38] sm:$0xff]
        %v605 = vld [vmem:[#allocation9 + $0x40] sm:$0xff]
        %v606 = vld [vmem:[#allocation9 + $0x48] sm:$0xff]
        %v607 = vld [vmem:[#allocation9 + $0x50] sm:$0xff]
        %v608 = vld [vmem:[#allocation9 + $0x58] sm:$0xff]
        %v609 = vld [vmem:[#allocation9 + $0x60] sm:$0xff]
        %v610 = vld [vmem:[#allocation9 + $0x68] sm:$0xff]
        %v611 = vld [vmem:[#allocation9 + $0x70] sm:$0xff]
        %v612 = vld [vmem:[#allocation9 + $0x78] sm:$0xff]
        %v613 = vld [vmem:[#allocation9 + $0x80] sm:$0xff]
        %v614 = vld [vmem:[#allocation9 + $0x88] sm:$0xff]
        %v615 = vld [vmem:[#allocation9 + $0x90] sm:$0xff]
        %v616 = vld [vmem:[#allocation9 + $0x98] sm:$0xff]
        %v617 = vld [vmem:[#allocation9 + $0xa0] sm:$0xff]
        %v618 = vld [vmem:[#allocation9 + $0xa8] sm:$0xff]
        %v619 = vld [vmem:[#allocation9 + $0xb0] sm:$0xff]
        %v620 = vld [vmem:[#allocation9 + $0xb8] sm:$0xff]
        %v621 = vld [vmem:[#allocation9 + $0xc0] sm:$0xff]
        %v622 = vld [vmem:[#allocation9 + $0xc8] sm:$0xff]
        %v623 = vld [vmem:[#allocation9 + $0xd0] sm:$0xff]
        %v624 = vld [vmem:[#allocation9 + $0xd8] sm:$0xff]
        %v625 = vld [vmem:[#allocation9 + $0xe0] sm:$0xff]
        %v626 = vld [vmem:[#allocation9 + $0xe8] sm:$0xff]
        %v627 = vld [vmem:[#allocation9 + $0xf0] sm:$0xff]
        %v628 = vld [vmem:[#allocation9 + $0xf8] sm:$0xff]
        %v629 = vld [vmem:[#allocation9 + $0x100] sm:$0xff]
        %v630 = vld [vmem:[#allocation9 + $0x108] sm:$0xff]
        %v631 = vld [vmem:[#allocation9 + $0x110] sm:$0xff]
        %v632 = vld [vmem:[#allocation9 + $0x118] sm:$0xff]
        %v633 = vld [vmem:[#allocation9 + $0x120] sm:$0xff]
        %v634 = vld [vmem:[#allocation9 + $0x128] sm:$0xff]
        %v635 = vld [vmem:[#allocation9 + $0x130] sm:$0xff]
        %v636 = vld [vmem:[#allocation9 + $0x138] sm:$0xff]
        %v637 = vld [vmem:[#allocation9 + $0x140] sm:$0xff]
        %v638 = vld [vmem:[#allocation9 + $0x148] sm:$0xff]
        %v639 = vld [vmem:[#allocation9 + $0x150] sm:$0xff]
        %v640 = vld [vmem:[#allocation9 + $0x158] sm:$0xff]
        %v641 = vld [vmem:[#allocation9 + $0x160] sm:$0xff]
        %v642 = vld [vmem:[#allocation9 + $0x168] sm:$0xff]
        %v643 = vld [vmem:[#allocation9 + $0x170] sm:$0xff]
        %v644 = vld [vmem:[#allocation9 + $0x178] sm:$0xff]
        %v645 = vld [vmem:[#allocation9 + $0x180] sm:$0xff]
        %v646 = vld [vmem:[#allocation9 + $0x188] sm:$0xff]
        %v647 = vld [vmem:[#allocation9 + $0x190] sm:$0xff]
        %v648 = vld [vmem:[#allocation9 + $0x198] sm:$0xff]
        %v649 = vld [vmem:[#allocation9 + $0x1a0] sm:$0xff]
        %v650 = vld [vmem:[#allocation9 + $0x1a8] sm:$0xff]
        %v651 = vld [vmem:[#allocation9 + $0x1b0] sm:$0xff]
        %v652 = vld [vmem:[#allocation9 + $0x1b8] sm:$0xff]
        %v653 = vld [vmem:[#allocation9 + $0x1c0] sm:$0xff]
        %v654 = vld [vmem:[#allocation9 + $0x1c8] sm:$0xff]
        %v655 = vld [vmem:[#allocation9 + $0x1d0] sm:$0xff]
        %v656 = vld [vmem:[#allocation9 + $0x1d8] sm:$0xff]
        %v657 = vld [vmem:[#allocation9 + $0x1e0] sm:$0xff]
        %v658 = vld [vmem:[#allocation9 + $0x1e8] sm:$0xff]
        %v659 = vld [vmem:[#allocation9 + $0x1f0] sm:$0xff]
        %v660 = vld [vmem:[#allocation9 + $0x1f8] sm:$0xff]
        %v661 = vld [vmem:[#allocation9 + $0x200] sm:$0xff]
        %v662 = vld [vmem:[#allocation9 + $0x208] sm:$0xff]
        %v663 = vld [vmem:[#allocation9 + $0x210] sm:$0xff]
        %v664 = vld [vmem:[#allocation9 + $0x218] sm:$0xff]
        %v665 = vld [vmem:[#allocation9 + $0x220] sm:$0xff]
        %v666 = vld [vmem:[#allocation9 + $0x228] sm:$0xff]
        %v667 = vld [vmem:[#allocation9 + $0x230] sm:$0xff]
        %v668 = vld [vmem:[#allocation9 + $0x238] sm:$0xff]
        %v669 = vld [vmem:[#allocation9 + $0x240] sm:$0xff]
        %v670 = vld [vmem:[#allocation9 + $0x248] sm:$0xff]
        %v671 = vld [vmem:[#allocation9 + $0x250] sm:$0xff]
        %v672 = vld [vmem:[#allocation9 + $0x258] sm:$0xff]
        %v673 = vld [vmem:[#allocation9 + $0x260] sm:$0xff]
        %v674 = vld [vmem:[#allocation9 + $0x268] sm:$0xff]
        %v675 = vld [vmem:[#allocation9 + $0x270] sm:$0xff]
        %v676 = vld [vmem:[#allocation9 + $0x278] sm:$0xff]
        %v677 = vld [vmem:[#allocation9 + $0x280] sm:$0xff]
        %v678 = vld [vmem:[#allocation9 + $0x288] sm:$0xff]
        %v679 = vld [vmem:[#allocation9 + $0x290] sm:$0xff]
        %v680 = vld [vmem:[#allocation9 + $0x298] sm:$0xff]
        %v681 = vld [vmem:[#allocation9 + $0x2a0] sm:$0xff]
        %v682 = vld [vmem:[#allocation9 + $0x2a8] sm:$0xff]
        %v683 = vld [vmem:[#allocation9 + $0x2b0] sm:$0xff]
        %v684 = vld [vmem:[#allocation9 + $0x2b8] sm:$0xff]
        %v685 = vld [vmem:[#allocation9 + $0x2c0] sm:$0xff]
        %v686 = vld [vmem:[#allocation9 + $0x2c8] sm:$0xff]
        %v687 = vld [vmem:[#allocation9 + $0x2d0] sm:$0xff]
        %v688 = vld [vmem:[#allocation9 + $0x2d8] sm:$0xff]
        %v689 = vld [vmem:[#allocation9 + $0x2e0] sm:$0xff]
        %v690 = vld [vmem:[#allocation9 + $0x2e8] sm:$0xff]
        %v691 = vld [vmem:[#allocation9 + $0x2f0] sm:$0xff]
        %v692 = vld [vmem:[#allocation9 + $0x2f8] sm:$0xff]
        %v693 = vld [vmem:[#allocation9 + $0x300] sm:$0xff]
        %v694 = vld [vmem:[#allocation9 + $0x308] sm:$0xff]
        %v695 = vld [vmem:[#allocation9 + $0x310] sm:$0xff]
        %v696 = vld [vmem:[#allocation9 + $0x318] sm:$0xff]
        %v697 = vld [vmem:[#allocation9 + $0x320] sm:$0xff]
        %v698 = vld [vmem:[#allocation9 + $0x328] sm:$0xff]
        %v699 = vld [vmem:[#allocation9 + $0x330] sm:$0xff]
        %v700 = vld [vmem:[#allocation9 + $0x338] sm:$0xff]
        %v701 = vld [vmem:[#allocation9 + $0x340] sm:$0xff]
        %v702 = vld [vmem:[#allocation9 + $0x348] sm:$0xff]
        %v703 = vld [vmem:[#allocation9 + $0x350] sm:$0xff]
        %v704 = vld [vmem:[#allocation9 + $0x358] sm:$0xff]
        %v705 = vld [vmem:[#allocation9 + $0x360] sm:$0xff]
        %v706 = vld [vmem:[#allocation9 + $0x368] sm:$0xff]
        %v707 = vld [vmem:[#allocation9 + $0x370] sm:$0xff]
        %v708 = vld [vmem:[#allocation9 + $0x378] sm:$0xff]
        %v709 = vld [vmem:[#allocation9 + $0x380] sm:$0xff]
        %v710 = vld [vmem:[#allocation9 + $0x388] sm:$0xff]
        %v711 = vld [vmem:[#allocation9 + $0x390] sm:$0xff]
        %v712 = vld [vmem:[#allocation9 + $0x398] sm:$0xff]
        %v713 = vld [vmem:[#allocation9 + $0x3a0] sm:$0xff]
        %v714 = vld [vmem:[#allocation9 + $0x3a8] sm:$0xff]
        %v715 = vld [vmem:[#allocation9 + $0x3b0] sm:$0xff]
        %v716 = vld [vmem:[#allocation9 + $0x3b8] sm:$0xff]
        %v717 = vld [vmem:[#allocation9 + $0x3c0] sm:$0xff]
        %v718 = vld [vmem:[#allocation9 + $0x3c8] sm:$0xff]
        %v719 = vld [vmem:[#allocation9 + $0x3d0] sm:$0xff]
        %v720 = vld [vmem:[#allocation9 + $0x3d8] sm:$0xff]
        %v721 = vld [vmem:[#allocation9 + $0x3e0] sm:$0xff]
        %v722 = vld [vmem:[#allocation9 + $0x3e8] sm:$0xff]
        %v723 = vld [vmem:[#allocation9 + $0x3f0] sm:$0xff]
        %v724 = vld [vmem:[#allocation9 + $0x3f8] sm:$0xff]
        %v725 = vld [vmem:[#allocation9 + $0x400] sm:$0xff]
        %v726 = vld [vmem:[#allocation9 + $0x408] sm:$0xff]
        %v727 = vld [vmem:[#allocation9 + $0x410] sm:$0xff]
        %v728 = vld [vmem:[#allocation9 + $0x418] sm:$0xff]
        %v729 = vld [vmem:[#allocation9 + $0x420] sm:$0xff]
        %v730 = vld [vmem:[#allocation9 + $0x428] sm:$0xff]
        %v731 = vld [vmem:[#allocation9 + $0x430] sm:$0xff]
        %v732 = vld [vmem:[#allocation9 + $0x438] sm:$0xff]
        %v733 = vld [vmem:[#allocation9 + $0x440] sm:$0xff]
        %v734 = vld [vmem:[#allocation9 + $0x448] sm:$0xff]
        %v735 = vld [vmem:[#allocation9 + $0x450] sm:$0xff]
        %v736 = vld [vmem:[#allocation9 + $0x458] sm:$0xff]
        %v737 = vld [vmem:[#allocation9 + $0x460] sm:$0xff]
        %v738 = vld [vmem:[#allocation9 + $0x468] sm:$0xff]
        %v739 = vld [vmem:[#allocation9 + $0x470] sm:$0xff]
        %v740 = vld [vmem:[#allocation9 + $0x478] sm:$0xff]
        %v741 = vld [vmem:[#allocation9 + $0x480] sm:$0xff]
        %v742 = vld [vmem:[#allocation9 + $0x488] sm:$0xff]
        %v743 = vld [vmem:[#allocation9 + $0x490] sm:$0xff]
        %v744 = vld [vmem:[#allocation9 + $0x498] sm:$0xff]
        %v745 = vld [vmem:[#allocation9 + $0x4a0] sm:$0xff]
        %v746 = vld [vmem:[#allocation9 + $0x4a8] sm:$0xff]
        %v747 = vld [vmem:[#allocation9 + $0x4b0] sm:$0xff]
        %v748 = vld [vmem:[#allocation9 + $0x4b8] sm:$0xff]
        %v749 = vld [vmem:[#allocation9 + $0x4c0] sm:$0xff]
        %v750 = vld [vmem:[#allocation9 + $0x4c8] sm:$0xff]
        %v751 = vld [vmem:[#allocation9 + $0x4d0] sm:$0xff]
        %v752 = vld [vmem:[#allocation9 + $0x4d8] sm:$0xff]
        %v753 = vld [vmem:[#allocation9 + $0x4e0] sm:$0xff]
        %v754 = vld [vmem:[#allocation9 + $0x4e8] sm:$0xff]
        %v755 = vld [vmem:[#allocation9 + $0x4f0] sm:$0xff]
        %v756 = vld [vmem:[#allocation9 + $0x4f8] sm:$0xff]
        %v757 = vld [vmem:[#allocation9 + $0x500] sm:$0xff]
        %v758 = vld [vmem:[#allocation9 + $0x508] sm:$0xff]
        %v759 = vld [vmem:[#allocation9 + $0x510] sm:$0xff]
        %v760 = vld [vmem:[#allocation9 + $0x518] sm:$0xff]
        %v761 = vld [vmem:[#allocation9 + $0x520] sm:$0xff]
        %v762 = vld [vmem:[#allocation9 + $0x528] sm:$0xff]
        %v763 = vld [vmem:[#allocation9 + $0x530] sm:$0xff]
        %v764 = vld [vmem:[#allocation9 + $0x538] sm:$0xff]
        %v765 = vld [vmem:[#allocation9 + $0x540] sm:$0xff]
        %v766 = vld [vmem:[#allocation9 + $0x548] sm:$0xff]
        %v767 = vld [vmem:[#allocation9 + $0x550] sm:$0xff]
        %v768 = vld [vmem:[#allocation9 + $0x558] sm:$0xff]
        %v769 = vld [vmem:[#allocation9 + $0x560] sm:$0xff]
        %v770 = vld [vmem:[#allocation9 + $0x568] sm:$0xff]
        %v771 = vld [vmem:[#allocation9 + $0x570] sm:$0xff]
        %v772 = vld [vmem:[#allocation9 + $0x578] sm:$0xff]
        %v773 = vld [vmem:[#allocation9 + $0x580] sm:$0xff]
        %v774 = vld [vmem:[#allocation9 + $0x588] sm:$0xff]
        %v775 = vld [vmem:[#allocation9 + $0x590] sm:$0xff]
        %v776 = vld [vmem:[#allocation9 + $0x598] sm:$0xff]
        %v777 = vld [vmem:[#allocation9 + $0x5a0] sm:$0xff]
        %v778 = vld [vmem:[#allocation9 + $0x5a8] sm:$0xff]
        %v779 = vld [vmem:[#allocation9 + $0x5b0] sm:$0xff]
        %v780 = vld [vmem:[#allocation9 + $0x5b8] sm:$0xff]
        %v781 = vld [vmem:[#allocation9 + $0x5c0] sm:$0xff]
        %v782 = vld [vmem:[#allocation9 + $0x5c8] sm:$0xff]
        %v783 = vld [vmem:[#allocation9 + $0x5d0] sm:$0xff]
        %v784 = vld [vmem:[#allocation9 + $0x5d8] sm:$0xff]
        %v785 = vld [vmem:[#allocation9 + $0x5e0] sm:$0xff]
        %v786 = vld [vmem:[#allocation9 + $0x5e8] sm:$0xff]
        %v787 = vld [vmem:[#allocation9 + $0x5f0] sm:$0xff]
        %v788 = vld [vmem:[#allocation9 + $0x5f8] sm:$0xff]
        %v789 = vld [vmem:[#allocation9 + $0x600] sm:$0xff]
        %v790 = vld [vmem:[#allocation9 + $0x608] sm:$0xff]
        %v791 = vld [vmem:[#allocation9 + $0x610] sm:$0xff]
        %v792 = vld [vmem:[#allocation9 + $0x618] sm:$0xff]
        %v793 = vld [vmem:[#allocation9 + $0x620] sm:$0xff]
        %v794 = vld [vmem:[#allocation9 + $0x628] sm:$0xff]
        %v795 = vld [vmem:[#allocation9 + $0x630] sm:$0xff]
        %v796 = vld [vmem:[#allocation9 + $0x638] sm:$0xff]
        %v797 = vld [vmem:[#allocation9 + $0x640] sm:$0xff]
        %v798 = vld [vmem:[#allocation9 + $0x648] sm:$0xff]
        %v799 = vld [vmem:[#allocation9 + $0x650] sm:$0xff]
        %v800 = vld [vmem:[#allocation9 + $0x658] sm:$0xff]
        %v801 = vld [vmem:[#allocation9 + $0x660] sm:$0xff]
        %v802 = vld [vmem:[#allocation9 + $0x668] sm:$0xff]
        %v803 = vld [vmem:[#allocation9 + $0x670] sm:$0xff]
        %v804 = vld [vmem:[#allocation9 + $0x678] sm:$0xff]
        %v805 = vld [vmem:[#allocation9 + $0x680] sm:$0xff]
        %v806 = vld [vmem:[#allocation9 + $0x688] sm:$0xff]
        %v807 = vld [vmem:[#allocation9 + $0x690] sm:$0xff]
        %v808 = vld [vmem:[#allocation9 + $0x698] sm:$0xff]
        %v809 = vld [vmem:[#allocation9 + $0x6a0] sm:$0xff]
        %v810 = vld [vmem:[#allocation9 + $0x6a8] sm:$0xff]
        %v811 = vld [vmem:[#allocation9 + $0x6b0] sm:$0xff]
        %v812 = vld [vmem:[#allocation9 + $0x6b8] sm:$0xff]
        %v813 = vld [vmem:[#allocation9 + $0x6c0] sm:$0xff]
        %v814 = vld [vmem:[#allocation9 + $0x6c8] sm:$0xff]
        %v815 = vld [vmem:[#allocation9 + $0x6d0] sm:$0xff]
        %v816 = vld [vmem:[#allocation9 + $0x6d8] sm:$0xff]
        %v817 = vld [vmem:[#allocation9 + $0x6e0] sm:$0xff]
        %v818 = vld [vmem:[#allocation9 + $0x6e8] sm:$0xff]
        %v819 = vld [vmem:[#allocation9 + $0x6f0] sm:$0xff]
        %v820 = vld [vmem:[#allocation9 + $0x6f8] sm:$0xff]
        %v821 = vld [vmem:[#allocation9 + $0x700] sm:$0xff]
        %v822 = vld [vmem:[#allocation9 + $0x708] sm:$0xff]
        %v823 = vld [vmem:[#allocation9 + $0x710] sm:$0xff]
        %v824 = vld [vmem:[#allocation9 + $0x718] sm:$0xff]
        %v825 = vld [vmem:[#allocation9 + $0x720] sm:$0xff]
        %v826 = vld [vmem:[#allocation9 + $0x728] sm:$0xff]
        %v827 = vld [vmem:[#allocation9 + $0x730] sm:$0xff]
        %v828 = vld [vmem:[#allocation9 + $0x738] sm:$0xff]
        %v829 = vld [vmem:[#allocation9 + $0x740] sm:$0xff]
        %v830 = vld [vmem:[#allocation9 + $0x748] sm:$0xff]
        %v831 = vld [vmem:[#allocation9 + $0x750] sm:$0xff]
        %v832 = vld [vmem:[#allocation9 + $0x758] sm:$0xff]
        %v833 = vld [vmem:[#allocation9 + $0x760] sm:$0xff]
        %v834 = vld [vmem:[#allocation9 + $0x768] sm:$0xff]
        %v835 = vld [vmem:[#allocation9 + $0x770] sm:$0xff]
        %v836 = vld [vmem:[#allocation9 + $0x778] sm:$0xff]
        %v837 = vld [vmem:[#allocation9 + $0x780] sm:$0xff]
        %v838 = vld [vmem:[#allocation9 + $0x788] sm:$0xff]
        %v839 = vld [vmem:[#allocation9 + $0x790] sm:$0xff]
        %v840 = vld [vmem:[#allocation9 + $0x798] sm:$0xff]
        %v841 = vld [vmem:[#allocation9 + $0x7a0] sm:$0xff]
        %v842 = vld [vmem:[#allocation9 + $0x7a8] sm:$0xff]
        %v843 = vld [vmem:[#allocation9 + $0x7b0] sm:$0xff]
        %v844 = vld [vmem:[#allocation9 + $0x7b8] sm:$0xff]
        %v845 = vld [vmem:[#allocation9 + $0x7c0] sm:$0xff]
        %v846 = vld [vmem:[#allocation9 + $0x7c8] sm:$0xff]
        %v847 = vld [vmem:[#allocation9 + $0x7d0] sm:$0xff]
        %v848 = vld [vmem:[#allocation9 + $0x7d8] sm:$0xff]
        %v849 = vld [vmem:[#allocation9 + $0x7e0] sm:$0xff]
        %v850 = vld [vmem:[#allocation9 + $0x7e8] sm:$0xff]
        %v851 = vld [vmem:[#allocation9 + $0x7f0] sm:$0xff]
        %v852 = vld [vmem:[#allocation9 + $0x7f8] sm:$0xff]
        %v853 = vld [vmem:[%s2] sm:$0xf]
        %v855 = vlaneseq
        %v856 = vshrl.u32 %v855, 7
        %v857 = vsub.s32 0, %v856
        %v858 = vrot.slane %v853, %v857
        %v859 = vlaneseq
        %v860 = vshrl.u32 %v859, 7
        %v861 = vsub.s32 1, %v860
        %v862 = vrot.slane %v853, %v861
        %v863 = vlaneseq
        %v864 = vshrl.u32 %v863, 7
        %v865 = vsub.s32 2, %v864
        %v866 = vrot.slane %v853, %v865
        %v867 = vlaneseq
        %v868 = vshrl.u32 %v867, 7
        %v869 = vsub.s32 3, %v868
        %v870 = vrot.slane %v853, %v869
        %v939 = vunpack.c.l.b16 %v533
        %v940 = vunpack.c.h.b16 %v533
        %v941 = vunpack.c.l.b16 %v534
        %v942 = vunpack.c.h.b16 %v534
        %v943 = vunpack.c.l.b16 %v535
        %v944 = vunpack.c.h.b16 %v535
        %v945 = vunpack.c.l.b16 %v536
        %v946 = vunpack.c.h.b16 %v536
        %v947 = vunpack.c.l.b16 %v537
        %v948 = vunpack.c.h.b16 %v537
        %v949 = vunpack.c.l.b16 %v538
        %v950 = vunpack.c.h.b16 %v538
        %v951 = vunpack.c.l.b16 %v539
        %v952 = vunpack.c.h.b16 %v539
        %v953 = vunpack.c.l.b16 %v540
        %v954 = vunpack.c.h.b16 %v540
        %v955 = vunpack.c.l.b16 %v541
        %v956 = vunpack.c.h.b16 %v541
        %v957 = vunpack.c.l.b16 %v542
        %v958 = vunpack.c.h.b16 %v542
        %v959 = vunpack.c.l.b16 %v543
        %v960 = vunpack.c.h.b16 %v543
        %v961 = vunpack.c.l.b16 %v544
        %v962 = vunpack.c.h.b16 %v544
        %v963 = vunpack.c.l.b16 %v545
        %v964 = vunpack.c.h.b16 %v545
        %v965 = vunpack.c.l.b16 %v546
        %v966 = vunpack.c.h.b16 %v546
        %v967 = vunpack.c.l.b16 %v547
        %v968 = vunpack.c.h.b16 %v547
        %v969 = vunpack.c.l.b16 %v548
        %v970 = vunpack.c.h.b16 %v548
        %v971 = vunpack.c.l.b16 %v549
        %v972 = vunpack.c.h.b16 %v549
        %v973 = vunpack.c.l.b16 %v550
        %v974 = vunpack.c.h.b16 %v550
        %v975 = vunpack.c.l.b16 %v551
        %v976 = vunpack.c.h.b16 %v551
        %v977 = vunpack.c.l.b16 %v552
        %v978 = vunpack.c.h.b16 %v552
        %v979 = vunpack.c.l.b16 %v553
        %v980 = vunpack.c.h.b16 %v553
        %v981 = vunpack.c.l.b16 %v554
        %v982 = vunpack.c.h.b16 %v554
        %v983 = vunpack.c.l.b16 %v555
        %v984 = vunpack.c.h.b16 %v555
        %v985 = vunpack.c.l.b16 %v556
        %v986 = vunpack.c.h.b16 %v556
        %v987 = vunpack.c.l.b16 %v557
        %v988 = vunpack.c.h.b16 %v557
        %v989 = vunpack.c.l.b16 %v558
        %v990 = vunpack.c.h.b16 %v558
        %v991 = vunpack.c.l.b16 %v559
        %v992 = vunpack.c.h.b16 %v559
        %v993 = vunpack.c.l.b16 %v560
        %v994 = vunpack.c.h.b16 %v560
        %v995 = vunpack.c.l.b16 %v561
        %v996 = vunpack.c.h.b16 %v561
        %v997 = vunpack.c.l.b16 %v562
        %v998 = vunpack.c.h.b16 %v562
        %v999 = vunpack.c.l.b16 %v563
        %v1000 = vunpack.c.h.b16 %v563
        %v1001 = vunpack.c.l.b16 %v564
        %v1002 = vunpack.c.h.b16 %v564
        %v1003 = vunpack.c.l.b16 %v565
        %v1004 = vunpack.c.h.b16 %v565
        %v1005 = vunpack.c.l.b16 %v566
        %v1006 = vunpack.c.h.b16 %v566
        %v1007 = vunpack.c.l.b16 %v567
        %v1008 = vunpack.c.h.b16 %v567
        %v1009 = vunpack.c.l.b16 %v568
        %v1010 = vunpack.c.h.b16 %v568
        %v1011 = vunpack.c.l.b16 %v569
        %v1012 = vunpack.c.h.b16 %v569
        %v1013 = vunpack.c.l.b16 %v570
        %v1014 = vunpack.c.h.b16 %v570
        %v1015 = vunpack.c.l.b16 %v571
        %v1016 = vunpack.c.h.b16 %v571
        %v1017 = vunpack.c.l.b16 %v572
        %v1018 = vunpack.c.h.b16 %v572
        %v1019 = vunpack.c.l.b16 %v573
        %v1020 = vunpack.c.h.b16 %v573
        %v1021 = vunpack.c.l.b16 %v574
        %v1022 = vunpack.c.h.b16 %v574
        %v1023 = vunpack.c.l.b16 %v575
        %v1024 = vunpack.c.h.b16 %v575
        %v1025 = vunpack.c.l.b16 %v576
        %v1026 = vunpack.c.h.b16 %v576
        %v1027 = vunpack.c.l.b16 %v577
        %v1028 = vunpack.c.h.b16 %v577
        %v1029 = vunpack.c.l.b16 %v578
        %v1030 = vunpack.c.h.b16 %v578
        %v1031 = vunpack.c.l.b16 %v579
        %v1032 = vunpack.c.h.b16 %v579
        %v1033 = vunpack.c.l.b16 %v580
        %v1034 = vunpack.c.h.b16 %v580
        %v1035 = vunpack.c.l.b16 %v581
        %v1036 = vunpack.c.h.b16 %v581
        %v1037 = vunpack.c.l.b16 %v582
        %v1038 = vunpack.c.h.b16 %v582
        %v1039 = vunpack.c.l.b16 %v583
        %v1040 = vunpack.c.h.b16 %v583
        %v1041 = vunpack.c.l.b16 %v584
        %v1042 = vunpack.c.h.b16 %v584
        %v1043 = vunpack.c.l.b16 %v585
        %v1044 = vunpack.c.h.b16 %v585
        %v1045 = vunpack.c.l.b16 %v586
        %v1046 = vunpack.c.h.b16 %v586
        %v1047 = vunpack.c.l.b16 %v587
        %v1048 = vunpack.c.h.b16 %v587
        %v1049 = vunpack.c.l.b16 %v588
        %v1050 = vunpack.c.h.b16 %v588
        %v1051 = vunpack.c.l.b16 %v589
        %v1052 = vunpack.c.h.b16 %v589
        %v1053 = vunpack.c.l.b16 %v590
        %v1054 = vunpack.c.h.b16 %v590
        %v1055 = vunpack.c.l.b16 %v591
        %v1056 = vunpack.c.h.b16 %v591
        %v1057 = vunpack.c.l.b16 %v592
        %v1058 = vunpack.c.h.b16 %v592
        %v1059 = vunpack.c.l.b16 %v593
        %v1060 = vunpack.c.h.b16 %v593
        %v1061 = vunpack.c.l.b16 %v594
        %v1062 = vunpack.c.h.b16 %v594
        %v1063 = vunpack.c.l.b16 %v595
        %v1064 = vunpack.c.h.b16 %v595
        %v1065 = vunpack.c.l.b16 %v596
        %v1066 = vunpack.c.h.b16 %v596
        %v1067 = vpack.c.b16 %v947, %v939
        %v1068 = vpack.c.b16 %v948, %v940
        %v1069 = vpack.c.b16 %v949, %v941
        %v1070 = vpack.c.b16 %v950, %v942
        %v1071 = vpack.c.b16 %v951, %v943
        %v1072 = vpack.c.b16 %v952, %v944
        %v1073 = vpack.c.b16 %v953, %v945
        %v1074 = vpack.c.b16 %v954, %v946
        %v1075 = vpack.c.b16 %v963, %v955
        %v1076 = vpack.c.b16 %v964, %v956
        %v1077 = vpack.c.b16 %v965, %v957
        %v1078 = vpack.c.b16 %v966, %v958
        %v1079 = vpack.c.b16 %v967, %v959
        %v1080 = vpack.c.b16 %v968, %v960
        %v1081 = vpack.c.b16 %v969, %v961
        %v1082 = vpack.c.b16 %v970, %v962
        %v1083 = vpack.c.b16 %v979, %v971
        %v1084 = vpack.c.b16 %v980, %v972
        %v1085 = vpack.c.b16 %v981, %v973
        %v1086 = vpack.c.b16 %v982, %v974
        %v1087 = vpack.c.b16 %v983, %v975
        %v1088 = vpack.c.b16 %v984, %v976
        %v1089 = vpack.c.b16 %v985, %v977
        %v1090 = vpack.c.b16 %v986, %v978
        %v1091 = vpack.c.b16 %v995, %v987
        %v1092 = vpack.c.b16 %v996, %v988
        %v1093 = vpack.c.b16 %v997, %v989
        %v1094 = vpack.c.b16 %v998, %v990
        %v1095 = vpack.c.b16 %v999, %v991
        %v1096 = vpack.c.b16 %v1000, %v992
        %v1097 = vpack.c.b16 %v1001, %v993
        %v1098 = vpack.c.b16 %v1002, %v994
        %v1099 = vpack.c.b16 %v1011, %v1003
        %v1100 = vpack.c.b16 %v1012, %v1004
        %v1101 = vpack.c.b16 %v1013, %v1005
        %v1102 = vpack.c.b16 %v1014, %v1006
        %v1103 = vpack.c.b16 %v1015, %v1007
        %v1104 = vpack.c.b16 %v1016, %v1008
        %v1105 = vpack.c.b16 %v1017, %v1009
        %v1106 = vpack.c.b16 %v1018, %v1010
        %v1107 = vpack.c.b16 %v1027, %v1019
        %v1108 = vpack.c.b16 %v1028, %v1020
        %v1109 = vpack.c.b16 %v1029, %v1021
        %v1110 = vpack.c.b16 %v1030, %v1022
        %v1111 = vpack.c.b16 %v1031, %v1023
        %v1112 = vpack.c.b16 %v1032, %v1024
        %v1113 = vpack.c.b16 %v1033, %v1025
        %v1114 = vpack.c.b16 %v1034, %v1026
        %v1115 = vpack.c.b16 %v1043, %v1035
        %v1116 = vpack.c.b16 %v1044, %v1036
        %v1117 = vpack.c.b16 %v1045, %v1037
        %v1118 = vpack.c.b16 %v1046, %v1038
        %v1119 = vpack.c.b16 %v1047, %v1039
        %v1120 = vpack.c.b16 %v1048, %v1040
        %v1121 = vpack.c.b16 %v1049, %v1041
        %v1122 = vpack.c.b16 %v1050, %v1042
        %v1123 = vpack.c.b16 %v1059, %v1051
        %v1124 = vpack.c.b16 %v1060, %v1052
        %v1125 = vpack.c.b16 %v1061, %v1053
        %v1126 = vpack.c.b16 %v1062, %v1054
        %v1127 = vpack.c.b16 %v1063, %v1055
        %v1128 = vpack.c.b16 %v1064, %v1056
        %v1129 = vpack.c.b16 %v1065, %v1057
        %v1130 = vpack.c.b16 %v1066, %v1058
        %v1451 = vunpack.c.l.b16 %v597
        %v1452 = vunpack.c.h.b16 %v597
        %v1453 = vunpack.c.l.b16 %v598
        %v1454 = vunpack.c.h.b16 %v598
        %v1455 = vunpack.c.l.b16 %v599
        %v1456 = vunpack.c.h.b16 %v599
        %v1457 = vunpack.c.l.b16 %v600
        %v1458 = vunpack.c.h.b16 %v600
        %v1459 = vunpack.c.l.b16 %v601
        %v1460 = vunpack.c.h.b16 %v601
        %v1461 = vunpack.c.l.b16 %v602
        %v1462 = vunpack.c.h.b16 %v602
        %v1463 = vunpack.c.l.b16 %v603
        %v1464 = vunpack.c.h.b16 %v603
        %v1465 = vunpack.c.l.b16 %v604
        %v1466 = vunpack.c.h.b16 %v604
        %v1467 = vunpack.c.l.b16 %v605
        %v1468 = vunpack.c.h.b16 %v605
        %v1469 = vunpack.c.l.b16 %v606
        %v1470 = vunpack.c.h.b16 %v606
        %v1471 = vunpack.c.l.b16 %v607
        %v1472 = vunpack.c.h.b16 %v607
        %v1473 = vunpack.c.l.b16 %v608
        %v1474 = vunpack.c.h.b16 %v608
        %v1475 = vunpack.c.l.b16 %v609
        %v1476 = vunpack.c.h.b16 %v609
        %v1477 = vunpack.c.l.b16 %v610
        %v1478 = vunpack.c.h.b16 %v610
        %v1479 = vunpack.c.l.b16 %v611
        %v1480 = vunpack.c.h.b16 %v611
        %v1481 = vunpack.c.l.b16 %v612
        %v1482 = vunpack.c.h.b16 %v612
        %v1483 = vunpack.c.l.b16 %v613
        %v1484 = vunpack.c.h.b16 %v613
        %v1485 = vunpack.c.l.b16 %v614
        %v1486 = vunpack.c.h.b16 %v614
        %v1487 = vunpack.c.l.b16 %v615
        %v1488 = vunpack.c.h.b16 %v615
        %v1489 = vunpack.c.l.b16 %v616
        %v1490 = vunpack.c.h.b16 %v616
        %v1491 = vunpack.c.l.b16 %v617
        %v1492 = vunpack.c.h.b16 %v617
        %v1493 = vunpack.c.l.b16 %v618
        %v1494 = vunpack.c.h.b16 %v618
        %v1495 = vunpack.c.l.b16 %v619
        %v1496 = vunpack.c.h.b16 %v619
        %v1497 = vunpack.c.l.b16 %v620
        %v1498 = vunpack.c.h.b16 %v620
        %v1499 = vunpack.c.l.b16 %v621
        %v1500 = vunpack.c.h.b16 %v621
        %v1501 = vunpack.c.l.b16 %v622
        %v1502 = vunpack.c.h.b16 %v622
        %v1503 = vunpack.c.l.b16 %v623
        %v1504 = vunpack.c.h.b16 %v623
        %v1505 = vunpack.c.l.b16 %v624
        %v1506 = vunpack.c.h.b16 %v624
        %v1507 = vunpack.c.l.b16 %v625
        %v1508 = vunpack.c.h.b16 %v625
        %v1509 = vunpack.c.l.b16 %v626
        %v1510 = vunpack.c.h.b16 %v626
        %v1511 = vunpack.c.l.b16 %v627
        %v1512 = vunpack.c.h.b16 %v627
        %v1513 = vunpack.c.l.b16 %v628
        %v1514 = vunpack.c.h.b16 %v628
        %v1515 = vunpack.c.l.b16 %v629
        %v1516 = vunpack.c.h.b16 %v629
        %v1517 = vunpack.c.l.b16 %v630
        %v1518 = vunpack.c.h.b16 %v630
        %v1519 = vunpack.c.l.b16 %v631
        %v1520 = vunpack.c.h.b16 %v631
        %v1521 = vunpack.c.l.b16 %v632
        %v1522 = vunpack.c.h.b16 %v632
        %v1523 = vunpack.c.l.b16 %v633
        %v1524 = vunpack.c.h.b16 %v633
        %v1525 = vunpack.c.l.b16 %v634
        %v1526 = vunpack.c.h.b16 %v634
        %v1527 = vunpack.c.l.b16 %v635
        %v1528 = vunpack.c.h.b16 %v635
        %v1529 = vunpack.c.l.b16 %v636
        %v1530 = vunpack.c.h.b16 %v636
        %v1531 = vunpack.c.l.b16 %v637
        %v1532 = vunpack.c.h.b16 %v637
        %v1533 = vunpack.c.l.b16 %v638
        %v1534 = vunpack.c.h.b16 %v638
        %v1535 = vunpack.c.l.b16 %v639
        %v1536 = vunpack.c.h.b16 %v639
        %v1537 = vunpack.c.l.b16 %v640
        %v1538 = vunpack.c.h.b16 %v640
        %v1539 = vunpack.c.l.b16 %v641
        %v1540 = vunpack.c.h.b16 %v641
        %v1541 = vunpack.c.l.b16 %v642
        %v1542 = vunpack.c.h.b16 %v642
        %v1543 = vunpack.c.l.b16 %v643
        %v1544 = vunpack.c.h.b16 %v643
        %v1545 = vunpack.c.l.b16 %v644
        %v1546 = vunpack.c.h.b16 %v644
        %v1547 = vunpack.c.l.b16 %v645
        %v1548 = vunpack.c.h.b16 %v645
        %v1549 = vunpack.c.l.b16 %v646
        %v1550 = vunpack.c.h.b16 %v646
        %v1551 = vunpack.c.l.b16 %v647
        %v1552 = vunpack.c.h.b16 %v647
        %v1553 = vunpack.c.l.b16 %v648
        %v1554 = vunpack.c.h.b16 %v648
        %v1555 = vunpack.c.l.b16 %v649
        %v1556 = vunpack.c.h.b16 %v649
        %v1557 = vunpack.c.l.b16 %v650
        %v1558 = vunpack.c.h.b16 %v650
        %v1559 = vunpack.c.l.b16 %v651
        %v1560 = vunpack.c.h.b16 %v651
        %v1561 = vunpack.c.l.b16 %v652
        %v1562 = vunpack.c.h.b16 %v652
        %v1563 = vunpack.c.l.b16 %v653
        %v1564 = vunpack.c.h.b16 %v653
        %v1565 = vunpack.c.l.b16 %v654
        %v1566 = vunpack.c.h.b16 %v654
        %v1567 = vunpack.c.l.b16 %v655
        %v1568 = vunpack.c.h.b16 %v655
        %v1569 = vunpack.c.l.b16 %v656
        %v1570 = vunpack.c.h.b16 %v656
        %v1571 = vunpack.c.l.b16 %v657
        %v1572 = vunpack.c.h.b16 %v657
        %v1573 = vunpack.c.l.b16 %v658
        %v1574 = vunpack.c.h.b16 %v658
        %v1575 = vunpack.c.l.b16 %v659
        %v1576 = vunpack.c.h.b16 %v659
        %v1577 = vunpack.c.l.b16 %v660
        %v1578 = vunpack.c.h.b16 %v660
        %v1579 = vunpack.c.l.b16 %v661
        %v1580 = vunpack.c.h.b16 %v661
        %v1581 = vunpack.c.l.b16 %v662
        %v1582 = vunpack.c.h.b16 %v662
        %v1583 = vunpack.c.l.b16 %v663
        %v1584 = vunpack.c.h.b16 %v663
        %v1585 = vunpack.c.l.b16 %v664
        %v1586 = vunpack.c.h.b16 %v664
        %v1587 = vunpack.c.l.b16 %v665
        %v1588 = vunpack.c.h.b16 %v665
        %v1589 = vunpack.c.l.b16 %v666
        %v1590 = vunpack.c.h.b16 %v666
        %v1591 = vunpack.c.l.b16 %v667
        %v1592 = vunpack.c.h.b16 %v667
        %v1593 = vunpack.c.l.b16 %v668
        %v1594 = vunpack.c.h.b16 %v668
        %v1595 = vunpack.c.l.b16 %v669
        %v1596 = vunpack.c.h.b16 %v669
        %v1597 = vunpack.c.l.b16 %v670
        %v1598 = vunpack.c.h.b16 %v670
        %v1599 = vunpack.c.l.b16 %v671
        %v1600 = vunpack.c.h.b16 %v671
        %v1601 = vunpack.c.l.b16 %v672
        %v1602 = vunpack.c.h.b16 %v672
        %v1603 = vunpack.c.l.b16 %v673
        %v1604 = vunpack.c.h.b16 %v673
        %v1605 = vunpack.c.l.b16 %v674
        %v1606 = vunpack.c.h.b16 %v674
        %v1607 = vunpack.c.l.b16 %v675
        %v1608 = vunpack.c.h.b16 %v675
        %v1609 = vunpack.c.l.b16 %v676
        %v1610 = vunpack.c.h.b16 %v676
        %v1611 = vunpack.c.l.b16 %v677
        %v1612 = vunpack.c.h.b16 %v677
        %v1613 = vunpack.c.l.b16 %v678
        %v1614 = vunpack.c.h.b16 %v678
        %v1615 = vunpack.c.l.b16 %v679
        %v1616 = vunpack.c.h.b16 %v679
        %v1617 = vunpack.c.l.b16 %v680
        %v1618 = vunpack.c.h.b16 %v680
        %v1619 = vunpack.c.l.b16 %v681
        %v1620 = vunpack.c.h.b16 %v681
        %v1621 = vunpack.c.l.b16 %v682
        %v1622 = vunpack.c.h.b16 %v682
        %v1623 = vunpack.c.l.b16 %v683
        %v1624 = vunpack.c.h.b16 %v683
        %v1625 = vunpack.c.l.b16 %v684
        %v1626 = vunpack.c.h.b16 %v684
        %v1627 = vunpack.c.l.b16 %v685
        %v1628 = vunpack.c.h.b16 %v685
        %v1629 = vunpack.c.l.b16 %v686
        %v1630 = vunpack.c.h.b16 %v686
        %v1631 = vunpack.c.l.b16 %v687
        %v1632 = vunpack.c.h.b16 %v687
        %v1633 = vunpack.c.l.b16 %v688
        %v1634 = vunpack.c.h.b16 %v688
        %v1635 = vunpack.c.l.b16 %v689
        %v1636 = vunpack.c.h.b16 %v689
        %v1637 = vunpack.c.l.b16 %v690
        %v1638 = vunpack.c.h.b16 %v690
        %v1639 = vunpack.c.l.b16 %v691
        %v1640 = vunpack.c.h.b16 %v691
        %v1641 = vunpack.c.l.b16 %v692
        %v1642 = vunpack.c.h.b16 %v692
        %v1643 = vunpack.c.l.b16 %v693
        %v1644 = vunpack.c.h.b16 %v693
        %v1645 = vunpack.c.l.b16 %v694
        %v1646 = vunpack.c.h.b16 %v694
        %v1647 = vunpack.c.l.b16 %v695
        %v1648 = vunpack.c.h.b16 %v695
        %v1649 = vunpack.c.l.b16 %v696
        %v1650 = vunpack.c.h.b16 %v696
        %v1651 = vunpack.c.l.b16 %v697
        %v1652 = vunpack.c.h.b16 %v697
        %v1653 = vunpack.c.l.b16 %v698
        %v1654 = vunpack.c.h.b16 %v698
        %v1655 = vunpack.c.l.b16 %v699
        %v1656 = vunpack.c.h.b16 %v699
        %v1657 = vunpack.c.l.b16 %v700
        %v1658 = vunpack.c.h.b16 %v700
        %v1659 = vunpack.c.l.b16 %v701
        %v1660 = vunpack.c.h.b16 %v701
        %v1661 = vunpack.c.l.b16 %v702
        %v1662 = vunpack.c.h.b16 %v702
        %v1663 = vunpack.c.l.b16 %v703
        %v1664 = vunpack.c.h.b16 %v703
        %v1665 = vunpack.c.l.b16 %v704
        %v1666 = vunpack.c.h.b16 %v704
        %v1667 = vunpack.c.l.b16 %v705
        %v1668 = vunpack.c.h.b16 %v705
        %v1669 = vunpack.c.l.b16 %v706
        %v1670 = vunpack.c.h.b16 %v706
        %v1671 = vunpack.c.l.b16 %v707
        %v1672 = vunpack.c.h.b16 %v707
        %v1673 = vunpack.c.l.b16 %v708
        %v1674 = vunpack.c.h.b16 %v708
        %v1675 = vunpack.c.l.b16 %v709
        %v1676 = vunpack.c.h.b16 %v709
        %v1677 = vunpack.c.l.b16 %v710
        %v1678 = vunpack.c.h.b16 %v710
        %v1679 = vunpack.c.l.b16 %v711
        %v1680 = vunpack.c.h.b16 %v711
        %v1681 = vunpack.c.l.b16 %v712
        %v1682 = vunpack.c.h.b16 %v712
        %v1683 = vunpack.c.l.b16 %v713
        %v1684 = vunpack.c.h.b16 %v713
        %v1685 = vunpack.c.l.b16 %v714
        %v1686 = vunpack.c.h.b16 %v714
        %v1687 = vunpack.c.l.b16 %v715
        %v1688 = vunpack.c.h.b16 %v715
        %v1689 = vunpack.c.l.b16 %v716
        %v1690 = vunpack.c.h.b16 %v716
        %v1691 = vunpack.c.l.b16 %v717
        %v1692 = vunpack.c.h.b16 %v717
        %v1693 = vunpack.c.l.b16 %v718
        %v1694 = vunpack.c.h.b16 %v718
        %v1695 = vunpack.c.l.b16 %v719
        %v1696 = vunpack.c.h.b16 %v719
        %v1697 = vunpack.c.l.b16 %v720
        %v1698 = vunpack.c.h.b16 %v720
        %v1699 = vunpack.c.l.b16 %v721
        %v1700 = vunpack.c.h.b16 %v721
        %v1701 = vunpack.c.l.b16 %v722
        %v1702 = vunpack.c.h.b16 %v722
        %v1703 = vunpack.c.l.b16 %v723
        %v1704 = vunpack.c.h.b16 %v723
        %v1705 = vunpack.c.l.b16 %v724
        %v1706 = vunpack.c.h.b16 %v724
        %v1707 = vunpack.c.l.b16 %v725
        %v1708 = vunpack.c.h.b16 %v725
        %v1709 = vunpack.c.l.b16 %v726
        %v1710 = vunpack.c.h.b16 %v726
        %v1711 = vunpack.c.l.b16 %v727
        %v1712 = vunpack.c.h.b16 %v727
        %v1713 = vunpack.c.l.b16 %v728
        %v1714 = vunpack.c.h.b16 %v728
        %v1715 = vunpack.c.l.b16 %v729
        %v1716 = vunpack.c.h.b16 %v729
        %v1717 = vunpack.c.l.b16 %v730
        %v1718 = vunpack.c.h.b16 %v730
        %v1719 = vunpack.c.l.b16 %v731
        %v1720 = vunpack.c.h.b16 %v731
        %v1721 = vunpack.c.l.b16 %v732
        %v1722 = vunpack.c.h.b16 %v732
        %v1723 = vunpack.c.l.b16 %v733
        %v1724 = vunpack.c.h.b16 %v733
        %v1725 = vunpack.c.l.b16 %v734
        %v1726 = vunpack.c.h.b16 %v734
        %v1727 = vunpack.c.l.b16 %v735
        %v1728 = vunpack.c.h.b16 %v735
        %v1729 = vunpack.c.l.b16 %v736
        %v1730 = vunpack.c.h.b16 %v736
        %v1731 = vunpack.c.l.b16 %v737
        %v1732 = vunpack.c.h.b16 %v737
        %v1733 = vunpack.c.l.b16 %v738
        %v1734 = vunpack.c.h.b16 %v738
        %v1735 = vunpack.c.l.b16 %v739
        %v1736 = vunpack.c.h.b16 %v739
        %v1737 = vunpack.c.l.b16 %v740
        %v1738 = vunpack.c.h.b16 %v740
        %v1739 = vunpack.c.l.b16 %v741
        %v1740 = vunpack.c.h.b16 %v741
        %v1741 = vunpack.c.l.b16 %v742
        %v1742 = vunpack.c.h.b16 %v742
        %v1743 = vunpack.c.l.b16 %v743
        %v1744 = vunpack.c.h.b16 %v743
        %v1745 = vunpack.c.l.b16 %v744
        %v1746 = vunpack.c.h.b16 %v744
        %v1747 = vunpack.c.l.b16 %v745
        %v1748 = vunpack.c.h.b16 %v745
        %v1749 = vunpack.c.l.b16 %v746
        %v1750 = vunpack.c.h.b16 %v746
        %v1751 = vunpack.c.l.b16 %v747
        %v1752 = vunpack.c.h.b16 %v747
        %v1753 = vunpack.c.l.b16 %v748
        %v1754 = vunpack.c.h.b16 %v748
        %v1755 = vunpack.c.l.b16 %v749
        %v1756 = vunpack.c.h.b16 %v749
        %v1757 = vunpack.c.l.b16 %v750
        %v1758 = vunpack.c.h.b16 %v750
        %v1759 = vunpack.c.l.b16 %v751
        %v1760 = vunpack.c.h.b16 %v751
        %v1761 = vunpack.c.l.b16 %v752
        %v1762 = vunpack.c.h.b16 %v752
        %v1763 = vunpack.c.l.b16 %v753
        %v1764 = vunpack.c.h.b16 %v753
        %v1765 = vunpack.c.l.b16 %v754
        %v1766 = vunpack.c.h.b16 %v754
        %v1767 = vunpack.c.l.b16 %v755
        %v1768 = vunpack.c.h.b16 %v755
        %v1769 = vunpack.c.l.b16 %v756
        %v1770 = vunpack.c.h.b16 %v756
        %v1771 = vunpack.c.l.b16 %v757
        %v1772 = vunpack.c.h.b16 %v757
        %v1773 = vunpack.c.l.b16 %v758
        %v1774 = vunpack.c.h.b16 %v758
        %v1775 = vunpack.c.l.b16 %v759
        %v1776 = vunpack.c.h.b16 %v759
        %v1777 = vunpack.c.l.b16 %v760
        %v1778 = vunpack.c.h.b16 %v760
        %v1779 = vunpack.c.l.b16 %v761
        %v1780 = vunpack.c.h.b16 %v761
        %v1781 = vunpack.c.l.b16 %v762
        %v1782 = vunpack.c.h.b16 %v762
        %v1783 = vunpack.c.l.b16 %v763
        %v1784 = vunpack.c.h.b16 %v763
        %v1785 = vunpack.c.l.b16 %v764
        %v1786 = vunpack.c.h.b16 %v764
        %v1787 = vunpack.c.l.b16 %v765
        %v1788 = vunpack.c.h.b16 %v765
        %v1789 = vunpack.c.l.b16 %v766
        %v1790 = vunpack.c.h.b16 %v766
        %v1791 = vunpack.c.l.b16 %v767
        %v1792 = vunpack.c.h.b16 %v767
        %v1793 = vunpack.c.l.b16 %v768
        %v1794 = vunpack.c.h.b16 %v768
        %v1795 = vunpack.c.l.b16 %v769
        %v1796 = vunpack.c.h.b16 %v769
        %v1797 = vunpack.c.l.b16 %v770
        %v1798 = vunpack.c.h.b16 %v770
        %v1799 = vunpack.c.l.b16 %v771
        %v1800 = vunpack.c.h.b16 %v771
        %v1801 = vunpack.c.l.b16 %v772
        %v1802 = vunpack.c.h.b16 %v772
        %v1803 = vunpack.c.l.b16 %v773
        %v1804 = vunpack.c.h.b16 %v773
        %v1805 = vunpack.c.l.b16 %v774
        %v1806 = vunpack.c.h.b16 %v774
        %v1807 = vunpack.c.l.b16 %v775
        %v1808 = vunpack.c.h.b16 %v775
        %v1809 = vunpack.c.l.b16 %v776
        %v1810 = vunpack.c.h.b16 %v776
        %v1811 = vunpack.c.l.b16 %v777
        %v1812 = vunpack.c.h.b16 %v777
        %v1813 = vunpack.c.l.b16 %v778
        %v1814 = vunpack.c.h.b16 %v778
        %v1815 = vunpack.c.l.b16 %v779
        %v1816 = vunpack.c.h.b16 %v779
        %v1817 = vunpack.c.l.b16 %v780
        %v1818 = vunpack.c.h.b16 %v780
        %v1819 = vunpack.c.l.b16 %v781
        %v1820 = vunpack.c.h.b16 %v781
        %v1821 = vunpack.c.l.b16 %v782
        %v1822 = vunpack.c.h.b16 %v782
        %v1823 = vunpack.c.l.b16 %v783
        %v1824 = vunpack.c.h.b16 %v783
        %v1825 = vunpack.c.l.b16 %v784
        %v1826 = vunpack.c.h.b16 %v784
        %v1827 = vunpack.c.l.b16 %v785
        %v1828 = vunpack.c.h.b16 %v785
        %v1829 = vunpack.c.l.b16 %v786
        %v1830 = vunpack.c.h.b16 %v786
        %v1831 = vunpack.c.l.b16 %v787
        %v1832 = vunpack.c.h.b16 %v787
        %v1833 = vunpack.c.l.b16 %v788
        %v1834 = vunpack.c.h.b16 %v788
        %v1835 = vunpack.c.l.b16 %v789
        %v1836 = vunpack.c.h.b16 %v789
        %v1837 = vunpack.c.l.b16 %v790
        %v1838 = vunpack.c.h.b16 %v790
        %v1839 = vunpack.c.l.b16 %v791
        %v1840 = vunpack.c.h.b16 %v791
        %v1841 = vunpack.c.l.b16 %v792
        %v1842 = vunpack.c.h.b16 %v792
        %v1843 = vunpack.c.l.b16 %v793
        %v1844 = vunpack.c.h.b16 %v793
        %v1845 = vunpack.c.l.b16 %v794
        %v1846 = vunpack.c.h.b16 %v794
        %v1847 = vunpack.c.l.b16 %v795
        %v1848 = vunpack.c.h.b16 %v795
        %v1849 = vunpack.c.l.b16 %v796
        %v1850 = vunpack.c.h.b16 %v796
        %v1851 = vunpack.c.l.b16 %v797
        %v1852 = vunpack.c.h.b16 %v797
        %v1853 = vunpack.c.l.b16 %v798
        %v1854 = vunpack.c.h.b16 %v798
        %v1855 = vunpack.c.l.b16 %v799
        %v1856 = vunpack.c.h.b16 %v799
        %v1857 = vunpack.c.l.b16 %v800
        %v1858 = vunpack.c.h.b16 %v800
        %v1859 = vunpack.c.l.b16 %v801
        %v1860 = vunpack.c.h.b16 %v801
        %v1861 = vunpack.c.l.b16 %v802
        %v1862 = vunpack.c.h.b16 %v802
        %v1863 = vunpack.c.l.b16 %v803
        %v1864 = vunpack.c.h.b16 %v803
        %v1865 = vunpack.c.l.b16 %v804
        %v1866 = vunpack.c.h.b16 %v804
        %v1867 = vunpack.c.l.b16 %v805
        %v1868 = vunpack.c.h.b16 %v805
        %v1869 = vunpack.c.l.b16 %v806
        %v1870 = vunpack.c.h.b16 %v806
        %v1871 = vunpack.c.l.b16 %v807
        %v1872 = vunpack.c.h.b16 %v807
        %v1873 = vunpack.c.l.b16 %v808
        %v1874 = vunpack.c.h.b16 %v808
        %v1875 = vunpack.c.l.b16 %v809
        %v1876 = vunpack.c.h.b16 %v809
        %v1877 = vunpack.c.l.b16 %v810
        %v1878 = vunpack.c.h.b16 %v810
        %v1879 = vunpack.c.l.b16 %v811
        %v1880 = vunpack.c.h.b16 %v811
        %v1881 = vunpack.c.l.b16 %v812
        %v1882 = vunpack.c.h.b16 %v812
        %v1883 = vunpack.c.l.b16 %v813
        %v1884 = vunpack.c.h.b16 %v813
        %v1885 = vunpack.c.l.b16 %v814
        %v1886 = vunpack.c.h.b16 %v814
        %v1887 = vunpack.c.l.b16 %v815
        %v1888 = vunpack.c.h.b16 %v815
        %v1889 = vunpack.c.l.b16 %v816
        %v1890 = vunpack.c.h.b16 %v816
        %v1891 = vunpack.c.l.b16 %v817
        %v1892 = vunpack.c.h.b16 %v817
        %v1893 = vunpack.c.l.b16 %v818
        %v1894 = vunpack.c.h.b16 %v818
        %v1895 = vunpack.c.l.b16 %v819
        %v1896 = vunpack.c.h.b16 %v819
        %v1897 = vunpack.c.l.b16 %v820
        %v1898 = vunpack.c.h.b16 %v820
        %v1899 = vunpack.c.l.b16 %v821
        %v1900 = vunpack.c.h.b16 %v821
        %v1901 = vunpack.c.l.b16 %v822
        %v1902 = vunpack.c.h.b16 %v822
        %v1903 = vunpack.c.l.b16 %v823
        %v1904 = vunpack.c.h.b16 %v823
        %v1905 = vunpack.c.l.b16 %v824
        %v1906 = vunpack.c.h.b16 %v824
        %v1907 = vunpack.c.l.b16 %v825
        %v1908 = vunpack.c.h.b16 %v825
        %v1909 = vunpack.c.l.b16 %v826
        %v1910 = vunpack.c.h.b16 %v826
        %v1911 = vunpack.c.l.b16 %v827
        %v1912 = vunpack.c.h.b16 %v827
        %v1913 = vunpack.c.l.b16 %v828
        %v1914 = vunpack.c.h.b16 %v828
        %v1915 = vunpack.c.l.b16 %v829
        %v1916 = vunpack.c.h.b16 %v829
        %v1917 = vunpack.c.l.b16 %v830
        %v1918 = vunpack.c.h.b16 %v830
        %v1919 = vunpack.c.l.b16 %v831
        %v1920 = vunpack.c.h.b16 %v831
        %v1921 = vunpack.c.l.b16 %v832
        %v1922 = vunpack.c.h.b16 %v832
        %v1923 = vunpack.c.l.b16 %v833
        %v1924 = vunpack.c.h.b16 %v833
        %v1925 = vunpack.c.l.b16 %v834
        %v1926 = vunpack.c.h.b16 %v834
        %v1927 = vunpack.c.l.b16 %v835
        %v1928 = vunpack.c.h.b16 %v835
        %v1929 = vunpack.c.l.b16 %v836
        %v1930 = vunpack.c.h.b16 %v836
        %v1931 = vunpack.c.l.b16 %v837
        %v1932 = vunpack.c.h.b16 %v837
        %v1933 = vunpack.c.l.b16 %v838
        %v1934 = vunpack.c.h.b16 %v838
        %v1935 = vunpack.c.l.b16 %v839
        %v1936 = vunpack.c.h.b16 %v839
        %v1937 = vunpack.c.l.b16 %v840
        %v1938 = vunpack.c.h.b16 %v840
        %v1939 = vunpack.c.l.b16 %v841
        %v1940 = vunpack.c.h.b16 %v841
        %v1941 = vunpack.c.l.b16 %v842
        %v1942 = vunpack.c.h.b16 %v842
        %v1943 = vunpack.c.l.b16 %v843
        %v1944 = vunpack.c.h.b16 %v843
        %v1945 = vunpack.c.l.b16 %v844
        %v1946 = vunpack.c.h.b16 %v844
        %v1947 = vunpack.c.l.b16 %v845
        %v1948 = vunpack.c.h.b16 %v845
        %v1949 = vunpack.c.l.b16 %v846
        %v1950 = vunpack.c.h.b16 %v846
        %v1951 = vunpack.c.l.b16 %v847
        %v1952 = vunpack.c.h.b16 %v847
        %v1953 = vunpack.c.l.b16 %v848
        %v1954 = vunpack.c.h.b16 %v848
        %v1955 = vunpack.c.l.b16 %v849
        %v1956 = vunpack.c.h.b16 %v849
        %v1957 = vunpack.c.l.b16 %v850
        %v1958 = vunpack.c.h.b16 %v850
        %v1959 = vunpack.c.l.b16 %v851
        %v1960 = vunpack.c.h.b16 %v851
        %v1961 = vunpack.c.l.b16 %v852
        %v1962 = vunpack.c.h.b16 %v852
        %v1963 = vpack.c.b16 %v1455, %v1451
        %v1964 = vpack.c.b16 %v1456, %v1452
        %v1965 = vpack.c.b16 %v1457, %v1453
        %v1966 = vpack.c.b16 %v1458, %v1454
        %v1967 = vpack.c.b16 %v1463, %v1459
        %v1968 = vpack.c.b16 %v1464, %v1460
        %v1969 = vpack.c.b16 %v1465, %v1461
        %v1970 = vpack.c.b16 %v1466, %v1462
        %v1971 = vpack.c.b16 %v1471, %v1467
        %v1972 = vpack.c.b16 %v1472, %v1468
        %v1973 = vpack.c.b16 %v1473, %v1469
        %v1974 = vpack.c.b16 %v1474, %v1470
        %v1975 = vpack.c.b16 %v1479, %v1475
        %v1976 = vpack.c.b16 %v1480, %v1476
        %v1977 = vpack.c.b16 %v1481, %v1477
        %v1978 = vpack.c.b16 %v1482, %v1478
        %v1979 = vpack.c.b16 %v1487, %v1483
        %v1980 = vpack.c.b16 %v1488, %v1484
        %v1981 = vpack.c.b16 %v1489, %v1485
        %v1982 = vpack.c.b16 %v1490, %v1486
        %v1983 = vpack.c.b16 %v1495, %v1491
        %v1984 = vpack.c.b16 %v1496, %v1492
        %v1985 = vpack.c.b16 %v1497, %v1493
        %v1986 = vpack.c.b16 %v1498, %v1494
        %v1987 = vpack.c.b16 %v1503, %v1499
        %v1988 = vpack.c.b16 %v1504, %v1500
        %v1989 = vpack.c.b16 %v1505, %v1501
        %v1990 = vpack.c.b16 %v1506, %v1502
        %v1991 = vpack.c.b16 %v1511, %v1507
        %v1992 = vpack.c.b16 %v1512, %v1508
        %v1993 = vpack.c.b16 %v1513, %v1509
        %v1994 = vpack.c.b16 %v1514, %v1510
        %v1995 = vpack.c.b16 %v1519, %v1515
        %v1996 = vpack.c.b16 %v1520, %v1516
        %v1997 = vpack.c.b16 %v1521, %v1517
        %v1998 = vpack.c.b16 %v1522, %v1518
        %v1999 = vpack.c.b16 %v1527, %v1523
        %v2000 = vpack.c.b16 %v1528, %v1524
        %v2001 = vpack.c.b16 %v1529, %v1525
        %v2002 = vpack.c.b16 %v1530, %v1526
        %v2003 = vpack.c.b16 %v1535, %v1531
        %v2004 = vpack.c.b16 %v1536, %v1532
        %v2005 = vpack.c.b16 %v1537, %v1533
        %v2006 = vpack.c.b16 %v1538, %v1534
        %v2007 = vpack.c.b16 %v1543, %v1539
        %v2008 = vpack.c.b16 %v1544, %v1540
        %v2009 = vpack.c.b16 %v1545, %v1541
        %v2010 = vpack.c.b16 %v1546, %v1542
        %v2011 = vpack.c.b16 %v1551, %v1547
        %v2012 = vpack.c.b16 %v1552, %v1548
        %v2013 = vpack.c.b16 %v1553, %v1549
        %v2014 = vpack.c.b16 %v1554, %v1550
        %v2015 = vpack.c.b16 %v1559, %v1555
        %v2016 = vpack.c.b16 %v1560, %v1556
        %v2017 = vpack.c.b16 %v1561, %v1557
        %v2018 = vpack.c.b16 %v1562, %v1558
        %v2019 = vpack.c.b16 %v1567, %v1563
        %v2020 = vpack.c.b16 %v1568, %v1564
        %v2021 = vpack.c.b16 %v1569, %v1565
        %v2022 = vpack.c.b16 %v1570, %v1566
        %v2023 = vpack.c.b16 %v1575, %v1571
        %v2024 = vpack.c.b16 %v1576, %v1572
        %v2025 = vpack.c.b16 %v1577, %v1573
        %v2026 = vpack.c.b16 %v1578, %v1574
        %v2027 = vpack.c.b16 %v1583, %v1579
        %v2028 = vpack.c.b16 %v1584, %v1580
        %v2029 = vpack.c.b16 %v1585, %v1581
        %v2030 = vpack.c.b16 %v1586, %v1582
        %v2031 = vpack.c.b16 %v1591, %v1587
        %v2032 = vpack.c.b16 %v1592, %v1588
        %v2033 = vpack.c.b16 %v1593, %v1589
        %v2034 = vpack.c.b16 %v1594, %v1590
        %v2035 = vpack.c.b16 %v1599, %v1595
        %v2036 = vpack.c.b16 %v1600, %v1596
        %v2037 = vpack.c.b16 %v1601, %v1597
        %v2038 = vpack.c.b16 %v1602, %v1598
        %v2039 = vpack.c.b16 %v1607, %v1603
        %v2040 = vpack.c.b16 %v1608, %v1604
        %v2041 = vpack.c.b16 %v1609, %v1605
        %v2042 = vpack.c.b16 %v1610, %v1606
        %v2043 = vpack.c.b16 %v1615, %v1611
        %v2044 = vpack.c.b16 %v1616, %v1612
        %v2045 = vpack.c.b16 %v1617, %v1613
        %v2046 = vpack.c.b16 %v1618, %v1614
        %v2047 = vpack.c.b16 %v1623, %v1619
        %v2048 = vpack.c.b16 %v1624, %v1620
        %v2049 = vpack.c.b16 %v1625, %v1621
        %v2050 = vpack.c.b16 %v1626, %v1622
        %v2051 = vpack.c.b16 %v1631, %v1627
        %v2052 = vpack.c.b16 %v1632, %v1628
        %v2053 = vpack.c.b16 %v1633, %v1629
        %v2054 = vpack.c.b16 %v1634, %v1630
        %v2055 = vpack.c.b16 %v1639, %v1635
        %v2056 = vpack.c.b16 %v1640, %v1636
        %v2057 = vpack.c.b16 %v1641, %v1637
        %v2058 = vpack.c.b16 %v1642, %v1638
        %v2059 = vpack.c.b16 %v1647, %v1643
        %v2060 = vpack.c.b16 %v1648, %v1644
        %v2061 = vpack.c.b16 %v1649, %v1645
        %v2062 = vpack.c.b16 %v1650, %v1646
        %v2063 = vpack.c.b16 %v1655, %v1651
        %v2064 = vpack.c.b16 %v1656, %v1652
        %v2065 = vpack.c.b16 %v1657, %v1653
        %v2066 = vpack.c.b16 %v1658, %v1654
        %v2067 = vpack.c.b16 %v1663, %v1659
        %v2068 = vpack.c.b16 %v1664, %v1660
        %v2069 = vpack.c.b16 %v1665, %v1661
        %v2070 = vpack.c.b16 %v1666, %v1662
        %v2071 = vpack.c.b16 %v1671, %v1667
        %v2072 = vpack.c.b16 %v1672, %v1668
        %v2073 = vpack.c.b16 %v1673, %v1669
        %v2074 = vpack.c.b16 %v1674, %v1670
        %v2075 = vpack.c.b16 %v1679, %v1675
        %v2076 = vpack.c.b16 %v1680, %v1676
        %v2077 = vpack.c.b16 %v1681, %v1677
        %v2078 = vpack.c.b16 %v1682, %v1678
        %v2079 = vpack.c.b16 %v1687, %v1683
        %v2080 = vpack.c.b16 %v1688, %v1684
        %v2081 = vpack.c.b16 %v1689, %v1685
        %v2082 = vpack.c.b16 %v1690, %v1686
        %v2083 = vpack.c.b16 %v1695, %v1691
        %v2084 = vpack.c.b16 %v1696, %v1692
        %v2085 = vpack.c.b16 %v1697, %v1693
        %v2086 = vpack.c.b16 %v1698, %v1694
        %v2087 = vpack.c.b16 %v1703, %v1699
        %v2088 = vpack.c.b16 %v1704, %v1700
        %v2089 = vpack.c.b16 %v1705, %v1701
        %v2090 = vpack.c.b16 %v1706, %v1702
        %v2091 = vpack.c.b16 %v1711, %v1707
        %v2092 = vpack.c.b16 %v1712, %v1708
        %v2093 = vpack.c.b16 %v1713, %v1709
        %v2094 = vpack.c.b16 %v1714, %v1710
        %v2095 = vpack.c.b16 %v1719, %v1715
        %v2096 = vpack.c.b16 %v1720, %v1716
        %v2097 = vpack.c.b16 %v1721, %v1717
        %v2098 = vpack.c.b16 %v1722, %v1718
        %v2099 = vpack.c.b16 %v1727, %v1723
        %v2100 = vpack.c.b16 %v1728, %v1724
        %v2101 = vpack.c.b16 %v1729, %v1725
        %v2102 = vpack.c.b16 %v1730, %v1726
        %v2103 = vpack.c.b16 %v1735, %v1731
        %v2104 = vpack.c.b16 %v1736, %v1732
        %v2105 = vpack.c.b16 %v1737, %v1733
        %v2106 = vpack.c.b16 %v1738, %v1734
        %v2107 = vpack.c.b16 %v1743, %v1739
        %v2108 = vpack.c.b16 %v1744, %v1740
        %v2109 = vpack.c.b16 %v1745, %v1741
        %v2110 = vpack.c.b16 %v1746, %v1742
        %v2111 = vpack.c.b16 %v1751, %v1747
        %v2112 = vpack.c.b16 %v1752, %v1748
        %v2113 = vpack.c.b16 %v1753, %v1749
        %v2114 = vpack.c.b16 %v1754, %v1750
        %v2115 = vpack.c.b16 %v1759, %v1755
        %v2116 = vpack.c.b16 %v1760, %v1756
        %v2117 = vpack.c.b16 %v1761, %v1757
        %v2118 = vpack.c.b16 %v1762, %v1758
        %v2119 = vpack.c.b16 %v1767, %v1763
        %v2120 = vpack.c.b16 %v1768, %v1764
        %v2121 = vpack.c.b16 %v1769, %v1765
        %v2122 = vpack.c.b16 %v1770, %v1766
        %v2123 = vpack.c.b16 %v1775, %v1771
        %v2124 = vpack.c.b16 %v1776, %v1772
        %v2125 = vpack.c.b16 %v1777, %v1773
        %v2126 = vpack.c.b16 %v1778, %v1774
        %v2127 = vpack.c.b16 %v1783, %v1779
        %v2128 = vpack.c.b16 %v1784, %v1780
        %v2129 = vpack.c.b16 %v1785, %v1781
        %v2130 = vpack.c.b16 %v1786, %v1782
        %v2131 = vpack.c.b16 %v1791, %v1787
        %v2132 = vpack.c.b16 %v1792, %v1788
        %v2133 = vpack.c.b16 %v1793, %v1789
        %v2134 = vpack.c.b16 %v1794, %v1790
        %v2135 = vpack.c.b16 %v1799, %v1795
        %v2136 = vpack.c.b16 %v1800, %v1796
        %v2137 = vpack.c.b16 %v1801, %v1797
        %v2138 = vpack.c.b16 %v1802, %v1798
        %v2139 = vpack.c.b16 %v1807, %v1803
        %v2140 = vpack.c.b16 %v1808, %v1804
        %v2141 = vpack.c.b16 %v1809, %v1805
        %v2142 = vpack.c.b16 %v1810, %v1806
        %v2143 = vpack.c.b16 %v1815, %v1811
        %v2144 = vpack.c.b16 %v1816, %v1812
        %v2145 = vpack.c.b16 %v1817, %v1813
        %v2146 = vpack.c.b16 %v1818, %v1814
        %v2147 = vpack.c.b16 %v1823, %v1819
        %v2148 = vpack.c.b16 %v1824, %v1820
        %v2149 = vpack.c.b16 %v1825, %v1821
        %v2150 = vpack.c.b16 %v1826, %v1822
        %v2151 = vpack.c.b16 %v1831, %v1827
        %v2152 = vpack.c.b16 %v1832, %v1828
        %v2153 = vpack.c.b16 %v1833, %v1829
        %v2154 = vpack.c.b16 %v1834, %v1830
        %v2155 = vpack.c.b16 %v1839, %v1835
        %v2156 = vpack.c.b16 %v1840, %v1836
        %v2157 = vpack.c.b16 %v1841, %v1837
        %v2158 = vpack.c.b16 %v1842, %v1838
        %v2159 = vpack.c.b16 %v1847, %v1843
        %v2160 = vpack.c.b16 %v1848, %v1844
        %v2161 = vpack.c.b16 %v1849, %v1845
        %v2162 = vpack.c.b16 %v1850, %v1846
        %v2163 = vpack.c.b16 %v1855, %v1851
        %v2164 = vpack.c.b16 %v1856, %v1852
        %v2165 = vpack.c.b16 %v1857, %v1853
        %v2166 = vpack.c.b16 %v1858, %v1854
        %v2167 = vpack.c.b16 %v1863, %v1859
        %v2168 = vpack.c.b16 %v1864, %v1860
        %v2169 = vpack.c.b16 %v1865, %v1861
        %v2170 = vpack.c.b16 %v1866, %v1862
        %v2171 = vpack.c.b16 %v1871, %v1867
        %v2172 = vpack.c.b16 %v1872, %v1868
        %v2173 = vpack.c.b16 %v1873, %v1869
        %v2174 = vpack.c.b16 %v1874, %v1870
        %v2175 = vpack.c.b16 %v1879, %v1875
        %v2176 = vpack.c.b16 %v1880, %v1876
        %v2177 = vpack.c.b16 %v1881, %v1877
        %v2178 = vpack.c.b16 %v1882, %v1878
        %v2179 = vpack.c.b16 %v1887, %v1883
        %v2180 = vpack.c.b16 %v1888, %v1884
        %v2181 = vpack.c.b16 %v1889, %v1885
        %v2182 = vpack.c.b16 %v1890, %v1886
        %v2183 = vpack.c.b16 %v1895, %v1891
        %v2184 = vpack.c.b16 %v1896, %v1892
        %v2185 = vpack.c.b16 %v1897, %v1893
        %v2186 = vpack.c.b16 %v1898, %v1894
        %v2187 = vpack.c.b16 %v1903, %v1899
        %v2188 = vpack.c.b16 %v1904, %v1900
        %v2189 = vpack.c.b16 %v1905, %v1901
        %v2190 = vpack.c.b16 %v1906, %v1902
        %v2191 = vpack.c.b16 %v1911, %v1907
        %v2192 = vpack.c.b16 %v1912, %v1908
        %v2193 = vpack.c.b16 %v1913, %v1909
        %v2194 = vpack.c.b16 %v1914, %v1910
        %v2195 = vpack.c.b16 %v1919, %v1915
        %v2196 = vpack.c.b16 %v1920, %v1916
        %v2197 = vpack.c.b16 %v1921, %v1917
        %v2198 = vpack.c.b16 %v1922, %v1918
        %v2199 = vpack.c.b16 %v1927, %v1923
        %v2200 = vpack.c.b16 %v1928, %v1924
        %v2201 = vpack.c.b16 %v1929, %v1925
        %v2202 = vpack.c.b16 %v1930, %v1926
        %v2203 = vpack.c.b16 %v1935, %v1931
        %v2204 = vpack.c.b16 %v1936, %v1932
        %v2205 = vpack.c.b16 %v1937, %v1933
        %v2206 = vpack.c.b16 %v1938, %v1934
        %v2207 = vpack.c.b16 %v1943, %v1939
        %v2208 = vpack.c.b16 %v1944, %v1940
        %v2209 = vpack.c.b16 %v1945, %v1941
        %v2210 = vpack.c.b16 %v1946, %v1942
        %v2211 = vpack.c.b16 %v1951, %v1947
        %v2212 = vpack.c.b16 %v1952, %v1948
        %v2213 = vpack.c.b16 %v1953, %v1949
        %v2214 = vpack.c.b16 %v1954, %v1950
        %v2215 = vpack.c.b16 %v1959, %v1955
        %v2216 = vpack.c.b16 %v1960, %v1956
        %v2217 = vpack.c.b16 %v1961, %v1957
        %v2218 = vpack.c.b16 %v1962, %v1958
        %2475 = vmatprep.subr.bf16.mxu0 %v1964
        %2476 = vmatpush1.bf16.msra.mxu0 %v1963
        %2477 = vmatprep.subr.bf16.mxu0 %v1968
        %2478 = vmatpush1.bf16.msra.mxu0 %v1967
        %2479 = vmatprep.subr.bf16.mxu0 %v1972
        %2480 = vmatpush1.bf16.msra.mxu0 %v1971
        %2481 = vmatprep.subr.bf16.mxu0 %v1976
        %2482 = vmatpush1.bf16.msra.mxu0 %v1975
        %2483 = vmatprep.subr.bf16.mxu0 %v1980
        %2484 = vmatpush1.bf16.msra.mxu0 %v1979
        %2485 = vmatprep.subr.bf16.mxu0 %v1984
        %2486 = vmatpush1.bf16.msra.mxu0 %v1983
        %2487 = vmatprep.subr.bf16.mxu0 %v1988
        %2488 = vmatpush1.bf16.msra.mxu0 %v1987
        %2489 = vmatprep.subr.bf16.mxu0 %v1992
        %2490 = vmatpush1.bf16.msra.mxu0 %v1991
        %2491 = vmatprep.subr.bf16.mxu0 %v1996
        %2492 = vmatpush1.bf16.msra.mxu0 %v1995
        %2493 = vmatprep.subr.bf16.mxu0 %v2000
        %2494 = vmatpush1.bf16.msra.mxu0 %v1999
        %2495 = vmatprep.subr.bf16.mxu0 %v2004
        %2496 = vmatpush1.bf16.msra.mxu0 %v2003
        %2497 = vmatprep.subr.bf16.mxu0 %v2008
        %2498 = vmatpush1.bf16.msra.mxu0 %v2007
        %2499 = vmatprep.subr.bf16.mxu0 %v2012
        %2500 = vmatpush1.bf16.msra.mxu0 %v2011
        %2501 = vmatprep.subr.bf16.mxu0 %v2016
        %2502 = vmatpush1.bf16.msra.mxu0 %v2015
        %2503 = vmatprep.subr.bf16.mxu0 %v2020
        %2504 = vmatpush1.bf16.msra.mxu0 %v2019
        %2505 = vmatprep.subr.bf16.mxu0 %v2024
        %2506 = vmatpush1.bf16.msra.mxu0 %v2023
        %2507 = vmatprep.mubr.bf16.mxu0 %v1068
        %2508 = vmatmul.mubr.bf16.gmra.mrb[0].mxu0 %v1067
        %v2509 = vpop.f32.mrb[0].mxu0
        %v2510 = vadd.f32 %v858, %v2509
        %v2511 = vpop.f32.mrb[0].mxu0
        %v2512 = vadd.f32 %v862, %v2511
        %v2513 = vpop.f32.mrb[0].mxu0
        %v2514 = vadd.f32 %v858, %v2513
        %v2515 = vpop.f32.mrb[0].mxu0
        %v2516 = vadd.f32 %v862, %v2515
        %2517 = vmatprep.mubr.bf16.mxu0 %v1076
        %2518 = vmatmul.mubr.bf16.gmra.mrb[0].mxu0 %v1075
        %v2519 = vpop.f32.mrb[0].mxu0
        %v2520 = vadd.f32 %v858, %v2519
        %v2521 = vpop.f32.mrb[0].mxu0
        %v2522 = vadd.f32 %v862, %v2521
        %v2523 = vpop.f32.mrb[0].mxu0
        %v2524 = vadd.f32 %v858, %v2523
        %v2525 = vpop.f32.mrb[0].mxu0
        %v2526 = vadd.f32 %v862, %v2525
        %2527 = vmatprep.mubr.bf16.mxu0 %v1084
        %2528 = vmatmul.mubr.bf16.gmra.mrb[0].mxu0 %v1083
        %v2529 = vpop.f32.mrb[0].mxu0
        %v2530 = vadd.f32 %v858, %v2529
        %v2531 = vpop.f32.mrb[0].mxu0
        %v2532 = vadd.f32 %v862, %v2531
        %v2533 = vpop.f32.mrb[0].mxu0
        %v2534 = vadd.f32 %v858, %v2533
        %v2535 = vpop.f32.mrb[0].mxu0
        %v2536 = vadd.f32 %v862, %v2535
        %2537 = vmatprep.mubr.bf16.mxu0 %v1092
        %2538 = vmatmul.mubr.bf16.gmra.mrb[0].mxu0 %v1091
        %v2539 = vpop.f32.mrb[0].mxu0
        %v2540 = vadd.f32 %v858, %v2539
        %v2541 = vpop.f32.mrb[0].mxu0
        %v2542 = vadd.f32 %v862, %v2541
        %v2543 = vpop.f32.mrb[0].mxu0
        %v2544 = vadd.f32 %v858, %v2543
        %v2545 = vpop.f32.mrb[0].mxu0
        %v2546 = vadd.f32 %v862, %v2545
        %2547 = vmatprep.mubr.bf16.mxu0 %v1100
        %2548 = vmatmul.mubr.bf16.gmra.mrb[0].mxu0 %v1099
        %v2549 = vpop.f32.mrb[0].mxu0
        %v2550 = vadd.f32 %v858, %v2549
        %v2551 = vpop.f32.mrb[0].mxu0
        %v2552 = vadd.f32 %v862, %v2551
        %v2553 = vpop.f32.mrb[0].mxu0
        %v2554 = vadd.f32 %v858, %v2553
        %v2555 = vpop.f32.mrb[0].mxu0
        %v2556 = vadd.f32 %v862, %v2555
        %2557 = vmatprep.mubr.bf16.mxu0 %v1108
        %2558 = vmatmul.mubr.bf16.gmra.mrb[0].mxu0 %v1107
        %v2559 = vpop.f32.mrb[0].mxu0
        %v2560 = vadd.f32 %v858, %v2559
        %v2561 = vpop.f32.mrb[0].mxu0
        %v2562 = vadd.f32 %v862, %v2561
        %v2563 = vpop.f32.mrb[0].mxu0
        %v2564 = vadd.f32 %v858, %v2563
        %v2565 = vpop.f32.mrb[0].mxu0
        %v2566 = vadd.f32 %v862, %v2565
        %2567 = vmatprep.mubr.bf16.mxu0 %v1116
        %2568 = vmatmul.mubr.bf16.gmra.mrb[0].mxu0 %v1115
        %v2569 = vpop.f32.mrb[0].mxu0
        %v2570 = vadd.f32 %v858, %v2569
        %v2571 = vpop.f32.mrb[0].mxu0
        %v2572 = vadd.f32 %v862, %v2571
        %v2573 = vpop.f32.mrb[0].mxu0
        %v2574 = vadd.f32 %v858, %v2573
        %v2575 = vpop.f32.mrb[0].mxu0
        %v2576 = vadd.f32 %v862, %v2575
        %2577 = vmatprep.mubr.bf16.mxu0 %v1124
        %2578 = vmatmul.mubr.bf16.gmra.mrb[0].mxu0 %v1123
        %v2579 = vpop.f32.mrb[0].mxu0
        %v2580 = vadd.f32 %v858, %v2579
        %v2581 = vpop.f32.mrb[0].mxu0
        %v2582 = vadd.f32 %v862, %v2581
        %v2583 = vpop.f32.mrb[0].mxu0
        %v2584 = vadd.f32 %v858, %v2583
        %v2585 = vpop.f32.mrb[0].mxu0
        %v2586 = vadd.f32 %v862, %v2585
        %2587 = vdwg.mxu0
        %2588 = vmatprep.subr.bf16.mxu0 %v2028
        %2589 = vmatpush1.bf16.msra.mxu0 %v2027
        %2590 = vmatprep.subr.bf16.mxu0 %v2032
        %2591 = vmatpush1.bf16.msra.mxu0 %v2031
        %2592 = vmatprep.subr.bf16.mxu0 %v2036
        %2593 = vmatpush1.bf16.msra.mxu0 %v2035
        %2594 = vmatprep.subr.bf16.mxu0 %v2040
        %2595 = vmatpush1.bf16.msra.mxu0 %v2039
        %2596 = vmatprep.subr.bf16.mxu0 %v2044
        %2597 = vmatpush1.bf16.msra.mxu0 %v2043
        %2598 = vmatprep.subr.bf16.mxu0 %v2048
        %2599 = vmatpush1.bf16.msra.mxu0 %v2047
        %2600 = vmatprep.subr.bf16.mxu0 %v2052
        %2601 = vmatpush1.bf16.msra.mxu0 %v2051
        %2602 = vmatprep.subr.bf16.mxu0 %v2056
        %2603 = vmatpush1.bf16.msra.mxu0 %v2055
        %2604 = vmatprep.subr.bf16.mxu0 %v2060
        %2605 = vmatpush1.bf16.msra.mxu0 %v2059
        %2606 = vmatprep.subr.bf16.mxu0 %v2064
        %2607 = vmatpush1.bf16.msra.mxu0 %v2063
        %2608 = vmatprep.subr.bf16.mxu0 %v2068
        %2609 = vmatpush1.bf16.msra.mxu0 %v2067
        %2610 = vmatprep.subr.bf16.mxu0 %v2072
        %2611 = vmatpush1.bf16.msra.mxu0 %v2071
        %2612 = vmatprep.subr.bf16.mxu0 %v2076
        %2613 = vmatpush1.bf16.msra.mxu0 %v2075
        %2614 = vmatprep.subr.bf16.mxu0 %v2080
        %2615 = vmatpush1.bf16.msra.mxu0 %v2079
        %2616 = vmatprep.subr.bf16.mxu0 %v2084
        %2617 = vmatpush1.bf16.msra.mxu0 %v2083
        %2618 = vmatprep.subr.bf16.mxu0 %v2088
        %2619 = vmatpush1.bf16.msra.mxu0 %v2087
        %2620 = vmatprep.mubr.bf16.mxu0 %v1070
        %2621 = vmatmul.mubr.bf16.gmra.mrb[0].mxu0 %v1069
        %v2622 = vpop.f32.mrb[0].mxu0
        %v2623 = vadd.f32 %v2510, %v2622
        %v2624 = vpop.f32.mrb[0].mxu0
        %v2625 = vadd.f32 %v2512, %v2624
        %v2626 = vpop.f32.mrb[0].mxu0
        %v2627 = vadd.f32 %v2514, %v2626
        %v2628 = vpop.f32.mrb[0].mxu0
        %v2629 = vadd.f32 %v2516, %v2628
        %2630 = vmatprep.mubr.bf16.mxu0 %v1078
        %2631 = vmatmul.mubr.bf16.gmra.mrb[0].mxu0 %v1077
        %v2632 = vpop.f32.mrb[0].mxu0
        %v2633 = vadd.f32 %v2520, %v2632
        %v2634 = vpop.f32.mrb[0].mxu0
        %v2635 = vadd.f32 %v2522, %v2634
        %v2636 = vpop.f32.mrb[0].mxu0
        %v2637 = vadd.f32 %v2524, %v2636
        %v2638 = vpop.f32.mrb[0].mxu0
        %v2639 = vadd.f32 %v2526, %v2638
        %2640 = vmatprep.mubr.bf16.mxu0 %v1086
        %2641 = vmatmul.mubr.bf16.gmra.mrb[0].mxu0 %v1085
        %v2642 = vpop.f32.mrb[0].mxu0
        %v2643 = vadd.f32 %v2530, %v2642
        %v2644 = vpop.f32.mrb[0].mxu0
        %v2645 = vadd.f32 %v2532, %v2644
        %v2646 = vpop.f32.mrb[0].mxu0
        %v2647 = vadd.f32 %v2534, %v2646
        %v2648 = vpop.f32.mrb[0].mxu0
        %v2649 = vadd.f32 %v2536, %v2648
        %2650 = vmatprep.mubr.bf16.mxu0 %v1094
        %2651 = vmatmul.mubr.bf16.gmra.mrb[0].mxu0 %v1093
        %v2652 = vpop.f32.mrb[0].mxu0
        %v2653 = vadd.f32 %v2540, %v2652
        %v2654 = vpop.f32.mrb[0].mxu0
        %v2655 = vadd.f32 %v2542, %v2654
        %v2656 = vpop.f32.mrb[0].mxu0
        %v2657 = vadd.f32 %v2544, %v2656
        %v2658 = vpop.f32.mrb[0].mxu0
        %v2659 = vadd.f32 %v2546, %v2658
        %2660 = vmatprep.mubr.bf16.mxu0 %v1102
        %2661 = vmatmul.mubr.bf16.gmra.mrb[0].mxu0 %v1101
        %v2662 = vpop.f32.mrb[0].mxu0
        %v2663 = vadd.f32 %v2550, %v2662
        %v2664 = vpop.f32.mrb[0].mxu0
        %v2665 = vadd.f32 %v2552, %v2664
        %v2666 = vpop.f32.mrb[0].mxu0
        %v2667 = vadd.f32 %v2554, %v2666
        %v2668 = vpop.f32.mrb[0].mxu0
        %v2669 = vadd.f32 %v2556, %v2668
        %2670 = vmatprep.mubr.bf16.mxu0 %v1110
        %2671 = vmatmul.mubr.bf16.gmra.mrb[0].mxu0 %v1109
        %v2672 = vpop.f32.mrb[0].mxu0
        %v2673 = vadd.f32 %v2560, %v2672
        %v2674 = vpop.f32.mrb[0].mxu0
        %v2675 = vadd.f32 %v2562, %v2674
        %v2676 = vpop.f32.mrb[0].mxu0
        %v2677 = vadd.f32 %v2564, %v2676
        %v2678 = vpop.f32.mrb[0].mxu0
        %v2679 = vadd.f32 %v2566, %v2678
        %2680 = vmatprep.mubr.bf16.mxu0 %v1118
        %2681 = vmatmul.mubr.bf16.gmra.mrb[0].mxu0 %v1117
        %v2682 = vpop.f32.mrb[0].mxu0
        %v2683 = vadd.f32 %v2570, %v2682
        %v2684 = vpop.f32.mrb[0].mxu0
        %v2685 = vadd.f32 %v2572, %v2684
        %v2686 = vpop.f32.mrb[0].mxu0
        %v2687 = vadd.f32 %v2574, %v2686
        %v2688 = vpop.f32.mrb[0].mxu0
        %v2689 = vadd.f32 %v2576, %v2688
        %2690 = vmatprep.mubr.bf16.mxu0 %v1126
        %2691 = vmatmul.mubr.bf16.gmra.mrb[0].mxu0 %v1125
        %v2692 = vpop.f32.mrb[0].mxu0
        %v2693 = vadd.f32 %v2580, %v2692
        %v2694 = vpop.f32.mrb[0].mxu0
        %v2695 = vadd.f32 %v2582, %v2694
        %v2696 = vpop.f32.mrb[0].mxu0
        %v2697 = vadd.f32 %v2584, %v2696
        %v2698 = vpop.f32.mrb[0].mxu0
        %v2699 = vadd.f32 %v2586, %v2698
        %2700 = vdwg.mxu0
        %2701 = vmatprep.subr.bf16.mxu0 %v2092
        %2702 = vmatpush1.bf16.msra.mxu0 %v2091
        %2703 = vmatprep.subr.bf16.mxu0 %v2096
        %2704 = vmatpush1.bf16.msra.mxu0 %v2095
        %2705 = vmatprep.subr.bf16.mxu0 %v2100
        %2706 = vmatpush1.bf16.msra.mxu0 %v2099
        %2707 = vmatprep.subr.bf16.mxu0 %v2104
        %2708 = vmatpush1.bf16.msra.mxu0 %v2103
        %2709 = vmatprep.subr.bf16.mxu0 %v2108
        %2710 = vmatpush1.bf16.msra.mxu0 %v2107
        %2711 = vmatprep.subr.bf16.mxu0 %v2112
        %2712 = vmatpush1.bf16.msra.mxu0 %v2111
        %2713 = vmatprep.subr.bf16.mxu0 %v2116
        %2714 = vmatpush1.bf16.msra.mxu0 %v2115
        %2715 = vmatprep.subr.bf16.mxu0 %v2120
        %2716 = vmatpush1.bf16.msra.mxu0 %v2119
        %2717 = vmatprep.subr.bf16.mxu0 %v2124
        %2718 = vmatpush1.bf16.msra.mxu0 %v2123
        %2719 = vmatprep.subr.bf16.mxu0 %v2128
        %2720 = vmatpush1.bf16.msra.mxu0 %v2127
        %2721 = vmatprep.subr.bf16.mxu0 %v2132
        %2722 = vmatpush1.bf16.msra.mxu0 %v2131
        %2723 = vmatprep.subr.bf16.mxu0 %v2136
        %2724 = vmatpush1.bf16.msra.mxu0 %v2135
        %2725 = vmatprep.subr.bf16.mxu0 %v2140
        %2726 = vmatpush1.bf16.msra.mxu0 %v2139
        %2727 = vmatprep.subr.bf16.mxu0 %v2144
        %2728 = vmatpush1.bf16.msra.mxu0 %v2143
        %2729 = vmatprep.subr.bf16.mxu0 %v2148
        %2730 = vmatpush1.bf16.msra.mxu0 %v2147
        %2731 = vmatprep.subr.bf16.mxu0 %v2152
        %2732 = vmatpush1.bf16.msra.mxu0 %v2151
        %2733 = vmatprep.mubr.bf16.mxu0 %v1072
        %2734 = vmatmul.mubr.bf16.gmra.mrb[0].mxu0 %v1071
        %v2735 = vpop.f32.mrb[0].mxu0
        %v2736 = vadd.f32 %v2623, %v2735
        %v2737 = vpop.f32.mrb[0].mxu0
        %v2738 = vadd.f32 %v2625, %v2737
        %v2739 = vpop.f32.mrb[0].mxu0
        %v2740 = vadd.f32 %v2627, %v2739
        %v2741 = vpop.f32.mrb[0].mxu0
        %v2742 = vadd.f32 %v2629, %v2741
        %2743 = vmatprep.mubr.bf16.mxu0 %v1080
        %2744 = vmatmul.mubr.bf16.gmra.mrb[0].mxu0 %v1079
        %v2745 = vpop.f32.mrb[0].mxu0
        %v2746 = vadd.f32 %v2633, %v2745
        %v2747 = vpop.f32.mrb[0].mxu0
        %v2748 = vadd.f32 %v2635, %v2747
        %v2749 = vpop.f32.mrb[0].mxu0
        %v2750 = vadd.f32 %v2637, %v2749
        %v2751 = vpop.f32.mrb[0].mxu0
        %v2752 = vadd.f32 %v2639, %v2751
        %2753 = vmatprep.mubr.bf16.mxu0 %v1088
        %2754 = vmatmul.mubr.bf16.gmra.mrb[0].mxu0 %v1087
        %v2755 = vpop.f32.mrb[0].mxu0
        %v2756 = vadd.f32 %v2643, %v2755
        %v2757 = vpop.f32.mrb[0].mxu0
        %v2758 = vadd.f32 %v2645, %v2757
        %v2759 = vpop.f32.mrb[0].mxu0
        %v2760 = vadd.f32 %v2647, %v2759
        %v2761 = vpop.f32.mrb[0].mxu0
        %v2762 = vadd.f32 %v2649, %v2761
        %2763 = vmatprep.mubr.bf16.mxu0 %v1096
        %2764 = vmatmul.mubr.bf16.gmra.mrb[0].mxu0 %v1095
        %v2765 = vpop.f32.mrb[0].mxu0
        %v2766 = vadd.f32 %v2653, %v2765
        %v2767 = vpop.f32.mrb[0].mxu0
        %v2768 = vadd.f32 %v2655, %v2767
        %v2769 = vpop.f32.mrb[0].mxu0
        %v2770 = vadd.f32 %v2657, %v2769
        %v2771 = vpop.f32.mrb[0].mxu0
        %v2772 = vadd.f32 %v2659, %v2771
        %2773 = vmatprep.mubr.bf16.mxu0 %v1104
        %2774 = vmatmul.mubr.bf16.gmra.mrb[0].mxu0 %v1103
        %v2775 = vpop.f32.mrb[0].mxu0
        %v2776 = vadd.f32 %v2663, %v2775
        %v2777 = vpop.f32.mrb[0].mxu0
        %v2778 = vadd.f32 %v2665, %v2777
        %v2779 = vpop.f32.mrb[0].mxu0
        %v2780 = vadd.f32 %v2667, %v2779
        %v2781 = vpop.f32.mrb[0].mxu0
        %v2782 = vadd.f32 %v2669, %v2781
        %2783 = vmatprep.mubr.bf16.mxu0 %v1112
        %2784 = vmatmul.mubr.bf16.gmra.mrb[0].mxu0 %v1111
        %v2785 = vpop.f32.mrb[0].mxu0
        %v2786 = vadd.f32 %v2673, %v2785
        %v2787 = vpop.f32.mrb[0].mxu0
        %v2788 = vadd.f32 %v2675, %v2787
        %v2789 = vpop.f32.mrb[0].mxu0
        %v2790 = vadd.f32 %v2677, %v2789
        %v2791 = vpop.f32.mrb[0].mxu0
        %v2792 = vadd.f32 %v2679, %v2791
        %2793 = vmatprep.mubr.bf16.mxu0 %v1120
        %2794 = vmatmul.mubr.bf16.gmra.mrb[0].mxu0 %v1119
        %v2795 = vpop.f32.mrb[0].mxu0
        %v2796 = vadd.f32 %v2683, %v2795
        %v2797 = vpop.f32.mrb[0].mxu0
        %v2798 = vadd.f32 %v2685, %v2797
        %v2799 = vpop.f32.mrb[0].mxu0
        %v2800 = vadd.f32 %v2687, %v2799
        %v2801 = vpop.f32.mrb[0].mxu0
        %v2802 = vadd.f32 %v2689, %v2801
        %2803 = vmatprep.mubr.bf16.mxu0 %v1128
        %2804 = vmatmul.mubr.bf16.gmra.mrb[0].mxu0 %v1127
        %v2805 = vpop.f32.mrb[0].mxu0
        %v2806 = vadd.f32 %v2693, %v2805
        %v2807 = vpop.f32.mrb[0].mxu0
        %v2808 = vadd.f32 %v2695, %v2807
        %v2809 = vpop.f32.mrb[0].mxu0
        %v2810 = vadd.f32 %v2697, %v2809
        %v2811 = vpop.f32.mrb[0].mxu0
        %v2812 = vadd.f32 %v2699, %v2811
        %2813 = vdwg.mxu0
        %2814 = vmatprep.subr.bf16.mxu0 %v2156
        %2815 = vmatpush1.bf16.msra.mxu0 %v2155
        %2816 = vmatprep.subr.bf16.mxu0 %v2160
        %2817 = vmatpush1.bf16.msra.mxu0 %v2159
        %2818 = vmatprep.subr.bf16.mxu0 %v2164
        %2819 = vmatpush1.bf16.msra.mxu0 %v2163
        %2820 = vmatprep.subr.bf16.mxu0 %v2168
        %2821 = vmatpush1.bf16.msra.mxu0 %v2167
        %2822 = vmatprep.subr.bf16.mxu0 %v2172
        %2823 = vmatpush1.bf16.msra.mxu0 %v2171
        %2824 = vmatprep.subr.bf16.mxu0 %v2176
        %2825 = vmatpush1.bf16.msra.mxu0 %v2175
        %2826 = vmatprep.subr.bf16.mxu0 %v2180
        %2827 = vmatpush1.bf16.msra.mxu0 %v2179
        %2828 = vmatprep.subr.bf16.mxu0 %v2184
        %2829 = vmatpush1.bf16.msra.mxu0 %v2183
        %2830 = vmatprep.subr.bf16.mxu0 %v2188
        %2831 = vmatpush1.bf16.msra.mxu0 %v2187
        %2832 = vmatprep.subr.bf16.mxu0 %v2192
        %2833 = vmatpush1.bf16.msra.mxu0 %v2191
        %2834 = vmatprep.subr.bf16.mxu0 %v2196
        %2835 = vmatpush1.bf16.msra.mxu0 %v2195
        %2836 = vmatprep.subr.bf16.mxu0 %v2200
        %2837 = vmatpush1.bf16.msra.mxu0 %v2199
        %2838 = vmatprep.subr.bf16.mxu0 %v2204
        %2839 = vmatpush1.bf16.msra.mxu0 %v2203
        %2840 = vmatprep.subr.bf16.mxu0 %v2208
        %2841 = vmatpush1.bf16.msra.mxu0 %v2207
        %2842 = vmatprep.subr.bf16.mxu0 %v2212
        %2843 = vmatpush1.bf16.msra.mxu0 %v2211
        %2844 = vmatprep.subr.bf16.mxu0 %v2216
        %2845 = vmatpush1.bf16.msra.mxu0 %v2215
        %2846 = vmatprep.mubr.bf16.mxu0 %v1074
        %2847 = vmatmul.mubr.bf16.gmra.mrb[0].mxu0 %v1073
        %v2848 = vpop.f32.mrb[0].mxu0
        %v2849 = vadd.f32 %v2736, %v2848
        %v2850 = vpop.f32.mrb[0].mxu0
        %v2851 = vadd.f32 %v2738, %v2850
        %v2852 = vpop.f32.mrb[0].mxu0
        %v2853 = vadd.f32 %v2740, %v2852
        %v2854 = vpop.f32.mrb[0].mxu0
        %v2855 = vadd.f32 %v2742, %v2854
        %2856 = vmatprep.mubr.bf16.mxu0 %v1082
        %2857 = vmatmul.mubr.bf16.gmra.mrb[0].mxu0 %v1081
        %v2858 = vpop.f32.mrb[0].mxu0
        %v2859 = vadd.f32 %v2746, %v2858
        %v2860 = vpop.f32.mrb[0].mxu0
        %v2861 = vadd.f32 %v2748, %v2860
        %v2862 = vpop.f32.mrb[0].mxu0
        %v2863 = vadd.f32 %v2750, %v2862
        %v2864 = vpop.f32.mrb[0].mxu0
        %v2865 = vadd.f32 %v2752, %v2864
        %2866 = vmatprep.mubr.bf16.mxu0 %v1090
        %2867 = vmatmul.mubr.bf16.gmra.mrb[0].mxu0 %v1089
        %v2868 = vpop.f32.mrb[0].mxu0
        %v2869 = vadd.f32 %v2756, %v2868
        %v2870 = vpop.f32.mrb[0].mxu0
        %v2871 = vadd.f32 %v2758, %v2870
        %v2872 = vpop.f32.mrb[0].mxu0
        %v2873 = vadd.f32 %v2760, %v2872
        %v2874 = vpop.f32.mrb[0].mxu0
        %v2875 = vadd.f32 %v2762, %v2874
        %2876 = vmatprep.mubr.bf16.mxu0 %v1098
        %2877 = vmatmul.mubr.bf16.gmra.mrb[0].mxu0 %v1097
        %v2878 = vpop.f32.mrb[0].mxu0
        %v2879 = vadd.f32 %v2766, %v2878
        %v2880 = vpop.f32.mrb[0].mxu0
        %v2881 = vadd.f32 %v2768, %v2880
        %v2882 = vpop.f32.mrb[0].mxu0
        %v2883 = vadd.f32 %v2770, %v2882
        %v2884 = vpop.f32.mrb[0].mxu0
        %v2885 = vadd.f32 %v2772, %v2884
        %2886 = vmatprep.mubr.bf16.mxu0 %v1106
        %2887 = vmatmul.mubr.bf16.gmra.mrb[0].mxu0 %v1105
        %v2888 = vpop.f32.mrb[0].mxu0
        %v2889 = vadd.f32 %v2776, %v2888
        %v2890 = vpop.f32.mrb[0].mxu0
        %v2891 = vadd.f32 %v2778, %v2890
        %v2892 = vpop.f32.mrb[0].mxu0
        %v2893 = vadd.f32 %v2780, %v2892
        %v2894 = vpop.f32.mrb[0].mxu0
        %v2895 = vadd.f32 %v2782, %v2894
        %2896 = vmatprep.mubr.bf16.mxu0 %v1114
        %2897 = vmatmul.mubr.bf16.gmra.mrb[0].mxu0 %v1113
        %v2898 = vpop.f32.mrb[0].mxu0
        %v2899 = vadd.f32 %v2786, %v2898
        %v2900 = vpop.f32.mrb[0].mxu0
        %v2901 = vadd.f32 %v2788, %v2900
        %v2902 = vpop.f32.mrb[0].mxu0
        %v2903 = vadd.f32 %v2790, %v2902
        %v2904 = vpop.f32.mrb[0].mxu0
        %v2905 = vadd.f32 %v2792, %v2904
        %2906 = vmatprep.mubr.bf16.mxu0 %v1122
        %2907 = vmatmul.mubr.bf16.gmra.mrb[0].mxu0 %v1121
        %v2908 = vpop.f32.mrb[0].mxu0
        %v2909 = vadd.f32 %v2796, %v2908
        %v2910 = vpop.f32.mrb[0].mxu0
        %v2911 = vadd.f32 %v2798, %v2910
        %v2912 = vpop.f32.mrb[0].mxu0
        %v2913 = vadd.f32 %v2800, %v2912
        %v2914 = vpop.f32.mrb[0].mxu0
        %v2915 = vadd.f32 %v2802, %v2914
        %2916 = vmatprep.mubr.bf16.mxu0 %v1130
        %2917 = vmatmul.mubr.bf16.gmra.mrb[0].mxu0 %v1129
        %v2918 = vpop.f32.mrb[0].mxu0
        %v2919 = vadd.f32 %v2806, %v2918
        %v2920 = vpop.f32.mrb[0].mxu0
        %v2921 = vadd.f32 %v2808, %v2920
        %v2922 = vpop.f32.mrb[0].mxu0
        %v2923 = vadd.f32 %v2810, %v2922
        %v2924 = vpop.f32.mrb[0].mxu0
        %v2925 = vadd.f32 %v2812, %v2924
        %2926 = vdwg.mxu0
        %2927 = vmatprep.subr.bf16.mxu0 %v1966
        %2928 = vmatpush1.bf16.msra.mxu0 %v1965
        %2929 = vmatprep.subr.bf16.mxu0 %v1970
        %2930 = vmatpush1.bf16.msra.mxu0 %v1969
        %2931 = vmatprep.subr.bf16.mxu0 %v1974
        %2932 = vmatpush1.bf16.msra.mxu0 %v1973
        %2933 = vmatprep.subr.bf16.mxu0 %v1978
        %2934 = vmatpush1.bf16.msra.mxu0 %v1977
        %2935 = vmatprep.subr.bf16.mxu0 %v1982
        %2936 = vmatpush1.bf16.msra.mxu0 %v1981
        %2937 = vmatprep.subr.bf16.mxu0 %v1986
        %2938 = vmatpush1.bf16.msra.mxu0 %v1985
        %2939 = vmatprep.subr.bf16.mxu0 %v1990
        %2940 = vmatpush1.bf16.msra.mxu0 %v1989
        %2941 = vmatprep.subr.bf16.mxu0 %v1994
        %2942 = vmatpush1.bf16.msra.mxu0 %v1993
        %2943 = vmatprep.subr.bf16.mxu0 %v1998
        %2944 = vmatpush1.bf16.msra.mxu0 %v1997
        %2945 = vmatprep.subr.bf16.mxu0 %v2002
        %2946 = vmatpush1.bf16.msra.mxu0 %v2001
        %2947 = vmatprep.subr.bf16.mxu0 %v2006
        %2948 = vmatpush1.bf16.msra.mxu0 %v2005
        %2949 = vmatprep.subr.bf16.mxu0 %v2010
        %2950 = vmatpush1.bf16.msra.mxu0 %v2009
        %2951 = vmatprep.subr.bf16.mxu0 %v2014
        %2952 = vmatpush1.bf16.msra.mxu0 %v2013
        %2953 = vmatprep.subr.bf16.mxu0 %v2018
        %2954 = vmatpush1.bf16.msra.mxu0 %v2017
        %2955 = vmatprep.subr.bf16.mxu0 %v2022
        %2956 = vmatpush1.bf16.msra.mxu0 %v2021
        %2957 = vmatprep.subr.bf16.mxu0 %v2026
        %2958 = vmatpush1.bf16.msra.mxu0 %v2025
        %2959 = vmatprep.mubr.bf16.mxu0 %v1068
        %2960 = vmatmul.mubr.bf16.gmra.mrb[0].mxu0 %v1067
        %v2961 = vpop.f32.mrb[0].mxu0
        %v2962 = vadd.f32 %v866, %v2961
        %v2963 = vpop.f32.mrb[0].mxu0
        %v2964 = vadd.f32 %v870, %v2963
        %v2965 = vpop.f32.mrb[0].mxu0
        %v2966 = vadd.f32 %v866, %v2965
        %v2967 = vpop.f32.mrb[0].mxu0
        %v2968 = vadd.f32 %v870, %v2967
        %2969 = vmatprep.mubr.bf16.mxu0 %v1076
        %2970 = vmatmul.mubr.bf16.gmra.mrb[0].mxu0 %v1075
        %v2971 = vpop.f32.mrb[0].mxu0
        %v2972 = vadd.f32 %v866, %v2971
        %v2973 = vpop.f32.mrb[0].mxu0
        %v2974 = vadd.f32 %v870, %v2973
        %v2975 = vpop.f32.mrb[0].mxu0
        %v2976 = vadd.f32 %v866, %v2975
        %v2977 = vpop.f32.mrb[0].mxu0
        %v2978 = vadd.f32 %v870, %v2977
        %2979 = vmatprep.mubr.bf16.mxu0 %v1084
        %2980 = vmatmul.mubr.bf16.gmra.mrb[0].mxu0 %v1083
        %v2981 = vpop.f32.mrb[0].mxu0
        %v2982 = vadd.f32 %v866, %v2981
        %v2983 = vpop.f32.mrb[0].mxu0
        %v2984 = vadd.f32 %v870, %v2983
        %v2985 = vpop.f32.mrb[0].mxu0
        %v2986 = vadd.f32 %v866, %v2985
        %v2987 = vpop.f32.mrb[0].mxu0
        %v2988 = vadd.f32 %v870, %v2987
        %2989 = vmatprep.mubr.bf16.mxu0 %v1092
        %2990 = vmatmul.mubr.bf16.gmra.mrb[0].mxu0 %v1091
        %v2991 = vpop.f32.mrb[0].mxu0
        %v2992 = vadd.f32 %v866, %v2991
        %v2993 = vpop.f32.mrb[0].mxu0
        %v2994 = vadd.f32 %v870, %v2993
        %v2995 = vpop.f32.mrb[0].mxu0
        %v2996 = vadd.f32 %v866, %v2995
        %v2997 = vpop.f32.mrb[0].mxu0
        %v2998 = vadd.f32 %v870, %v2997
        %2999 = vmatprep.mubr.bf16.mxu0 %v1100
        %3000 = vmatmul.mubr.bf16.gmra.mrb[0].mxu0 %v1099
        %v3001 = vpop.f32.mrb[0].mxu0
        %v3002 = vadd.f32 %v866, %v3001
        %v3003 = vpop.f32.mrb[0].mxu0
        %v3004 = vadd.f32 %v870, %v3003
        %v3005 = vpop.f32.mrb[0].mxu0
        %v3006 = vadd.f32 %v866, %v3005
        %v3007 = vpop.f32.mrb[0].mxu0
        %v3008 = vadd.f32 %v870, %v3007
        %3009 = vmatprep.mubr.bf16.mxu0 %v1108
        %3010 = vmatmul.mubr.bf16.gmra.mrb[0].mxu0 %v1107
        %v3011 = vpop.f32.mrb[0].mxu0
        %v3012 = vadd.f32 %v866, %v3011
        %v3013 = vpop.f32.mrb[0].mxu0
        %v3014 = vadd.f32 %v870, %v3013
        %v3015 = vpop.f32.mrb[0].mxu0
        %v3016 = vadd.f32 %v866, %v3015
        %v3017 = vpop.f32.mrb[0].mxu0
        %v3018 = vadd.f32 %v870, %v3017
        %3019 = vmatprep.mubr.bf16.mxu0 %v1116
        %3020 = vmatmul.mubr.bf16.gmra.mrb[0].mxu0 %v1115
        %v3021 = vpop.f32.mrb[0].mxu0
        %v3022 = vadd.f32 %v866, %v3021
        %v3023 = vpop.f32.mrb[0].mxu0
        %v3024 = vadd.f32 %v870, %v3023
        %v3025 = vpop.f32.mrb[0].mxu0
        %v3026 = vadd.f32 %v866, %v3025
        %v3027 = vpop.f32.mrb[0].mxu0
        %v3028 = vadd.f32 %v870, %v3027
        %3029 = vmatprep.mubr.bf16.mxu0 %v1124
        %3030 = vmatmul.mubr.bf16.gmra.mrb[0].mxu0 %v1123
        %v3031 = vpop.f32.mrb[0].mxu0
        %v3032 = vadd.f32 %v866, %v3031
        %v3033 = vpop.f32.mrb[0].mxu0
        %v3034 = vadd.f32 %v870, %v3033
        %v3035 = vpop.f32.mrb[0].mxu0
        %v3036 = vadd.f32 %v866, %v3035
        %v3037 = vpop.f32.mrb[0].mxu0
        %v3038 = vadd.f32 %v870, %v3037
        %3039 = vdwg.mxu0
        %3040 = vmatprep.subr.bf16.mxu0 %v2030
        %3041 = vmatpush1.bf16.msra.mxu0 %v2029
        %3042 = vmatprep.subr.bf16.mxu0 %v2034
        %3043 = vmatpush1.bf16.msra.mxu0 %v2033
        %3044 = vmatprep.subr.bf16.mxu0 %v2038
        %3045 = vmatpush1.bf16.msra.mxu0 %v2037
        %3046 = vmatprep.subr.bf16.mxu0 %v2042
        %3047 = vmatpush1.bf16.msra.mxu0 %v2041
        %3048 = vmatprep.subr.bf16.mxu0 %v2046
        %3049 = vmatpush1.bf16.msra.mxu0 %v2045
        %3050 = vmatprep.subr.bf16.mxu0 %v2050
        %3051 = vmatpush1.bf16.msra.mxu0 %v2049
        %3052 = vmatprep.subr.bf16.mxu0 %v2054
        %3053 = vmatpush1.bf16.msra.mxu0 %v2053
        %3054 = vmatprep.subr.bf16.mxu0 %v2058
        %3055 = vmatpush1.bf16.msra.mxu0 %v2057
        %3056 = vmatprep.subr.bf16.mxu0 %v2062
        %3057 = vmatpush1.bf16.msra.mxu0 %v2061
        %3058 = vmatprep.subr.bf16.mxu0 %v2066
        %3059 = vmatpush1.bf16.msra.mxu0 %v2065
        %3060 = vmatprep.subr.bf16.mxu0 %v2070
        %3061 = vmatpush1.bf16.msra.mxu0 %v2069
        %3062 = vmatprep.subr.bf16.mxu0 %v2074
        %3063 = vmatpush1.bf16.msra.mxu0 %v2073
        %3064 = vmatprep.subr.bf16.mxu0 %v2078
        %3065 = vmatpush1.bf16.msra.mxu0 %v2077
        %3066 = vmatprep.subr.bf16.mxu0 %v2082
        %3067 = vmatpush1.bf16.msra.mxu0 %v2081
        %3068 = vmatprep.subr.bf16.mxu0 %v2086
        %3069 = vmatpush1.bf16.msra.mxu0 %v2085
        %3070 = vmatprep.subr.bf16.mxu0 %v2090
        %3071 = vmatpush1.bf16.msra.mxu0 %v2089
        %3072 = vmatprep.mubr.bf16.mxu0 %v1070
        %3073 = vmatmul.mubr.bf16.gmra.mrb[0].mxu0 %v1069
        %v3074 = vpop.f32.mrb[0].mxu0
        %v3075 = vadd.f32 %v2962, %v3074
        %v3076 = vpop.f32.mrb[0].mxu0
        %v3077 = vadd.f32 %v2964, %v3076
        %v3078 = vpop.f32.mrb[0].mxu0
        %v3079 = vadd.f32 %v2966, %v3078
        %v3080 = vpop.f32.mrb[0].mxu0
        %v3081 = vadd.f32 %v2968, %v3080
        %3082 = vmatprep.mubr.bf16.mxu0 %v1078
        %3083 = vmatmul.mubr.bf16.gmra.mrb[0].mxu0 %v1077
        %v3084 = vpop.f32.mrb[0].mxu0
        %v3085 = vadd.f32 %v2972, %v3084
        %v3086 = vpop.f32.mrb[0].mxu0
        %v3087 = vadd.f32 %v2974, %v3086
        %v3088 = vpop.f32.mrb[0].mxu0
        %v3089 = vadd.f32 %v2976, %v3088
        %v3090 = vpop.f32.mrb[0].mxu0
        %v3091 = vadd.f32 %v2978, %v3090
        %3092 = vmatprep.mubr.bf16.mxu0 %v1086
        %3093 = vmatmul.mubr.bf16.gmra.mrb[0].mxu0 %v1085
        %v3094 = vpop.f32.mrb[0].mxu0
        %v3095 = vadd.f32 %v2982, %v3094
        %v3096 = vpop.f32.mrb[0].mxu0
        %v3097 = vadd.f32 %v2984, %v3096
        %v3098 = vpop.f32.mrb[0].mxu0
        %v3099 = vadd.f32 %v2986, %v3098
        %v3100 = vpop.f32.mrb[0].mxu0
        %v3101 = vadd.f32 %v2988, %v3100
        %3102 = vmatprep.mubr.bf16.mxu0 %v1094
        %3103 = vmatmul.mubr.bf16.gmra.mrb[0].mxu0 %v1093
        %v3104 = vpop.f32.mrb[0].mxu0
        %v3105 = vadd.f32 %v2992, %v3104
        %v3106 = vpop.f32.mrb[0].mxu0
        %v3107 = vadd.f32 %v2994, %v3106
        %v3108 = vpop.f32.mrb[0].mxu0
        %v3109 = vadd.f32 %v2996, %v3108
        %v3110 = vpop.f32.mrb[0].mxu0
        %v3111 = vadd.f32 %v2998, %v3110
        %3112 = vmatprep.mubr.bf16.mxu0 %v1102
        %3113 = vmatmul.mubr.bf16.gmra.mrb[0].mxu0 %v1101
        %v3114 = vpop.f32.mrb[0].mxu0
        %v3115 = vadd.f32 %v3002, %v3114
        %v3116 = vpop.f32.mrb[0].mxu0
        %v3117 = vadd.f32 %v3004, %v3116
        %v3118 = vpop.f32.mrb[0].mxu0
        %v3119 = vadd.f32 %v3006, %v3118
        %v3120 = vpop.f32.mrb[0].mxu0
        %v3121 = vadd.f32 %v3008, %v3120
        %3122 = vmatprep.mubr.bf16.mxu0 %v1110
        %3123 = vmatmul.mubr.bf16.gmra.mrb[0].mxu0 %v1109
        %v3124 = vpop.f32.mrb[0].mxu0
        %v3125 = vadd.f32 %v3012, %v3124
        %v3126 = vpop.f32.mrb[0].mxu0
        %v3127 = vadd.f32 %v3014, %v3126
        %v3128 = vpop.f32.mrb[0].mxu0
        %v3129 = vadd.f32 %v3016, %v3128
        %v3130 = vpop.f32.mrb[0].mxu0
        %v3131 = vadd.f32 %v3018, %v3130
        %3132 = vmatprep.mubr.bf16.mxu0 %v1118
        %3133 = vmatmul.mubr.bf16.gmra.mrb[0].mxu0 %v1117
        %v3134 = vpop.f32.mrb[0].mxu0
        %v3135 = vadd.f32 %v3022, %v3134
        %v3136 = vpop.f32.mrb[0].mxu0
        %v3137 = vadd.f32 %v3024, %v3136
        %v3138 = vpop.f32.mrb[0].mxu0
        %v3139 = vadd.f32 %v3026, %v3138
        %v3140 = vpop.f32.mrb[0].mxu0
        %v3141 = vadd.f32 %v3028, %v3140
        %3142 = vmatprep.mubr.bf16.mxu0 %v1126
        %3143 = vmatmul.mubr.bf16.gmra.mrb[0].mxu0 %v1125
        %v3144 = vpop.f32.mrb[0].mxu0
        %v3145 = vadd.f32 %v3032, %v3144
        %v3146 = vpop.f32.mrb[0].mxu0
        %v3147 = vadd.f32 %v3034, %v3146
        %v3148 = vpop.f32.mrb[0].mxu0
        %v3149 = vadd.f32 %v3036, %v3148
        %v3150 = vpop.f32.mrb[0].mxu0
        %v3151 = vadd.f32 %v3038, %v3150
        %3152 = vdwg.mxu0
        %3153 = vmatprep.subr.bf16.mxu0 %v2094
        %3154 = vmatpush1.bf16.msra.mxu0 %v2093
        %3155 = vmatprep.subr.bf16.mxu0 %v2098
        %3156 = vmatpush1.bf16.msra.mxu0 %v2097
        %3157 = vmatprep.subr.bf16.mxu0 %v2102
        %3158 = vmatpush1.bf16.msra.mxu0 %v2101
        %3159 = vmatprep.subr.bf16.mxu0 %v2106
        %3160 = vmatpush1.bf16.msra.mxu0 %v2105
        %3161 = vmatprep.subr.bf16.mxu0 %v2110
        %3162 = vmatpush1.bf16.msra.mxu0 %v2109
        %3163 = vmatprep.subr.bf16.mxu0 %v2114
        %3164 = vmatpush1.bf16.msra.mxu0 %v2113
        %3165 = vmatprep.subr.bf16.mxu0 %v2118
        %3166 = vmatpush1.bf16.msra.mxu0 %v2117
        %3167 = vmatprep.subr.bf16.mxu0 %v2122
        %3168 = vmatpush1.bf16.msra.mxu0 %v2121
        %3169 = vmatprep.subr.bf16.mxu0 %v2126
        %3170 = vmatpush1.bf16.msra.mxu0 %v2125
        %3171 = vmatprep.subr.bf16.mxu0 %v2130
        %3172 = vmatpush1.bf16.msra.mxu0 %v2129
        %3173 = vmatprep.subr.bf16.mxu0 %v2134
        %3174 = vmatpush1.bf16.msra.mxu0 %v2133
        %3175 = vmatprep.subr.bf16.mxu0 %v2138
        %3176 = vmatpush1.bf16.msra.mxu0 %v2137
        %3177 = vmatprep.subr.bf16.mxu0 %v2142
        %3178 = vmatpush1.bf16.msra.mxu0 %v2141
        %3179 = vmatprep.subr.bf16.mxu0 %v2146
        %3180 = vmatpush1.bf16.msra.mxu0 %v2145
        %3181 = vmatprep.subr.bf16.mxu0 %v2150
        %3182 = vmatpush1.bf16.msra.mxu0 %v2149
        %3183 = vmatprep.subr.bf16.mxu0 %v2154
        %3184 = vmatpush1.bf16.msra.mxu0 %v2153
        %3185 = vmatprep.mubr.bf16.mxu0 %v1072
        %3186 = vmatmul.mubr.bf16.gmra.mrb[0].mxu0 %v1071
        %v3187 = vpop.f32.mrb[0].mxu0
        %v3188 = vadd.f32 %v3075, %v3187
        %v3189 = vpop.f32.mrb[0].mxu0
        %v3190 = vadd.f32 %v3077, %v3189
        %v3191 = vpop.f32.mrb[0].mxu0
        %v3192 = vadd.f32 %v3079, %v3191
        %v3193 = vpop.f32.mrb[0].mxu0
        %v3194 = vadd.f32 %v3081, %v3193
        %3195 = vmatprep.mubr.bf16.mxu0 %v1080
        %3196 = vmatmul.mubr.bf16.gmra.mrb[0].mxu0 %v1079
        %v3197 = vpop.f32.mrb[0].mxu0
        %v3198 = vadd.f32 %v3085, %v3197
        %v3199 = vpop.f32.mrb[0].mxu0
        %v3200 = vadd.f32 %v3087, %v3199
        %v3201 = vpop.f32.mrb[0].mxu0
        %v3202 = vadd.f32 %v3089, %v3201
        %v3203 = vpop.f32.mrb[0].mxu0
        %v3204 = vadd.f32 %v3091, %v3203
        %3205 = vmatprep.mubr.bf16.mxu0 %v1088
        %3206 = vmatmul.mubr.bf16.gmra.mrb[0].mxu0 %v1087
        %v3207 = vpop.f32.mrb[0].mxu0
        %v3208 = vadd.f32 %v3095, %v3207
        %v3209 = vpop.f32.mrb[0].mxu0
        %v3210 = vadd.f32 %v3097, %v3209
        %v3211 = vpop.f32.mrb[0].mxu0
        %v3212 = vadd.f32 %v3099, %v3211
        %v3213 = vpop.f32.mrb[0].mxu0
        %v3214 = vadd.f32 %v3101, %v3213
        %3215 = vmatprep.mubr.bf16.mxu0 %v1096
        %3216 = vmatmul.mubr.bf16.gmra.mrb[0].mxu0 %v1095
        %v3217 = vpop.f32.mrb[0].mxu0
        %v3218 = vadd.f32 %v3105, %v3217
        %v3219 = vpop.f32.mrb[0].mxu0
        %v3220 = vadd.f32 %v3107, %v3219
        %v3221 = vpop.f32.mrb[0].mxu0
        %v3222 = vadd.f32 %v3109, %v3221
        %v3223 = vpop.f32.mrb[0].mxu0
        %v3224 = vadd.f32 %v3111, %v3223
        %3225 = vmatprep.mubr.bf16.mxu0 %v1104
        %3226 = vmatmul.mubr.bf16.gmra.mrb[0].mxu0 %v1103
        %v3227 = vpop.f32.mrb[0].mxu0
        %v3228 = vadd.f32 %v3115, %v3227
        %v3229 = vpop.f32.mrb[0].mxu0
        %v3230 = vadd.f32 %v3117, %v3229
        %v3231 = vpop.f32.mrb[0].mxu0
        %v3232 = vadd.f32 %v3119, %v3231
        %v3233 = vpop.f32.mrb[0].mxu0
        %v3234 = vadd.f32 %v3121, %v3233
        %3235 = vmatprep.mubr.bf16.mxu0 %v1112
        %3236 = vmatmul.mubr.bf16.gmra.mrb[0].mxu0 %v1111
        %v3237 = vpop.f32.mrb[0].mxu0
        %v3238 = vadd.f32 %v3125, %v3237
        %v3239 = vpop.f32.mrb[0].mxu0
        %v3240 = vadd.f32 %v3127, %v3239
        %v3241 = vpop.f32.mrb[0].mxu0
        %v3242 = vadd.f32 %v3129, %v3241
        %v3243 = vpop.f32.mrb[0].mxu0
        %v3244 = vadd.f32 %v3131, %v3243
        %3245 = vmatprep.mubr.bf16.mxu0 %v1120
        %3246 = vmatmul.mubr.bf16.gmra.mrb[0].mxu0 %v1119
        %v3247 = vpop.f32.mrb[0].mxu0
        %v3248 = vadd.f32 %v3135, %v3247
        %v3249 = vpop.f32.mrb[0].mxu0
        %v3250 = vadd.f32 %v3137, %v3249
        %v3251 = vpop.f32.mrb[0].mxu0
        %v3252 = vadd.f32 %v3139, %v3251
        %v3253 = vpop.f32.mrb[0].mxu0
        %v3254 = vadd.f32 %v3141, %v3253
        %3255 = vmatprep.mubr.bf16.mxu0 %v1128
        %3256 = vmatmul.mubr.bf16.gmra.mrb[0].mxu0 %v1127
        %v3257 = vpop.f32.mrb[0].mxu0
        %v3258 = vadd.f32 %v3145, %v3257
        %v3259 = vpop.f32.mrb[0].mxu0
        %v3260 = vadd.f32 %v3147, %v3259
        %v3261 = vpop.f32.mrb[0].mxu0
        %v3262 = vadd.f32 %v3149, %v3261
        %v3263 = vpop.f32.mrb[0].mxu0
        %v3264 = vadd.f32 %v3151, %v3263
        %3265 = vdwg.mxu0
        %3266 = vmatprep.subr.bf16.mxu0 %v2158
        %3267 = vmatpush1.bf16.msra.mxu0 %v2157
        %3268 = vmatprep.subr.bf16.mxu0 %v2162
        %3269 = vmatpush1.bf16.msra.mxu0 %v2161
        %3270 = vmatprep.subr.bf16.mxu0 %v2166
        %3271 = vmatpush1.bf16.msra.mxu0 %v2165
        %3272 = vmatprep.subr.bf16.mxu0 %v2170
        %3273 = vmatpush1.bf16.msra.mxu0 %v2169
        %3274 = vmatprep.subr.bf16.mxu0 %v2174
        %3275 = vmatpush1.bf16.msra.mxu0 %v2173
        %3276 = vmatprep.subr.bf16.mxu0 %v2178
        %3277 = vmatpush1.bf16.msra.mxu0 %v2177
        %3278 = vmatprep.subr.bf16.mxu0 %v2182
        %3279 = vmatpush1.bf16.msra.mxu0 %v2181
        %3280 = vmatprep.subr.bf16.mxu0 %v2186
        %3281 = vmatpush1.bf16.msra.mxu0 %v2185
        %3282 = vmatprep.subr.bf16.mxu0 %v2190
        %3283 = vmatpush1.bf16.msra.mxu0 %v2189
        %3284 = vmatprep.subr.bf16.mxu0 %v2194
        %3285 = vmatpush1.bf16.msra.mxu0 %v2193
        %3286 = vmatprep.subr.bf16.mxu0 %v2198
        %3287 = vmatpush1.bf16.msra.mxu0 %v2197
        %3288 = vmatprep.subr.bf16.mxu0 %v2202
        %3289 = vmatpush1.bf16.msra.mxu0 %v2201
        %3290 = vmatprep.subr.bf16.mxu0 %v2206
        %3291 = vmatpush1.bf16.msra.mxu0 %v2205
        %3292 = vmatprep.subr.bf16.mxu0 %v2210
        %3293 = vmatpush1.bf16.msra.mxu0 %v2209
        %3294 = vmatprep.subr.bf16.mxu0 %v2214
        %3295 = vmatpush1.bf16.msra.mxu0 %v2213
        %3296 = vmatprep.subr.bf16.mxu0 %v2218
        %3297 = vmatpush1.bf16.msra.mxu0 %v2217
        %3298 = vmatprep.mubr.bf16.mxu0 %v1074
        %3299 = vmatmul.mubr.bf16.gmra.mrb[0].mxu0 %v1073
        %v3300 = vpop.f32.mrb[0].mxu0
        %v3301 = vadd.f32 %v3188, %v3300
        %v3302 = vpop.f32.mrb[0].mxu0
        %v3303 = vadd.f32 %v3190, %v3302
        %v3304 = vpop.f32.mrb[0].mxu0
        %v3305 = vadd.f32 %v3192, %v3304
        %v3306 = vpop.f32.mrb[0].mxu0
        %v3307 = vadd.f32 %v3194, %v3306
        %3308 = vmatprep.mubr.bf16.mxu0 %v1082
        %3309 = vmatmul.mubr.bf16.gmra.mrb[0].mxu0 %v1081
        %v3310 = vpop.f32.mrb[0].mxu0
        %v3311 = vadd.f32 %v3198, %v3310
        %v3312 = vpop.f32.mrb[0].mxu0
        %v3313 = vadd.f32 %v3200, %v3312
        %v3314 = vpop.f32.mrb[0].mxu0
        %v3315 = vadd.f32 %v3202, %v3314
        %v3316 = vpop.f32.mrb[0].mxu0
        %v3317 = vadd.f32 %v3204, %v3316
        %3318 = vmatprep.mubr.bf16.mxu0 %v1090
        %3319 = vmatmul.mubr.bf16.gmra.mrb[0].mxu0 %v1089
        %v3320 = vpop.f32.mrb[0].mxu0
        %v3321 = vadd.f32 %v3208, %v3320
        %v3322 = vpop.f32.mrb[0].mxu0
        %v3323 = vadd.f32 %v3210, %v3322
        %v3324 = vpop.f32.mrb[0].mxu0
        %v3325 = vadd.f32 %v3212, %v3324
        %v3326 = vpop.f32.mrb[0].mxu0
        %v3327 = vadd.f32 %v3214, %v3326
        %3328 = vmatprep.mubr.bf16.mxu0 %v1098
        %3329 = vmatmul.mubr.bf16.gmra.mrb[0].mxu0 %v1097
        %v3330 = vpop.f32.mrb[0].mxu0
        %v3331 = vadd.f32 %v3218, %v3330
        %v3332 = vpop.f32.mrb[0].mxu0
        %v3333 = vadd.f32 %v3220, %v3332
        %v3334 = vpop.f32.mrb[0].mxu0
        %v3335 = vadd.f32 %v3222, %v3334
        %v3336 = vpop.f32.mrb[0].mxu0
        %v3337 = vadd.f32 %v3224, %v3336
        %3338 = vmatprep.mubr.bf16.mxu0 %v1106
        %3339 = vmatmul.mubr.bf16.gmra.mrb[0].mxu0 %v1105
        %v3340 = vpop.f32.mrb[0].mxu0
        %v3341 = vadd.f32 %v3228, %v3340
        %v3342 = vpop.f32.mrb[0].mxu0
        %v3343 = vadd.f32 %v3230, %v3342
        %v3344 = vpop.f32.mrb[0].mxu0
        %v3345 = vadd.f32 %v3232, %v3344
        %v3346 = vpop.f32.mrb[0].mxu0
        %v3347 = vadd.f32 %v3234, %v3346
        %3348 = vmatprep.mubr.bf16.mxu0 %v1114
        %3349 = vmatmul.mubr.bf16.gmra.mrb[0].mxu0 %v1113
        %v3350 = vpop.f32.mrb[0].mxu0
        %v3351 = vadd.f32 %v3238, %v3350
        %v3352 = vpop.f32.mrb[0].mxu0
        %v3353 = vadd.f32 %v3240, %v3352
        %v3354 = vpop.f32.mrb[0].mxu0
        %v3355 = vadd.f32 %v3242, %v3354
        %v3356 = vpop.f32.mrb[0].mxu0
        %v3357 = vadd.f32 %v3244, %v3356
        %3358 = vmatprep.mubr.bf16.mxu0 %v1122
        %3359 = vmatmul.mubr.bf16.gmra.mrb[0].mxu0 %v1121
        %v3360 = vpop.f32.mrb[0].mxu0
        %v3361 = vadd.f32 %v3248, %v3360
        %v3362 = vpop.f32.mrb[0].mxu0
        %v3363 = vadd.f32 %v3250, %v3362
        %v3364 = vpop.f32.mrb[0].mxu0
        %v3365 = vadd.f32 %v3252, %v3364
        %v3366 = vpop.f32.mrb[0].mxu0
        %v3367 = vadd.f32 %v3254, %v3366
        %3368 = vmatprep.mubr.bf16.mxu0 %v1130
        %3369 = vmatmul.mubr.bf16.gmra.mrb[0].mxu0 %v1129
        %v3370 = vpop.f32.mrb[0].mxu0
        %v3371 = vadd.f32 %v3258, %v3370
        %v3372 = vpop.f32.mrb[0].mxu0
        %v3373 = vadd.f32 %v3260, %v3372
        %v3374 = vpop.f32.mrb[0].mxu0
        %v3375 = vadd.f32 %v3262, %v3374
        %v3376 = vpop.f32.mrb[0].mxu0
        %v3377 = vadd.f32 %v3264, %v3376
        %3378 = vdwg.mxu0
        %v3379 = vmax.f32 %v2849, 0.0
        %v3380 = vmax.f32 %v2851, 0.0
        %v3381 = vmax.f32 %v3301, 0.0
        %v3382 = vmax.f32 %v3303, 0.0
        %v3383 = vmax.f32 %v2853, 0.0
        %v3384 = vmax.f32 %v2855, 0.0
        %v3385 = vmax.f32 %v3305, 0.0
        %v3386 = vmax.f32 %v3307, 0.0
        %v3387 = vmax.f32 %v2859, 0.0
        %v3388 = vmax.f32 %v2861, 0.0
        %v3389 = vmax.f32 %v3311, 0.0
        %v3390 = vmax.f32 %v3313, 0.0
        %v3391 = vmax.f32 %v2863, 0.0
        %v3392 = vmax.f32 %v2865, 0.0
        %v3393 = vmax.f32 %v3315, 0.0
        %v3394 = vmax.f32 %v3317, 0.0
        %v3395 = vmax.f32 %v2869, 0.0
        %v3396 = vmax.f32 %v2871, 0.0
        %v3397 = vmax.f32 %v3321, 0.0
        %v3398 = vmax.f32 %v3323, 0.0
        %v3399 = vmax.f32 %v2873, 0.0
        %v3400 = vmax.f32 %v2875, 0.0
        %v3401 = vmax.f32 %v3325, 0.0
        %v3402 = vmax.f32 %v3327, 0.0
        %v3403 = vmax.f32 %v2879, 0.0
        %v3404 = vmax.f32 %v2881, 0.0
        %v3405 = vmax.f32 %v3331, 0.0
        %v3406 = vmax.f32 %v3333, 0.0
        %v3407 = vmax.f32 %v2883, 0.0
        %v3408 = vmax.f32 %v2885, 0.0
        %v3409 = vmax.f32 %v3335, 0.0
        %v3410 = vmax.f32 %v3337, 0.0
        %v3411 = vmax.f32 %v2889, 0.0
        %v3412 = vmax.f32 %v2891, 0.0
        %v3413 = vmax.f32 %v3341, 0.0
        %v3414 = vmax.f32 %v3343, 0.0
        %v3415 = vmax.f32 %v2893, 0.0
        %v3416 = vmax.f32 %v2895, 0.0
        %v3417 = vmax.f32 %v3345, 0.0
        %v3418 = vmax.f32 %v3347, 0.0
        %v3419 = vmax.f32 %v2899, 0.0
        %v3420 = vmax.f32 %v2901, 0.0
        %v3421 = vmax.f32 %v3351, 0.0
        %v3422 = vmax.f32 %v3353, 0.0
        %v3423 = vmax.f32 %v2903, 0.0
        %v3424 = vmax.f32 %v2905, 0.0
        %v3425 = vmax.f32 %v3355, 0.0
        %v3426 = vmax.f32 %v3357, 0.0
        %v3427 = vmax.f32 %v2909, 0.0
        %v3428 = vmax.f32 %v2911, 0.0
        %v3429 = vmax.f32 %v3361, 0.0
        %v3430 = vmax.f32 %v3363, 0.0
        %v3431 = vmax.f32 %v2913, 0.0
        %v3432 = vmax.f32 %v2915, 0.0
        %v3433 = vmax.f32 %v3365, 0.0
        %v3434 = vmax.f32 %v3367, 0.0
        %v3435 = vmax.f32 %v2919, 0.0
        %v3436 = vmax.f32 %v2921, 0.0
        %v3437 = vmax.f32 %v3371, 0.0
        %v3438 = vmax.f32 %v3373, 0.0
        %v3439 = vmax.f32 %v2923, 0.0
        %v3440 = vmax.f32 %v2925, 0.0
        %v3441 = vmax.f32 %v3375, 0.0
        %v3442 = vmax.f32 %v3377, 0.0
        %v3443 = vpack.c.bf16 %v3383, %v3379
        %v3444 = vpack.c.bf16 %v3384, %v3380
        %v3445 = vpack.c.bf16 %v3385, %v3381
        %v3446 = vpack.c.bf16 %v3386, %v3382
        %v3447 = vpack.c.bf16 %v3391, %v3387
        %v3448 = vpack.c.bf16 %v3392, %v3388
        %v3449 = vpack.c.bf16 %v3393, %v3389
        %v3450 = vpack.c.bf16 %v3394, %v3390
        %v3451 = vpack.c.bf16 %v3399, %v3395
        %v3452 = vpack.c.bf16 %v3400, %v3396
        %v3453 = vpack.c.bf16 %v3401, %v3397
        %v3454 = vpack.c.bf16 %v3402, %v3398
        %v3455 = vpack.c.bf16 %v3407, %v3403
        %v3456 = vpack.c.bf16 %v3408, %v3404
        %v3457 = vpack.c.bf16 %v3409, %v3405
        %v3458 = vpack.c.bf16 %v3410, %v3406
        %v3459 = vpack.c.bf16 %v3415, %v3411
        %v3460 = vpack.c.bf16 %v3416, %v3412
        %v3461 = vpack.c.bf16 %v3417, %v3413
        %v3462 = vpack.c.bf16 %v3418, %v3414
        %v3463 = vpack.c.bf16 %v3423, %v3419
        %v3464 = vpack.c.bf16 %v3424, %v3420
        %v3465 = vpack.c.bf16 %v3425, %v3421
        %v3466 = vpack.c.bf16 %v3426, %v3422
        %v3467 = vpack.c.bf16 %v3431, %v3427
        %v3468 = vpack.c.bf16 %v3432, %v3428
        %v3469 = vpack.c.bf16 %v3433, %v3429
        %v3470 = vpack.c.bf16 %v3434, %v3430
        %v3471 = vpack.c.bf16 %v3439, %v3435
        %v3472 = vpack.c.bf16 %v3440, %v3436
        %v3473 = vpack.c.bf16 %v3441, %v3437
        %v3474 = vpack.c.bf16 %v3442, %v3438
        %v3475 = vld [vmem:[#allocation11] sm:$0xff]
        %v3476 = vld [vmem:[#allocation11 + $0x8] sm:$0xff]
        %v3477 = vld [vmem:[#allocation11 + $0x10] sm:$0xff]
        %v3478 = vld [vmem:[#allocation11 + $0x18] sm:$0xff]
        %v3479 = vld [vmem:[#allocation11 + $0x20] sm:$0xff]
        %v3480 = vld [vmem:[#allocation11 + $0x28] sm:$0xff]
        %v3481 = vld [vmem:[#allocation11 + $0x30] sm:$0xff]
        %v3482 = vld [vmem:[#allocation11 + $0x38] sm:$0xff]
        %v3483 = vld [vmem:[#allocation11 + $0x40] sm:$0xff]
        %v3484 = vld [vmem:[#allocation11 + $0x48] sm:$0xff]
        %v3485 = vld [vmem:[#allocation11 + $0x50] sm:$0xff]
        %v3486 = vld [vmem:[#allocation11 + $0x58] sm:$0xff]
        %v3487 = vld [vmem:[#allocation11 + $0x60] sm:$0xff]
        %v3488 = vld [vmem:[#allocation11 + $0x68] sm:$0xff]
        %v3489 = vld [vmem:[#allocation11 + $0x70] sm:$0xff]
        %v3490 = vld [vmem:[#allocation11 + $0x78] sm:$0xff]
        %v3491 = vld [vmem:[#allocation11 + $0x80] sm:$0xff]
        %v3492 = vld [vmem:[#allocation11 + $0x88] sm:$0xff]
        %v3493 = vld [vmem:[#allocation11 + $0x90] sm:$0xff]
        %v3494 = vld [vmem:[#allocation11 + $0x98] sm:$0xff]
        %v3495 = vld [vmem:[#allocation11 + $0xa0] sm:$0xff]
        %v3496 = vld [vmem:[#allocation11 + $0xa8] sm:$0xff]
        %v3497 = vld [vmem:[#allocation11 + $0xb0] sm:$0xff]
        %v3498 = vld [vmem:[#allocation11 + $0xb8] sm:$0xff]
        %v3499 = vld [vmem:[#allocation11 + $0xc0] sm:$0xff]
        %v3500 = vld [vmem:[#allocation11 + $0xc8] sm:$0xff]
        %v3501 = vld [vmem:[#allocation11 + $0xd0] sm:$0xff]
        %v3502 = vld [vmem:[#allocation11 + $0xd8] sm:$0xff]
        %v3503 = vld [vmem:[#allocation11 + $0xe0] sm:$0xff]
        %v3504 = vld [vmem:[#allocation11 + $0xe8] sm:$0xff]
        %v3505 = vld [vmem:[#allocation11 + $0xf0] sm:$0xff]
        %v3506 = vld [vmem:[#allocation11 + $0xf8] sm:$0xff]
        %v3507 = vld [vmem:[#allocation11 + $0x100] sm:$0xff]
        %v3508 = vld [vmem:[#allocation11 + $0x108] sm:$0xff]
        %v3509 = vld [vmem:[#allocation11 + $0x110] sm:$0xff]
        %v3510 = vld [vmem:[#allocation11 + $0x118] sm:$0xff]
        %v3511 = vld [vmem:[#allocation11 + $0x120] sm:$0xff]
        %v3512 = vld [vmem:[#allocation11 + $0x128] sm:$0xff]
        %v3513 = vld [vmem:[#allocation11 + $0x130] sm:$0xff]
        %v3514 = vld [vmem:[#allocation11 + $0x138] sm:$0xff]
        %v3515 = vld [vmem:[#allocation11 + $0x140] sm:$0xff]
        %v3516 = vld [vmem:[#allocation11 + $0x148] sm:$0xff]
        %v3517 = vld [vmem:[#allocation11 + $0x150] sm:$0xff]
        %v3518 = vld [vmem:[#allocation11 + $0x158] sm:$0xff]
        %v3519 = vld [vmem:[#allocation11 + $0x160] sm:$0xff]
        %v3520 = vld [vmem:[#allocation11 + $0x168] sm:$0xff]
        %v3521 = vld [vmem:[#allocation11 + $0x170] sm:$0xff]
        %v3522 = vld [vmem:[#allocation11 + $0x178] sm:$0xff]
        %v3523 = vld [vmem:[#allocation11 + $0x180] sm:$0xff]
        %v3524 = vld [vmem:[#allocation11 + $0x188] sm:$0xff]
        %v3525 = vld [vmem:[#allocation11 + $0x190] sm:$0xff]
        %v3526 = vld [vmem:[#allocation11 + $0x198] sm:$0xff]
        %v3527 = vld [vmem:[#allocation11 + $0x1a0] sm:$0xff]
        %v3528 = vld [vmem:[#allocation11 + $0x1a8] sm:$0xff]
        %v3529 = vld [vmem:[#allocation11 + $0x1b0] sm:$0xff]
        %v3530 = vld [vmem:[#allocation11 + $0x1b8] sm:$0xff]
        %v3531 = vld [vmem:[#allocation11 + $0x1c0] sm:$0xff]
        %v3532 = vld [vmem:[#allocation11 + $0x1c8] sm:$0xff]
        %v3533 = vld [vmem:[#allocation11 + $0x1d0] sm:$0xff]
        %v3534 = vld [vmem:[#allocation11 + $0x1d8] sm:$0xff]
        %v3535 = vld [vmem:[#allocation11 + $0x1e0] sm:$0xff]
        %v3536 = vld [vmem:[#allocation11 + $0x1e8] sm:$0xff]
        %v3537 = vld [vmem:[#allocation11 + $0x1f0] sm:$0xff]
        %v3538 = vld [vmem:[#allocation11 + $0x1f8] sm:$0xff]
        %v3539 = vld [vmem:[#allocation11 + $0x200] sm:$0xff]
        %v3540 = vld [vmem:[#allocation11 + $0x208] sm:$0xff]
        %v3541 = vld [vmem:[#allocation11 + $0x210] sm:$0xff]
        %v3542 = vld [vmem:[#allocation11 + $0x218] sm:$0xff]
        %v3543 = vld [vmem:[#allocation11 + $0x220] sm:$0xff]
        %v3544 = vld [vmem:[#allocation11 + $0x228] sm:$0xff]
        %v3545 = vld [vmem:[#allocation11 + $0x230] sm:$0xff]
        %v3546 = vld [vmem:[#allocation11 + $0x238] sm:$0xff]
        %v3547 = vld [vmem:[#allocation11 + $0x240] sm:$0xff]
        %v3548 = vld [vmem:[#allocation11 + $0x248] sm:$0xff]
        %v3549 = vld [vmem:[#allocation11 + $0x250] sm:$0xff]
        %v3550 = vld [vmem:[#allocation11 + $0x258] sm:$0xff]
        %v3551 = vld [vmem:[#allocation11 + $0x260] sm:$0xff]
        %v3552 = vld [vmem:[#allocation11 + $0x268] sm:$0xff]
        %v3553 = vld [vmem:[#allocation11 + $0x270] sm:$0xff]
        %v3554 = vld [vmem:[#allocation11 + $0x278] sm:$0xff]
        %v3555 = vld [vmem:[#allocation11 + $0x280] sm:$0xff]
        %v3556 = vld [vmem:[#allocation11 + $0x288] sm:$0xff]
        %v3557 = vld [vmem:[#allocation11 + $0x290] sm:$0xff]
        %v3558 = vld [vmem:[#allocation11 + $0x298] sm:$0xff]
        %v3559 = vld [vmem:[#allocation11 + $0x2a0] sm:$0xff]
        %v3560 = vld [vmem:[#allocation11 + $0x2a8] sm:$0xff]
        %v3561 = vld [vmem:[#allocation11 + $0x2b0] sm:$0xff]
        %v3562 = vld [vmem:[#allocation11 + $0x2b8] sm:$0xff]
        %v3563 = vld [vmem:[#allocation11 + $0x2c0] sm:$0xff]
        %v3564 = vld [vmem:[#allocation11 + $0x2c8] sm:$0xff]
        %v3565 = vld [vmem:[#allocation11 + $0x2d0] sm:$0xff]
        %v3566 = vld [vmem:[#allocation11 + $0x2d8] sm:$0xff]
        %v3567 = vld [vmem:[#allocation11 + $0x2e0] sm:$0xff]
        %v3568 = vld [vmem:[#allocation11 + $0x2e8] sm:$0xff]
        %v3569 = vld [vmem:[#allocation11 + $0x2f0] sm:$0xff]
        %v3570 = vld [vmem:[#allocation11 + $0x2f8] sm:$0xff]
        %v3571 = vld [vmem:[#allocation11 + $0x300] sm:$0xff]
        %v3572 = vld [vmem:[#allocation11 + $0x308] sm:$0xff]
        %v3573 = vld [vmem:[#allocation11 + $0x310] sm:$0xff]
        %v3574 = vld [vmem:[#allocation11 + $0x318] sm:$0xff]
        %v3575 = vld [vmem:[#allocation11 + $0x320] sm:$0xff]
        %v3576 = vld [vmem:[#allocation11 + $0x328] sm:$0xff]
        %v3577 = vld [vmem:[#allocation11 + $0x330] sm:$0xff]
        %v3578 = vld [vmem:[#allocation11 + $0x338] sm:$0xff]
        %v3579 = vld [vmem:[#allocation11 + $0x340] sm:$0xff]
        %v3580 = vld [vmem:[#allocation11 + $0x348] sm:$0xff]
        %v3581 = vld [vmem:[#allocation11 + $0x350] sm:$0xff]
        %v3582 = vld [vmem:[#allocation11 + $0x358] sm:$0xff]
        %v3583 = vld [vmem:[#allocation11 + $0x360] sm:$0xff]
        %v3584 = vld [vmem:[#allocation11 + $0x368] sm:$0xff]
        %v3585 = vld [vmem:[#allocation11 + $0x370] sm:$0xff]
        %v3586 = vld [vmem:[#allocation11 + $0x378] sm:$0xff]
        %v3587 = vld [vmem:[#allocation11 + $0x380] sm:$0xff]
        %v3588 = vld [vmem:[#allocation11 + $0x388] sm:$0xff]
        %v3589 = vld [vmem:[#allocation11 + $0x390] sm:$0xff]
        %v3590 = vld [vmem:[#allocation11 + $0x398] sm:$0xff]
        %v3591 = vld [vmem:[#allocation11 + $0x3a0] sm:$0xff]
        %v3592 = vld [vmem:[#allocation11 + $0x3a8] sm:$0xff]
        %v3593 = vld [vmem:[#allocation11 + $0x3b0] sm:$0xff]
        %v3594 = vld [vmem:[#allocation11 + $0x3b8] sm:$0xff]
        %v3595 = vld [vmem:[#allocation11 + $0x3c0] sm:$0xff]
        %v3596 = vld [vmem:[#allocation11 + $0x3c8] sm:$0xff]
        %v3597 = vld [vmem:[#allocation11 + $0x3d0] sm:$0xff]
        %v3598 = vld [vmem:[#allocation11 + $0x3d8] sm:$0xff]
        %v3599 = vld [vmem:[#allocation11 + $0x3e0] sm:$0xff]
        %v3600 = vld [vmem:[#allocation11 + $0x3e8] sm:$0xff]
        %v3601 = vld [vmem:[#allocation11 + $0x3f0] sm:$0xff]
        %v3602 = vld [vmem:[#allocation11 + $0x3f8] sm:$0xff]
        %v3603 = vld [vmem:[%s4] sm:$0xf]
        %v3605 = vlaneseq
        %v3606 = vshrl.u32 %v3605, 7
        %v3607 = vsub.s32 0, %v3606
        %v3608 = vrot.slane %v3603, %v3607
        %v3609 = vlaneseq
        %v3610 = vshrl.u32 %v3609, 7
        %v3611 = vsub.s32 1, %v3610
        %v3612 = vrot.slane %v3603, %v3611
        %v3613 = vlaneseq
        %v3614 = vshrl.u32 %v3613, 7
        %v3615 = vsub.s32 2, %v3614
        %v3616 = vrot.slane %v3603, %v3615
        %v3617 = vlaneseq
        %v3618 = vshrl.u32 %v3617, 7
        %v3619 = vsub.s32 3, %v3618
        %v3620 = vrot.slane %v3603, %v3619
        %v3753 = vunpack.c.l.b16 %v3475
        %v3754 = vunpack.c.h.b16 %v3475
        %v3755 = vunpack.c.l.b16 %v3476
        %v3756 = vunpack.c.h.b16 %v3476
        %v3757 = vunpack.c.l.b16 %v3477
        %v3758 = vunpack.c.h.b16 %v3477
        %v3759 = vunpack.c.l.b16 %v3478
        %v3760 = vunpack.c.h.b16 %v3478
        %v3761 = vunpack.c.l.b16 %v3479
        %v3762 = vunpack.c.h.b16 %v3479
        %v3763 = vunpack.c.l.b16 %v3480
        %v3764 = vunpack.c.h.b16 %v3480
        %v3765 = vunpack.c.l.b16 %v3481
        %v3766 = vunpack.c.h.b16 %v3481
        %v3767 = vunpack.c.l.b16 %v3482
        %v3768 = vunpack.c.h.b16 %v3482
        %v3769 = vunpack.c.l.b16 %v3483
        %v3770 = vunpack.c.h.b16 %v3483
        %v3771 = vunpack.c.l.b16 %v3484
        %v3772 = vunpack.c.h.b16 %v3484
        %v3773 = vunpack.c.l.b16 %v3485
        %v3774 = vunpack.c.h.b16 %v3485
        %v3775 = vunpack.c.l.b16 %v3486
        %v3776 = vunpack.c.h.b16 %v3486
        %v3777 = vunpack.c.l.b16 %v3487
        %v3778 = vunpack.c.h.b16 %v3487
        %v3779 = vunpack.c.l.b16 %v3488
        %v3780 = vunpack.c.h.b16 %v3488
        %v3781 = vunpack.c.l.b16 %v3489
        %v3782 = vunpack.c.h.b16 %v3489
        %v3783 = vunpack.c.l.b16 %v3490
        %v3784 = vunpack.c.h.b16 %v3490
        %v3785 = vunpack.c.l.b16 %v3491
        %v3786 = vunpack.c.h.b16 %v3491
        %v3787 = vunpack.c.l.b16 %v3492
        %v3788 = vunpack.c.h.b16 %v3492
        %v3789 = vunpack.c.l.b16 %v3493
        %v3790 = vunpack.c.h.b16 %v3493
        %v3791 = vunpack.c.l.b16 %v3494
        %v3792 = vunpack.c.h.b16 %v3494
        %v3793 = vunpack.c.l.b16 %v3495
        %v3794 = vunpack.c.h.b16 %v3495
        %v3795 = vunpack.c.l.b16 %v3496
        %v3796 = vunpack.c.h.b16 %v3496
        %v3797 = vunpack.c.l.b16 %v3497
        %v3798 = vunpack.c.h.b16 %v3497
        %v3799 = vunpack.c.l.b16 %v3498
        %v3800 = vunpack.c.h.b16 %v3498
        %v3801 = vunpack.c.l.b16 %v3499
        %v3802 = vunpack.c.h.b16 %v3499
        %v3803 = vunpack.c.l.b16 %v3500
        %v3804 = vunpack.c.h.b16 %v3500
        %v3805 = vunpack.c.l.b16 %v3501
        %v3806 = vunpack.c.h.b16 %v3501
        %v3807 = vunpack.c.l.b16 %v3502
        %v3808 = vunpack.c.h.b16 %v3502
        %v3809 = vunpack.c.l.b16 %v3503
        %v3810 = vunpack.c.h.b16 %v3503
        %v3811 = vunpack.c.l.b16 %v3504
        %v3812 = vunpack.c.h.b16 %v3504
        %v3813 = vunpack.c.l.b16 %v3505
        %v3814 = vunpack.c.h.b16 %v3505
        %v3815 = vunpack.c.l.b16 %v3506
        %v3816 = vunpack.c.h.b16 %v3506
        %v3817 = vunpack.c.l.b16 %v3507
        %v3818 = vunpack.c.h.b16 %v3507
        %v3819 = vunpack.c.l.b16 %v3508
        %v3820 = vunpack.c.h.b16 %v3508
        %v3821 = vunpack.c.l.b16 %v3509
        %v3822 = vunpack.c.h.b16 %v3509
        %v3823 = vunpack.c.l.b16 %v3510
        %v3824 = vunpack.c.h.b16 %v3510
        %v3825 = vunpack.c.l.b16 %v3511
        %v3826 = vunpack.c.h.b16 %v3511
        %v3827 = vunpack.c.l.b16 %v3512
        %v3828 = vunpack.c.h.b16 %v3512
        %v3829 = vunpack.c.l.b16 %v3513
        %v3830 = vunpack.c.h.b16 %v3513
        %v3831 = vunpack.c.l.b16 %v3514
        %v3832 = vunpack.c.h.b16 %v3514
        %v3833 = vunpack.c.l.b16 %v3515
        %v3834 = vunpack.c.h.b16 %v3515
        %v3835 = vunpack.c.l.b16 %v3516
        %v3836 = vunpack.c.h.b16 %v3516
        %v3837 = vunpack.c.l.b16 %v3517
        %v3838 = vunpack.c.h.b16 %v3517
        %v3839 = vunpack.c.l.b16 %v3518
        %v3840 = vunpack.c.h.b16 %v3518
        %v3841 = vunpack.c.l.b16 %v3519
        %v3842 = vunpack.c.h.b16 %v3519
        %v3843 = vunpack.c.l.b16 %v3520
        %v3844 = vunpack.c.h.b16 %v3520
        %v3845 = vunpack.c.l.b16 %v3521
        %v3846 = vunpack.c.h.b16 %v3521
        %v3847 = vunpack.c.l.b16 %v3522
        %v3848 = vunpack.c.h.b16 %v3522
        %v3849 = vunpack.c.l.b16 %v3523
        %v3850 = vunpack.c.h.b16 %v3523
        %v3851 = vunpack.c.l.b16 %v3524
        %v3852 = vunpack.c.h.b16 %v3524
        %v3853 = vunpack.c.l.b16 %v3525
        %v3854 = vunpack.c.h.b16 %v3525
        %v3855 = vunpack.c.l.b16 %v3526
        %v3856 = vunpack.c.h.b16 %v3526
        %v3857 = vunpack.c.l.b16 %v3527
        %v3858 = vunpack.c.h.b16 %v3527
        %v3859 = vunpack.c.l.b16 %v3528
        %v3860 = vunpack.c.h.b16 %v3528
        %v3861 = vunpack.c.l.b16 %v3529
        %v3862 = vunpack.c.h.b16 %v3529
        %v3863 = vunpack.c.l.b16 %v3530
        %v3864 = vunpack.c.h.b16 %v3530
        %v3865 = vunpack.c.l.b16 %v3531
        %v3866 = vunpack.c.h.b16 %v3531
        %v3867 = vunpack.c.l.b16 %v3532
        %v3868 = vunpack.c.h.b16 %v3532
        %v3869 = vunpack.c.l.b16 %v3533
        %v3870 = vunpack.c.h.b16 %v3533
        %v3871 = vunpack.c.l.b16 %v3534
        %v3872 = vunpack.c.h.b16 %v3534
        %v3873 = vunpack.c.l.b16 %v3535
        %v3874 = vunpack.c.h.b16 %v3535
        %v3875 = vunpack.c.l.b16 %v3536
        %v3876 = vunpack.c.h.b16 %v3536
        %v3877 = vunpack.c.l.b16 %v3537
        %v3878 = vunpack.c.h.b16 %v3537
        %v3879 = vunpack.c.l.b16 %v3538
        %v3880 = vunpack.c.h.b16 %v3538
        %v3881 = vunpack.c.l.b16 %v3539
        %v3882 = vunpack.c.h.b16 %v3539
        %v3883 = vunpack.c.l.b16 %v3540
        %v3884 = vunpack.c.h.b16 %v3540
        %v3885 = vunpack.c.l.b16 %v3541
        %v3886 = vunpack.c.h.b16 %v3541
        %v3887 = vunpack.c.l.b16 %v3542
        %v3888 = vunpack.c.h.b16 %v3542
        %v3889 = vunpack.c.l.b16 %v3543
        %v3890 = vunpack.c.h.b16 %v3543
        %v3891 = vunpack.c.l.b16 %v3544
        %v3892 = vunpack.c.h.b16 %v3544
        %v3893 = vunpack.c.l.b16 %v3545
        %v3894 = vunpack.c.h.b16 %v3545
        %v3895 = vunpack.c.l.b16 %v3546
        %v3896 = vunpack.c.h.b16 %v3546
        %v3897 = vunpack.c.l.b16 %v3547
        %v3898 = vunpack.c.h.b16 %v3547
        %v3899 = vunpack.c.l.b16 %v3548
        %v3900 = vunpack.c.h.b16 %v3548
        %v3901 = vunpack.c.l.b16 %v3549
        %v3902 = vunpack.c.h.b16 %v3549
        %v3903 = vunpack.c.l.b16 %v3550
        %v3904 = vunpack.c.h.b16 %v3550
        %v3905 = vunpack.c.l.b16 %v3551
        %v3906 = vunpack.c.h.b16 %v3551
        %v3907 = vunpack.c.l.b16 %v3552
        %v3908 = vunpack.c.h.b16 %v3552
        %v3909 = vunpack.c.l.b16 %v3553
        %v3910 = vunpack.c.h.b16 %v3553
        %v3911 = vunpack.c.l.b16 %v3554
        %v3912 = vunpack.c.h.b16 %v3554
        %v3913 = vunpack.c.l.b16 %v3555
        %v3914 = vunpack.c.h.b16 %v3555
        %v3915 = vunpack.c.l.b16 %v3556
        %v3916 = vunpack.c.h.b16 %v3556
        %v3917 = vunpack.c.l.b16 %v3557
        %v3918 = vunpack.c.h.b16 %v3557
        %v3919 = vunpack.c.l.b16 %v3558
        %v3920 = vunpack.c.h.b16 %v3558
        %v3921 = vunpack.c.l.b16 %v3559
        %v3922 = vunpack.c.h.b16 %v3559
        %v3923 = vunpack.c.l.b16 %v3560
        %v3924 = vunpack.c.h.b16 %v3560
        %v3925 = vunpack.c.l.b16 %v3561
        %v3926 = vunpack.c.h.b16 %v3561
        %v3927 = vunpack.c.l.b16 %v3562
        %v3928 = vunpack.c.h.b16 %v3562
        %v3929 = vunpack.c.l.b16 %v3563
        %v3930 = vunpack.c.h.b16 %v3563
        %v3931 = vunpack.c.l.b16 %v3564
        %v3932 = vunpack.c.h.b16 %v3564
        %v3933 = vunpack.c.l.b16 %v3565
        %v3934 = vunpack.c.h.b16 %v3565
        %v3935 = vunpack.c.l.b16 %v3566
        %v3936 = vunpack.c.h.b16 %v3566
        %v3937 = vunpack.c.l.b16 %v3567
        %v3938 = vunpack.c.h.b16 %v3567
        %v3939 = vunpack.c.l.b16 %v3568
        %v3940 = vunpack.c.h.b16 %v3568
        %v3941 = vunpack.c.l.b16 %v3569
        %v3942 = vunpack.c.h.b16 %v3569
        %v3943 = vunpack.c.l.b16 %v3570
        %v3944 = vunpack.c.h.b16 %v3570
        %v3945 = vunpack.c.l.b16 %v3571
        %v3946 = vunpack.c.h.b16 %v3571
        %v3947 = vunpack.c.l.b16 %v3572
        %v3948 = vunpack.c.h.b16 %v3572
        %v3949 = vunpack.c.l.b16 %v3573
        %v3950 = vunpack.c.h.b16 %v3573
        %v3951 = vunpack.c.l.b16 %v3574
        %v3952 = vunpack.c.h.b16 %v3574
        %v3953 = vunpack.c.l.b16 %v3575
        %v3954 = vunpack.c.h.b16 %v3575
        %v3955 = vunpack.c.l.b16 %v3576
        %v3956 = vunpack.c.h.b16 %v3576
        %v3957 = vunpack.c.l.b16 %v3577
        %v3958 = vunpack.c.h.b16 %v3577
        %v3959 = vunpack.c.l.b16 %v3578
        %v3960 = vunpack.c.h.b16 %v3578
        %v3961 = vunpack.c.l.b16 %v3579
        %v3962 = vunpack.c.h.b16 %v3579
        %v3963 = vunpack.c.l.b16 %v3580
        %v3964 = vunpack.c.h.b16 %v3580
        %v3965 = vunpack.c.l.b16 %v3581
        %v3966 = vunpack.c.h.b16 %v3581
        %v3967 = vunpack.c.l.b16 %v3582
        %v3968 = vunpack.c.h.b16 %v3582
        %v3969 = vunpack.c.l.b16 %v3583
        %v3970 = vunpack.c.h.b16 %v3583
        %v3971 = vunpack.c.l.b16 %v3584
        %v3972 = vunpack.c.h.b16 %v3584
        %v3973 = vunpack.c.l.b16 %v3585
        %v3974 = vunpack.c.h.b16 %v3585
        %v3975 = vunpack.c.l.b16 %v3586
        %v3976 = vunpack.c.h.b16 %v3586
        %v3977 = vunpack.c.l.b16 %v3587
        %v3978 = vunpack.c.h.b16 %v3587
        %v3979 = vunpack.c.l.b16 %v3588
        %v3980 = vunpack.c.h.b16 %v3588
        %v3981 = vunpack.c.l.b16 %v3589
        %v3982 = vunpack.c.h.b16 %v3589
        %v3983 = vunpack.c.l.b16 %v3590
        %v3984 = vunpack.c.h.b16 %v3590
        %v3985 = vunpack.c.l.b16 %v3591
        %v3986 = vunpack.c.h.b16 %v3591
        %v3987 = vunpack.c.l.b16 %v3592
        %v3988 = vunpack.c.h.b16 %v3592
        %v3989 = vunpack.c.l.b16 %v3593
        %v3990 = vunpack.c.h.b16 %v3593
        %v3991 = vunpack.c.l.b16 %v3594
        %v3992 = vunpack.c.h.b16 %v3594
        %v3993 = vunpack.c.l.b16 %v3595
        %v3994 = vunpack.c.h.b16 %v3595
        %v3995 = vunpack.c.l.b16 %v3596
        %v3996 = vunpack.c.h.b16 %v3596
        %v3997 = vunpack.c.l.b16 %v3597
        %v3998 = vunpack.c.h.b16 %v3597
        %v3999 = vunpack.c.l.b16 %v3598
        %v4000 = vunpack.c.h.b16 %v3598
        %v4001 = vunpack.c.l.b16 %v3599
        %v4002 = vunpack.c.h.b16 %v3599
        %v4003 = vunpack.c.l.b16 %v3600
        %v4004 = vunpack.c.h.b16 %v3600
        %v4005 = vunpack.c.l.b16 %v3601
        %v4006 = vunpack.c.h.b16 %v3601
        %v4007 = vunpack.c.l.b16 %v3602
        %v4008 = vunpack.c.h.b16 %v3602
        %v4009 = vpack.c.b16 %v3757, %v3753
        %v4010 = vpack.c.b16 %v3758, %v3754
        %v4011 = vpack.c.b16 %v3759, %v3755
        %v4012 = vpack.c.b16 %v3760, %v3756
        %v4013 = vpack.c.b16 %v3765, %v3761
        %v4014 = vpack.c.b16 %v3766, %v3762
        %v4015 = vpack.c.b16 %v3767, %v3763
        %v4016 = vpack.c.b16 %v3768, %v3764
        %v4017 = vpack.c.b16 %v3773, %v3769
        %v4018 = vpack.c.b16 %v3774, %v3770
        %v4019 = vpack.c.b16 %v3775, %v3771
        %v4020 = vpack.c.b16 %v3776, %v3772
        %v4021 = vpack.c.b16 %v3781, %v3777
        %v4022 = vpack.c.b16 %v3782, %v3778
        %v4023 = vpack.c.b16 %v3783, %v3779
        %v4024 = vpack.c.b16 %v3784, %v3780
        %v4025 = vpack.c.b16 %v3789, %v3785
        %v4026 = vpack.c.b16 %v3790, %v3786
        %v4027 = vpack.c.b16 %v3791, %v3787
        %v4028 = vpack.c.b16 %v3792, %v3788
        %v4029 = vpack.c.b16 %v3797, %v3793
        %v4030 = vpack.c.b16 %v3798, %v3794
        %v4031 = vpack.c.b16 %v3799, %v3795
        %v4032 = vpack.c.b16 %v3800, %v3796
        %v4033 = vpack.c.b16 %v3805, %v3801
        %v4034 = vpack.c.b16 %v3806, %v3802
        %v4035 = vpack.c.b16 %v3807, %v3803
        %v4036 = vpack.c.b16 %v3808, %v3804
        %v4037 = vpack.c.b16 %v3813, %v3809
        %v4038 = vpack.c.b16 %v3814, %v3810
        %v4039 = vpack.c.b16 %v3815, %v3811
        %v4040 = vpack.c.b16 %v3816, %v3812
        %v4041 = vpack.c.b16 %v3821, %v3817
        %v4042 = vpack.c.b16 %v3822, %v3818
        %v4043 = vpack.c.b16 %v3823, %v3819
        %v4044 = vpack.c.b16 %v3824, %v3820
        %v4045 = vpack.c.b16 %v3829, %v3825
        %v4046 = vpack.c.b16 %v3830, %v3826
        %v4047 = vpack.c.b16 %v3831, %v3827
        %v4048 = vpack.c.b16 %v3832, %v3828
        %v4049 = vpack.c.b16 %v3837, %v3833
        %v4050 = vpack.c.b16 %v3838, %v3834
        %v4051 = vpack.c.b16 %v3839, %v3835
        %v4052 = vpack.c.b16 %v3840, %v3836
        %v4053 = vpack.c.b16 %v3845, %v3841
        %v4054 = vpack.c.b16 %v3846, %v3842
        %v4055 = vpack.c.b16 %v3847, %v3843
        %v4056 = vpack.c.b16 %v3848, %v3844
        %v4057 = vpack.c.b16 %v3853, %v3849
        %v4058 = vpack.c.b16 %v3854, %v3850
        %v4059 = vpack.c.b16 %v3855, %v3851
        %v4060 = vpack.c.b16 %v3856, %v3852
        %v4061 = vpack.c.b16 %v3861, %v3857
        %v4062 = vpack.c.b16 %v3862, %v3858
        %v4063 = vpack.c.b16 %v3863, %v3859
        %v4064 = vpack.c.b16 %v3864, %v3860
        %v4065 = vpack.c.b16 %v3869, %v3865
        %v4066 = vpack.c.b16 %v3870, %v3866
        %v4067 = vpack.c.b16 %v3871, %v3867
        %v4068 = vpack.c.b16 %v3872, %v3868
        %v4069 = vpack.c.b16 %v3877, %v3873
        %v4070 = vpack.c.b16 %v3878, %v3874
        %v4071 = vpack.c.b16 %v3879, %v3875
        %v4072 = vpack.c.b16 %v3880, %v3876
        %v4073 = vpack.c.b16 %v3885, %v3881
        %v4074 = vpack.c.b16 %v3886, %v3882
        %v4075 = vpack.c.b16 %v3887, %v3883
        %v4076 = vpack.c.b16 %v3888, %v3884
        %v4077 = vpack.c.b16 %v3893, %v3889
        %v4078 = vpack.c.b16 %v3894, %v3890
        %v4079 = vpack.c.b16 %v3895, %v3891
        %v4080 = vpack.c.b16 %v3896, %v3892
        %v4081 = vpack.c.b16 %v3901, %v3897
        %v4082 = vpack.c.b16 %v3902, %v3898
        %v4083 = vpack.c.b16 %v3903, %v3899
        %v4084 = vpack.c.b16 %v3904, %v3900
        %v4085 = vpack.c.b16 %v3909, %v3905
        %v4086 = vpack.c.b16 %v3910, %v3906
        %v4087 = vpack.c.b16 %v3911, %v3907
        %v4088 = vpack.c.b16 %v3912, %v3908
        %v4089 = vpack.c.b16 %v3917, %v3913
        %v4090 = vpack.c.b16 %v3918, %v3914
        %v4091 = vpack.c.b16 %v3919, %v3915
        %v4092 = vpack.c.b16 %v3920, %v3916
        %v4093 = vpack.c.b16 %v3925, %v3921
        %v4094 = vpack.c.b16 %v3926, %v3922
        %v4095 = vpack.c.b16 %v3927, %v3923
        %v4096 = vpack.c.b16 %v3928, %v3924
        %v4097 = vpack.c.b16 %v3933, %v3929
        %v4098 = vpack.c.b16 %v3934, %v3930
        %v4099 = vpack.c.b16 %v3935, %v3931
        %v4100 = vpack.c.b16 %v3936, %v3932
        %v4101 = vpack.c.b16 %v3941, %v3937
        %v4102 = vpack.c.b16 %v3942, %v3938
        %v4103 = vpack.c.b16 %v3943, %v3939
        %v4104 = vpack.c.b16 %v3944, %v3940
        %v4105 = vpack.c.b16 %v3949, %v3945
        %v4106 = vpack.c.b16 %v3950, %v3946
        %v4107 = vpack.c.b16 %v3951, %v3947
        %v4108 = vpack.c.b16 %v3952, %v3948
        %v4109 = vpack.c.b16 %v3957, %v3953
        %v4110 = vpack.c.b16 %v3958, %v3954
        %v4111 = vpack.c.b16 %v3959, %v3955
        %v4112 = vpack.c.b16 %v3960, %v3956
        %v4113 = vpack.c.b16 %v3965, %v3961
        %v4114 = vpack.c.b16 %v3966, %v3962
        %v4115 = vpack.c.b16 %v3967, %v3963
        %v4116 = vpack.c.b16 %v3968, %v3964
        %v4117 = vpack.c.b16 %v3973, %v3969
        %v4118 = vpack.c.b16 %v3974, %v3970
        %v4119 = vpack.c.b16 %v3975, %v3971
        %v4120 = vpack.c.b16 %v3976, %v3972
        %v4121 = vpack.c.b16 %v3981, %v3977
        %v4122 = vpack.c.b16 %v3982, %v3978
        %v4123 = vpack.c.b16 %v3983, %v3979
        %v4124 = vpack.c.b16 %v3984, %v3980
        %v4125 = vpack.c.b16 %v3989, %v3985
        %v4126 = vpack.c.b16 %v3990, %v3986
        %v4127 = vpack.c.b16 %v3991, %v3987
        %v4128 = vpack.c.b16 %v3992, %v3988
        %v4129 = vpack.c.b16 %v3997, %v3993
        %v4130 = vpack.c.b16 %v3998, %v3994
        %v4131 = vpack.c.b16 %v3999, %v3995
        %v4132 = vpack.c.b16 %v4000, %v3996
        %v4133 = vpack.c.b16 %v4005, %v4001
        %v4134 = vpack.c.b16 %v4006, %v4002
        %v4135 = vpack.c.b16 %v4007, %v4003
        %v4136 = vpack.c.b16 %v4008, %v4004
        %4265 = vmatprep.subr.bf16.mxu0 %v4010
        %4266 = vmatpush1.bf16.msra.mxu0 %v4009
        %4267 = vmatprep.subr.bf16.mxu0 %v4014
        %4268 = vmatpush1.bf16.msra.mxu0 %v4013
        %4269 = vmatprep.subr.bf16.mxu0 %v4018
        %4270 = vmatpush1.bf16.msra.mxu0 %v4017
        %4271 = vmatprep.subr.bf16.mxu0 %v4022
        %4272 = vmatpush1.bf16.msra.mxu0 %v4021
        %4273 = vmatprep.subr.bf16.mxu0 %v4026
        %4274 = vmatpush1.bf16.msra.mxu0 %v4025
        %4275 = vmatprep.subr.bf16.mxu0 %v4030
        %4276 = vmatpush1.bf16.msra.mxu0 %v4029
        %4277 = vmatprep.subr.bf16.mxu0 %v4034
        %4278 = vmatpush1.bf16.msra.mxu0 %v4033
        %4279 = vmatprep.subr.bf16.mxu0 %v4038
        %4280 = vmatpush1.bf16.msra.mxu0 %v4037
        %4281 = vmatprep.subr.bf16.mxu0 %v4042
        %4282 = vmatpush1.bf16.msra.mxu0 %v4041
        %4283 = vmatprep.subr.bf16.mxu0 %v4046
        %4284 = vmatpush1.bf16.msra.mxu0 %v4045
        %4285 = vmatprep.subr.bf16.mxu0 %v4050
        %4286 = vmatpush1.bf16.msra.mxu0 %v4049
        %4287 = vmatprep.subr.bf16.mxu0 %v4054
        %4288 = vmatpush1.bf16.msra.mxu0 %v4053
        %4289 = vmatprep.subr.bf16.mxu0 %v4058
        %4290 = vmatpush1.bf16.msra.mxu0 %v4057
        %4291 = vmatprep.subr.bf16.mxu0 %v4062
        %4292 = vmatpush1.bf16.msra.mxu0 %v4061
        %4293 = vmatprep.subr.bf16.mxu0 %v4066
        %4294 = vmatpush1.bf16.msra.mxu0 %v4065
        %4295 = vmatprep.subr.bf16.mxu0 %v4070
        %4296 = vmatpush1.bf16.msra.mxu0 %v4069
        %4297 = vmatprep.mubr.bf16.mxu0 %v3444
        %4298 = vmatmul.mubr.bf16.gmra.mrb[0].mxu0 %v3443
        %v4299 = vpop.f32.mrb[0].mxu0
        %v4300 = vadd.f32 %v3608, %v4299
        %v4301 = vpop.f32.mrb[0].mxu0
        %v4302 = vadd.f32 %v3612, %v4301
        %v4303 = vpop.f32.mrb[0].mxu0
        %v4304 = vadd.f32 %v3608, %v4303
        %v4305 = vpop.f32.mrb[0].mxu0
        %v4306 = vadd.f32 %v3612, %v4305
        %4307 = vmatprep.mubr.bf16.mxu0 %v3448
        %4308 = vmatmul.mubr.bf16.gmra.mrb[0].mxu0 %v3447
        %v4309 = vpop.f32.mrb[0].mxu0
        %v4310 = vadd.f32 %v3608, %v4309
        %v4311 = vpop.f32.mrb[0].mxu0
        %v4312 = vadd.f32 %v3612, %v4311
        %v4313 = vpop.f32.mrb[0].mxu0
        %v4314 = vadd.f32 %v3608, %v4313
        %v4315 = vpop.f32.mrb[0].mxu0
        %v4316 = vadd.f32 %v3612, %v4315
        %4317 = vmatprep.mubr.bf16.mxu0 %v3452
        %4318 = vmatmul.mubr.bf16.gmra.mrb[0].mxu0 %v3451
        %v4319 = vpop.f32.mrb[0].mxu0
        %v4320 = vadd.f32 %v3608, %v4319
        %v4321 = vpop.f32.mrb[0].mxu0
        %v4322 = vadd.f32 %v3612, %v4321
        %v4323 = vpop.f32.mrb[0].mxu0
        %v4324 = vadd.f32 %v3608, %v4323
        %v4325 = vpop.f32.mrb[0].mxu0
        %v4326 = vadd.f32 %v3612, %v4325
        %4327 = vmatprep.mubr.bf16.mxu0 %v3456
        %4328 = vmatmul.mubr.bf16.gmra.mrb[0].mxu0 %v3455
        %v4329 = vpop.f32.mrb[0].mxu0
        %v4330 = vadd.f32 %v3608, %v4329
        %v4331 = vpop.f32.mrb[0].mxu0
        %v4332 = vadd.f32 %v3612, %v4331
        %v4333 = vpop.f32.mrb[0].mxu0
        %v4334 = vadd.f32 %v3608, %v4333
        %v4335 = vpop.f32.mrb[0].mxu0
        %v4336 = vadd.f32 %v3612, %v4335
        %4337 = vmatprep.mubr.bf16.mxu0 %v3460
        %4338 = vmatmul.mubr.bf16.gmra.mrb[0].mxu0 %v3459
        %v4339 = vpop.f32.mrb[0].mxu0
        %v4340 = vadd.f32 %v3608, %v4339
        %v4341 = vpop.f32.mrb[0].mxu0
        %v4342 = vadd.f32 %v3612, %v4341
        %v4343 = vpop.f32.mrb[0].mxu0
        %v4344 = vadd.f32 %v3608, %v4343
        %v4345 = vpop.f32.mrb[0].mxu0
        %v4346 = vadd.f32 %v3612, %v4345
        %4347 = vmatprep.mubr.bf16.mxu0 %v3464
        %4348 = vmatmul.mubr.bf16.gmra.mrb[0].mxu0 %v3463
        %v4349 = vpop.f32.mrb[0].mxu0
        %v4350 = vadd.f32 %v3608, %v4349
        %v4351 = vpop.f32.mrb[0].mxu0
        %v4352 = vadd.f32 %v3612, %v4351
        %v4353 = vpop.f32.mrb[0].mxu0
        %v4354 = vadd.f32 %v3608, %v4353
        %v4355 = vpop.f32.mrb[0].mxu0
        %v4356 = vadd.f32 %v3612, %v4355
        %4357 = vmatprep.mubr.bf16.mxu0 %v3468
        %4358 = vmatmul.mubr.bf16.gmra.mrb[0].mxu0 %v3467
        %v4359 = vpop.f32.mrb[0].mxu0
        %v4360 = vadd.f32 %v3608, %v4359
        %v4361 = vpop.f32.mrb[0].mxu0
        %v4362 = vadd.f32 %v3612, %v4361
        %v4363 = vpop.f32.mrb[0].mxu0
        %v4364 = vadd.f32 %v3608, %v4363
        %v4365 = vpop.f32.mrb[0].mxu0
        %v4366 = vadd.f32 %v3612, %v4365
        %4367 = vmatprep.mubr.bf16.mxu0 %v3472
        %4368 = vmatmul.mubr.bf16.gmra.mrb[0].mxu0 %v3471
        %v4369 = vpop.f32.mrb[0].mxu0
        %v4370 = vadd.f32 %v3608, %v4369
        %v4371 = vpop.f32.mrb[0].mxu0
        %v4372 = vadd.f32 %v3612, %v4371
        %v4373 = vpop.f32.mrb[0].mxu0
        %v4374 = vadd.f32 %v3608, %v4373
        %v4375 = vpop.f32.mrb[0].mxu0
        %v4376 = vadd.f32 %v3612, %v4375
        %4377 = vdwg.mxu0
        %4378 = vmatprep.subr.bf16.mxu0 %v4074
        %4379 = vmatpush1.bf16.msra.mxu0 %v4073
        %4380 = vmatprep.subr.bf16.mxu0 %v4078
        %4381 = vmatpush1.bf16.msra.mxu0 %v4077
        %4382 = vmatprep.subr.bf16.mxu0 %v4082
        %4383 = vmatpush1.bf16.msra.mxu0 %v4081
        %4384 = vmatprep.subr.bf16.mxu0 %v4086
        %4385 = vmatpush1.bf16.msra.mxu0 %v4085
        %4386 = vmatprep.subr.bf16.mxu0 %v4090
        %4387 = vmatpush1.bf16.msra.mxu0 %v4089
        %4388 = vmatprep.subr.bf16.mxu0 %v4094
        %4389 = vmatpush1.bf16.msra.mxu0 %v4093
        %4390 = vmatprep.subr.bf16.mxu0 %v4098
        %4391 = vmatpush1.bf16.msra.mxu0 %v4097
        %4392 = vmatprep.subr.bf16.mxu0 %v4102
        %4393 = vmatpush1.bf16.msra.mxu0 %v4101
        %4394 = vmatprep.subr.bf16.mxu0 %v4106
        %4395 = vmatpush1.bf16.msra.mxu0 %v4105
        %4396 = vmatprep.subr.bf16.mxu0 %v4110
        %4397 = vmatpush1.bf16.msra.mxu0 %v4109
        %4398 = vmatprep.subr.bf16.mxu0 %v4114
        %4399 = vmatpush1.bf16.msra.mxu0 %v4113
        %4400 = vmatprep.subr.bf16.mxu0 %v4118
        %4401 = vmatpush1.bf16.msra.mxu0 %v4117
        %4402 = vmatprep.subr.bf16.mxu0 %v4122
        %4403 = vmatpush1.bf16.msra.mxu0 %v4121
        %4404 = vmatprep.subr.bf16.mxu0 %v4126
        %4405 = vmatpush1.bf16.msra.mxu0 %v4125
        %4406 = vmatprep.subr.bf16.mxu0 %v4130
        %4407 = vmatpush1.bf16.msra.mxu0 %v4129
        %4408 = vmatprep.subr.bf16.mxu0 %v4134
        %4409 = vmatpush1.bf16.msra.mxu0 %v4133
        %4410 = vmatprep.mubr.bf16.mxu0 %v3446
        %4411 = vmatmul.mubr.bf16.gmra.mrb[0].mxu0 %v3445
        %v4412 = vpop.f32.mrb[0].mxu0
        %v4413 = vadd.f32 %v4300, %v4412
        %v4414 = vpop.f32.mrb[0].mxu0
        %v4415 = vadd.f32 %v4302, %v4414
        %v4416 = vpop.f32.mrb[0].mxu0
        %v4417 = vadd.f32 %v4304, %v4416
        %v4418 = vpop.f32.mrb[0].mxu0
        %v4419 = vadd.f32 %v4306, %v4418
        %4420 = vmatprep.mubr.bf16.mxu0 %v3450
        %4421 = vmatmul.mubr.bf16.gmra.mrb[0].mxu0 %v3449
        %v4422 = vpop.f32.mrb[0].mxu0
        %v4423 = vadd.f32 %v4310, %v4422
        %v4424 = vpop.f32.mrb[0].mxu0
        %v4425 = vadd.f32 %v4312, %v4424
        %v4426 = vpop.f32.mrb[0].mxu0
        %v4427 = vadd.f32 %v4314, %v4426
        %v4428 = vpop.f32.mrb[0].mxu0
        %v4429 = vadd.f32 %v4316, %v4428
        %4430 = vmatprep.mubr.bf16.mxu0 %v3454
        %4431 = vmatmul.mubr.bf16.gmra.mrb[0].mxu0 %v3453
        %v4432 = vpop.f32.mrb[0].mxu0
        %v4433 = vadd.f32 %v4320, %v4432
        %v4434 = vpop.f32.mrb[0].mxu0
        %v4435 = vadd.f32 %v4322, %v4434
        %v4436 = vpop.f32.mrb[0].mxu0
        %v4437 = vadd.f32 %v4324, %v4436
        %v4438 = vpop.f32.mrb[0].mxu0
        %v4439 = vadd.f32 %v4326, %v4438
        %4440 = vmatprep.mubr.bf16.mxu0 %v3458
        %4441 = vmatmul.mubr.bf16.gmra.mrb[0].mxu0 %v3457
        %v4442 = vpop.f32.mrb[0].mxu0
        %v4443 = vadd.f32 %v4330, %v4442
        %v4444 = vpop.f32.mrb[0].mxu0
        %v4445 = vadd.f32 %v4332, %v4444
        %v4446 = vpop.f32.mrb[0].mxu0
        %v4447 = vadd.f32 %v4334, %v4446
        %v4448 = vpop.f32.mrb[0].mxu0
        %v4449 = vadd.f32 %v4336, %v4448
        %4450 = vmatprep.mubr.bf16.mxu0 %v3462
        %4451 = vmatmul.mubr.bf16.gmra.mrb[0].mxu0 %v3461
        %v4452 = vpop.f32.mrb[0].mxu0
        %v4453 = vadd.f32 %v4340, %v4452
        %v4454 = vpop.f32.mrb[0].mxu0
        %v4455 = vadd.f32 %v4342, %v4454
        %v4456 = vpop.f32.mrb[0].mxu0
        %v4457 = vadd.f32 %v4344, %v4456
        %v4458 = vpop.f32.mrb[0].mxu0
        %v4459 = vadd.f32 %v4346, %v4458
        %4460 = vmatprep.mubr.bf16.mxu0 %v3466
        %4461 = vmatmul.mubr.bf16.gmra.mrb[0].mxu0 %v3465
        %v4462 = vpop.f32.mrb[0].mxu0
        %v4463 = vadd.f32 %v4350, %v4462
        %v4464 = vpop.f32.mrb[0].mxu0
        %v4465 = vadd.f32 %v4352, %v4464
        %v4466 = vpop.f32.mrb[0].mxu0
        %v4467 = vadd.f32 %v4354, %v4466
        %v4468 = vpop.f32.mrb[0].mxu0
        %v4469 = vadd.f32 %v4356, %v4468
        %4470 = vmatprep.mubr.bf16.mxu0 %v3470
        %4471 = vmatmul.mubr.bf16.gmra.mrb[0].mxu0 %v3469
        %v4472 = vpop.f32.mrb[0].mxu0
        %v4473 = vadd.f32 %v4360, %v4472
        %v4474 = vpop.f32.mrb[0].mxu0
        %v4475 = vadd.f32 %v4362, %v4474
        %v4476 = vpop.f32.mrb[0].mxu0
        %v4477 = vadd.f32 %v4364, %v4476
        %v4478 = vpop.f32.mrb[0].mxu0
        %v4479 = vadd.f32 %v4366, %v4478
        %4480 = vmatprep.mubr.bf16.mxu0 %v3474
        %4481 = vmatmul.mubr.bf16.gmra.mrb[0].mxu0 %v3473
        %v4482 = vpop.f32.mrb[0].mxu0
        %v4483 = vadd.f32 %v4370, %v4482
        %v4484 = vpop.f32.mrb[0].mxu0
        %v4485 = vadd.f32 %v4372, %v4484
        %v4486 = vpop.f32.mrb[0].mxu0
        %v4487 = vadd.f32 %v4374, %v4486
        %v4488 = vpop.f32.mrb[0].mxu0
        %v4489 = vadd.f32 %v4376, %v4488
        %4490 = vdwg.mxu0
        %4491 = vmatprep.subr.bf16.mxu0 %v4012
        %4492 = vmatpush1.bf16.msra.mxu0 %v4011
        %4493 = vmatprep.subr.bf16.mxu0 %v4016
        %4494 = vmatpush1.bf16.msra.mxu0 %v4015
        %4495 = vmatprep.subr.bf16.mxu0 %v4020
        %4496 = vmatpush1.bf16.msra.mxu0 %v4019
        %4497 = vmatprep.subr.bf16.mxu0 %v4024
        %4498 = vmatpush1.bf16.msra.mxu0 %v4023
        %4499 = vmatprep.subr.bf16.mxu0 %v4028
        %4500 = vmatpush1.bf16.msra.mxu0 %v4027
        %4501 = vmatprep.subr.bf16.mxu0 %v4032
        %4502 = vmatpush1.bf16.msra.mxu0 %v4031
        %4503 = vmatprep.subr.bf16.mxu0 %v4036
        %4504 = vmatpush1.bf16.msra.mxu0 %v4035
        %4505 = vmatprep.subr.bf16.mxu0 %v4040
        %4506 = vmatpush1.bf16.msra.mxu0 %v4039
        %4507 = vmatprep.subr.bf16.mxu0 %v4044
        %4508 = vmatpush1.bf16.msra.mxu0 %v4043
        %4509 = vmatprep.subr.bf16.mxu0 %v4048
        %4510 = vmatpush1.bf16.msra.mxu0 %v4047
        %4511 = vmatprep.subr.bf16.mxu0 %v4052
        %4512 = vmatpush1.bf16.msra.mxu0 %v4051
        %4513 = vmatprep.subr.bf16.mxu0 %v4056
        %4514 = vmatpush1.bf16.msra.mxu0 %v4055
        %4515 = vmatprep.subr.bf16.mxu0 %v4060
        %4516 = vmatpush1.bf16.msra.mxu0 %v4059
        %4517 = vmatprep.subr.bf16.mxu0 %v4064
        %4518 = vmatpush1.bf16.msra.mxu0 %v4063
        %4519 = vmatprep.subr.bf16.mxu0 %v4068
        %4520 = vmatpush1.bf16.msra.mxu0 %v4067
        %4521 = vmatprep.subr.bf16.mxu0 %v4072
        %4522 = vmatpush1.bf16.msra.mxu0 %v4071
        %4523 = vmatprep.mubr.bf16.mxu0 %v3444
        %4524 = vmatmul.mubr.bf16.gmra.mrb[0].mxu0 %v3443
        %v4525 = vpop.f32.mrb[0].mxu0
        %v4526 = vadd.f32 %v3616, %v4525
        %v4527 = vpop.f32.mrb[0].mxu0
        %v4528 = vadd.f32 %v3620, %v4527
        %v4529 = vpop.f32.mrb[0].mxu0
        %v4530 = vadd.f32 %v3616, %v4529
        %v4531 = vpop.f32.mrb[0].mxu0
        %v4532 = vadd.f32 %v3620, %v4531
        %4533 = vmatprep.mubr.bf16.mxu0 %v3448
        %4534 = vmatmul.mubr.bf16.gmra.mrb[0].mxu0 %v3447
        %v4535 = vpop.f32.mrb[0].mxu0
        %v4536 = vadd.f32 %v3616, %v4535
        %v4537 = vpop.f32.mrb[0].mxu0
        %v4538 = vadd.f32 %v3620, %v4537
        %v4539 = vpop.f32.mrb[0].mxu0
        %v4540 = vadd.f32 %v3616, %v4539
        %v4541 = vpop.f32.mrb[0].mxu0
        %v4542 = vadd.f32 %v3620, %v4541
        %4543 = vmatprep.mubr.bf16.mxu0 %v3452
        %4544 = vmatmul.mubr.bf16.gmra.mrb[0].mxu0 %v3451
        %v4545 = vpop.f32.mrb[0].mxu0
        %v4546 = vadd.f32 %v3616, %v4545
        %v4547 = vpop.f32.mrb[0].mxu0
        %v4548 = vadd.f32 %v3620, %v4547
        %v4549 = vpop.f32.mrb[0].mxu0
        %v4550 = vadd.f32 %v3616, %v4549
        %v4551 = vpop.f32.mrb[0].mxu0
        %v4552 = vadd.f32 %v3620, %v4551
        %4553 = vmatprep.mubr.bf16.mxu0 %v3456
        %4554 = vmatmul.mubr.bf16.gmra.mrb[0].mxu0 %v3455
        %v4555 = vpop.f32.mrb[0].mxu0
        %v4556 = vadd.f32 %v3616, %v4555
        %v4557 = vpop.f32.mrb[0].mxu0
        %v4558 = vadd.f32 %v3620, %v4557
        %v4559 = vpop.f32.mrb[0].mxu0
        %v4560 = vadd.f32 %v3616, %v4559
        %v4561 = vpop.f32.mrb[0].mxu0
        %v4562 = vadd.f32 %v3620, %v4561
        %4563 = vmatprep.mubr.bf16.mxu0 %v3460
        %4564 = vmatmul.mubr.bf16.gmra.mrb[0].mxu0 %v3459
        %v4565 = vpop.f32.mrb[0].mxu0
        %v4566 = vadd.f32 %v3616, %v4565
        %v4567 = vpop.f32.mrb[0].mxu0
        %v4568 = vadd.f32 %v3620, %v4567
        %v4569 = vpop.f32.mrb[0].mxu0
        %v4570 = vadd.f32 %v3616, %v4569
        %v4571 = vpop.f32.mrb[0].mxu0
        %v4572 = vadd.f32 %v3620, %v4571
        %4573 = vmatprep.mubr.bf16.mxu0 %v3464
        %4574 = vmatmul.mubr.bf16.gmra.mrb[0].mxu0 %v3463
        %v4575 = vpop.f32.mrb[0].mxu0
        %v4576 = vadd.f32 %v3616, %v4575
        %v4577 = vpop.f32.mrb[0].mxu0
        %v4578 = vadd.f32 %v3620, %v4577
        %v4579 = vpop.f32.mrb[0].mxu0
        %v4580 = vadd.f32 %v3616, %v4579
        %v4581 = vpop.f32.mrb[0].mxu0
        %v4582 = vadd.f32 %v3620, %v4581
        %4583 = vmatprep.mubr.bf16.mxu0 %v3468
        %4584 = vmatmul.mubr.bf16.gmra.mrb[0].mxu0 %v3467
        %v4585 = vpop.f32.mrb[0].mxu0
        %v4586 = vadd.f32 %v3616, %v4585
        %v4587 = vpop.f32.mrb[0].mxu0
        %v4588 = vadd.f32 %v3620, %v4587
        %v4589 = vpop.f32.mrb[0].mxu0
        %v4590 = vadd.f32 %v3616, %v4589
        %v4591 = vpop.f32.mrb[0].mxu0
        %v4592 = vadd.f32 %v3620, %v4591
        %4593 = vmatprep.mubr.bf16.mxu0 %v3472
        %4594 = vmatmul.mubr.bf16.gmra.mrb[0].mxu0 %v3471
        %v4595 = vpop.f32.mrb[0].mxu0
        %v4596 = vadd.f32 %v3616, %v4595
        %v4597 = vpop.f32.mrb[0].mxu0
        %v4598 = vadd.f32 %v3620, %v4597
        %v4599 = vpop.f32.mrb[0].mxu0
        %v4600 = vadd.f32 %v3616, %v4599
        %v4601 = vpop.f32.mrb[0].mxu0
        %v4602 = vadd.f32 %v3620, %v4601
        %4603 = vdwg.mxu0
        %4604 = vmatprep.subr.bf16.mxu0 %v4076
        %4605 = vmatpush1.bf16.msra.mxu0 %v4075
        %4606 = vmatprep.subr.bf16.mxu0 %v4080
        %4607 = vmatpush1.bf16.msra.mxu0 %v4079
        %4608 = vmatprep.subr.bf16.mxu0 %v4084
        %4609 = vmatpush1.bf16.msra.mxu0 %v4083
        %4610 = vmatprep.subr.bf16.mxu0 %v4088
        %4611 = vmatpush1.bf16.msra.mxu0 %v4087
        %4612 = vmatprep.subr.bf16.mxu0 %v4092
        %4613 = vmatpush1.bf16.msra.mxu0 %v4091
        %4614 = vmatprep.subr.bf16.mxu0 %v4096
        %4615 = vmatpush1.bf16.msra.mxu0 %v4095
        %4616 = vmatprep.subr.bf16.mxu0 %v4100
        %4617 = vmatpush1.bf16.msra.mxu0 %v4099
        %4618 = vmatprep.subr.bf16.mxu0 %v4104
        %4619 = vmatpush1.bf16.msra.mxu0 %v4103
        %4620 = vmatprep.subr.bf16.mxu0 %v4108
        %4621 = vmatpush1.bf16.msra.mxu0 %v4107
        %4622 = vmatprep.subr.bf16.mxu0 %v4112
        %4623 = vmatpush1.bf16.msra.mxu0 %v4111
        %4624 = vmatprep.subr.bf16.mxu0 %v4116
        %4625 = vmatpush1.bf16.msra.mxu0 %v4115
        %4626 = vmatprep.subr.bf16.mxu0 %v4120
        %4627 = vmatpush1.bf16.msra.mxu0 %v4119
        %4628 = vmatprep.subr.bf16.mxu0 %v4124
        %4629 = vmatpush1.bf16.msra.mxu0 %v4123
        %4630 = vmatprep.subr.bf16.mxu0 %v4128
        %4631 = vmatpush1.bf16.msra.mxu0 %v4127
        %4632 = vmatprep.subr.bf16.mxu0 %v4132
        %4633 = vmatpush1.bf16.msra.mxu0 %v4131
        %4634 = vmatprep.subr.bf16.mxu0 %v4136
        %4635 = vmatpush1.bf16.msra.mxu0 %v4135
        %4636 = vmatprep.mubr.bf16.mxu0 %v3446
        %4637 = vmatmul.mubr.bf16.gmra.mrb[0].mxu0 %v3445
        %v4638 = vpop.f32.mrb[0].mxu0
        %v4639 = vadd.f32 %v4526, %v4638
        %v4640 = vpop.f32.mrb[0].mxu0
        %v4641 = vadd.f32 %v4528, %v4640
        %v4642 = vpop.f32.mrb[0].mxu0
        %v4643 = vadd.f32 %v4530, %v4642
        %v4644 = vpop.f32.mrb[0].mxu0
        %v4645 = vadd.f32 %v4532, %v4644
        %4646 = vmatprep.mubr.bf16.mxu0 %v3450
        %4647 = vmatmul.mubr.bf16.gmra.mrb[0].mxu0 %v3449
        %v4648 = vpop.f32.mrb[0].mxu0
        %v4649 = vadd.f32 %v4536, %v4648
        %v4650 = vpop.f32.mrb[0].mxu0
        %v4651 = vadd.f32 %v4538, %v4650
        %v4652 = vpop.f32.mrb[0].mxu0
        %v4653 = vadd.f32 %v4540, %v4652
        %v4654 = vpop.f32.mrb[0].mxu0
        %v4655 = vadd.f32 %v4542, %v4654
        %4656 = vmatprep.mubr.bf16.mxu0 %v3454
        %4657 = vmatmul.mubr.bf16.gmra.mrb[0].mxu0 %v3453
        %v4658 = vpop.f32.mrb[0].mxu0
        %v4659 = vadd.f32 %v4546, %v4658
        %v4660 = vpop.f32.mrb[0].mxu0
        %v4661 = vadd.f32 %v4548, %v4660
        %v4662 = vpop.f32.mrb[0].mxu0
        %v4663 = vadd.f32 %v4550, %v4662
        %v4664 = vpop.f32.mrb[0].mxu0
        %v4665 = vadd.f32 %v4552, %v4664
        %4666 = vmatprep.mubr.bf16.mxu0 %v3458
        %4667 = vmatmul.mubr.bf16.gmra.mrb[0].mxu0 %v3457
        %v4668 = vpop.f32.mrb[0].mxu0
        %v4669 = vadd.f32 %v4556, %v4668
        %v4670 = vpop.f32.mrb[0].mxu0
        %v4671 = vadd.f32 %v4558, %v4670
        %v4672 = vpop.f32.mrb[0].mxu0
        %v4673 = vadd.f32 %v4560, %v4672
        %v4674 = vpop.f32.mrb[0].mxu0
        %v4675 = vadd.f32 %v4562, %v4674
        %4676 = vmatprep.mubr.bf16.mxu0 %v3462
        %4677 = vmatmul.mubr.bf16.gmra.mrb[0].mxu0 %v3461
        %v4678 = vpop.f32.mrb[0].mxu0
        %v4679 = vadd.f32 %v4566, %v4678
        %v4680 = vpop.f32.mrb[0].mxu0
        %v4681 = vadd.f32 %v4568, %v4680
        %v4682 = vpop.f32.mrb[0].mxu0
        %v4683 = vadd.f32 %v4570, %v4682
        %v4684 = vpop.f32.mrb[0].mxu0
        %v4685 = vadd.f32 %v4572, %v4684
        %4686 = vmatprep.mubr.bf16.mxu0 %v3466
        %4687 = vmatmul.mubr.bf16.gmra.mrb[0].mxu0 %v3465
        %v4688 = vpop.f32.mrb[0].mxu0
        %v4689 = vadd.f32 %v4576, %v4688
        %v4690 = vpop.f32.mrb[0].mxu0
        %v4691 = vadd.f32 %v4578, %v4690
        %v4692 = vpop.f32.mrb[0].mxu0
        %v4693 = vadd.f32 %v4580, %v4692
        %v4694 = vpop.f32.mrb[0].mxu0
        %v4695 = vadd.f32 %v4582, %v4694
        %4696 = vmatprep.mubr.bf16.mxu0 %v3470
        %4697 = vmatmul.mubr.bf16.gmra.mrb[0].mxu0 %v3469
        %v4698 = vpop.f32.mrb[0].mxu0
        %v4699 = vadd.f32 %v4586, %v4698
        %v4700 = vpop.f32.mrb[0].mxu0
        %v4701 = vadd.f32 %v4588, %v4700
        %v4702 = vpop.f32.mrb[0].mxu0
        %v4703 = vadd.f32 %v4590, %v4702
        %v4704 = vpop.f32.mrb[0].mxu0
        %v4705 = vadd.f32 %v4592, %v4704
        %4706 = vmatprep.mubr.bf16.mxu0 %v3474
        %4707 = vmatmul.mubr.bf16.gmra.mrb[0].mxu0 %v3473
        %v4708 = vpop.f32.mrb[0].mxu0
        %v4709 = vadd.f32 %v4596, %v4708
        %v4710 = vpop.f32.mrb[0].mxu0
        %v4711 = vadd.f32 %v4598, %v4710
        %v4712 = vpop.f32.mrb[0].mxu0
        %v4713 = vadd.f32 %v4600, %v4712
        %v4714 = vpop.f32.mrb[0].mxu0
        %v4715 = vadd.f32 %v4602, %v4714
        %4716 = vdwg.mxu0
        %v4717 = vtanh.pop %v4413
        %v4718 = vtanh.pop %v4415
        %v4719 = vtanh.pop %v4417
        %v4720 = vtanh.pop %v4419
        %v4721 = vtanh.pop %v4423
        %v4722 = vtanh.pop %v4425
        %v4723 = vtanh.pop %v4427
        %v4724 = vtanh.pop %v4429
        %v4725 = vtanh.pop %v4433
        %v4726 = vtanh.pop %v4435
        %v4727 = vtanh.pop %v4437
        %v4728 = vtanh.pop %v4439
        %v4729 = vtanh.pop %v4443
        %v4730 = vtanh.pop %v4445
        %v4731 = vtanh.pop %v4447
        %v4732 = vtanh.pop %v4449
        %v4733 = vtanh.pop %v4453
        %v4734 = vtanh.pop %v4455
        %v4735 = vtanh.pop %v4457
        %v4736 = vtanh.pop %v4459
        %v4737 = vtanh.pop %v4463
        %v4738 = vtanh.pop %v4465
        %v4739 = vtanh.pop %v4467
        %v4740 = vtanh.pop %v4469
        %v4741 = vtanh.pop %v4473
        %v4742 = vtanh.pop %v4475
        %v4743 = vtanh.pop %v4477
        %v4744 = vtanh.pop %v4479
        %v4745 = vtanh.pop %v4483
        %v4746 = vtanh.pop %v4485
        %v4747 = vtanh.pop %v4487
        %v4748 = vtanh.pop %v4489
        %v4749 = vxor.u32 %v4639, 2147483648
        %v4750 = vxor.u32 %v4641, 2147483648
        %v4751 = vxor.u32 %v4643, 2147483648
        %v4752 = vxor.u32 %v4645, 2147483648
        %v4753 = vxor.u32 %v4649, 2147483648
        %v4754 = vxor.u32 %v4651, 2147483648
        %v4755 = vxor.u32 %v4653, 2147483648
        %v4756 = vxor.u32 %v4655, 2147483648
        %v4757 = vxor.u32 %v4659, 2147483648
        %v4758 = vxor.u32 %v4661, 2147483648
        %v4759 = vxor.u32 %v4663, 2147483648
        %v4760 = vxor.u32 %v4665, 2147483648
        %v4761 = vxor.u32 %v4669, 2147483648
        %v4762 = vxor.u32 %v4671, 2147483648
        %v4763 = vxor.u32 %v4673, 2147483648
        %v4764 = vxor.u32 %v4675, 2147483648
        %v4765 = vxor.u32 %v4679, 2147483648
        %v4766 = vxor.u32 %v4681, 2147483648
        %v4767 = vxor.u32 %v4683, 2147483648
        %v4768 = vxor.u32 %v4685, 2147483648
        %v4769 = vxor.u32 %v4689, 2147483648
        %v4770 = vxor.u32 %v4691, 2147483648
        %v4771 = vxor.u32 %v4693, 2147483648
        %v4772 = vxor.u32 %v4695, 2147483648
        %v4773 = vxor.u32 %v4699, 2147483648
        %v4774 = vxor.u32 %v4701, 2147483648
        %v4775 = vxor.u32 %v4703, 2147483648
        %v4776 = vxor.u32 %v4705, 2147483648
        %v4777 = vxor.u32 %v4709, 2147483648
        %v4778 = vxor.u32 %v4711, 2147483648
        %v4779 = vxor.u32 %v4713, 2147483648
        %v4780 = vxor.u32 %v4715, 2147483648
        %v4781 = vmul.f32 %v4749, 1.442695
        %v4782 = vpow.pop %v4781
        %v4783 = vmul.f32 %v4750, 1.442695
        %v4784 = vpow.pop %v4783
        %v4785 = vmul.f32 %v4751, 1.442695
        %v4786 = vpow.pop %v4785
        %v4787 = vmul.f32 %v4752, 1.442695
        %v4788 = vpow.pop %v4787
        %v4789 = vmul.f32 %v4753, 1.442695
        %v4790 = vpow.pop %v4789
        %v4791 = vmul.f32 %v4754, 1.442695
        %v4792 = vpow.pop %v4791
        %v4793 = vmul.f32 %v4755, 1.442695
        %v4794 = vpow.pop %v4793
        %v4795 = vmul.f32 %v4756, 1.442695
        %v4796 = vpow.pop %v4795
        %v4797 = vmul.f32 %v4757, 1.442695
        %v4798 = vpow.pop %v4797
        %v4799 = vmul.f32 %v4758, 1.442695
        %v4800 = vpow.pop %v4799
        %v4801 = vmul.f32 %v4759, 1.442695
        %v4802 = vpow.pop %v4801
        %v4803 = vmul.f32 %v4760, 1.442695
        %v4804 = vpow.pop %v4803
        %v4805 = vmul.f32 %v4761, 1.442695
        %v4806 = vpow.pop %v4805
        %v4807 = vmul.f32 %v4762, 1.442695
        %v4808 = vpow.pop %v4807
        %v4809 = vmul.f32 %v4763, 1.442695
        %v4810 = vpow.pop %v4809
        %v4811 = vmul.f32 %v4764, 1.442695
        %v4812 = vpow.pop %v4811
        %v4813 = vmul.f32 %v4765, 1.442695
        %v4814 = vpow.pop %v4813
        %v4815 = vmul.f32 %v4766, 1.442695
        %v4816 = vpow.pop %v4815
        %v4817 = vmul.f32 %v4767, 1.442695
        %v4818 = vpow.pop %v4817
        %v4819 = vmul.f32 %v4768, 1.442695
        %v4820 = vpow.pop %v4819
        %v4821 = vmul.f32 %v4769, 1.442695
        %v4822 = vpow.pop %v4821
        %v4823 = vmul.f32 %v4770, 1.442695
        %v4824 = vpow.pop %v4823
        %v4825 = vmul.f32 %v4771, 1.442695
        %v4826 = vpow.pop %v4825
        %v4827 = vmul.f32 %v4772, 1.442695
        %v4828 = vpow.pop %v4827
        %v4829 = vmul.f32 %v4773, 1.442695
        %v4830 = vpow.pop %v4829
        %v4831 = vmul.f32 %v4774, 1.442695
        %v4832 = vpow.pop %v4831
        %v4833 = vmul.f32 %v4775, 1.442695
        %v4834 = vpow.pop %v4833
        %v4835 = vmul.f32 %v4776, 1.442695
        %v4836 = vpow.pop %v4835
        %v4837 = vmul.f32 %v4777, 1.442695
        %v4838 = vpow.pop %v4837
        %v4839 = vmul.f32 %v4778, 1.442695
        %v4840 = vpow.pop %v4839
        %v4841 = vmul.f32 %v4779, 1.442695
        %v4842 = vpow.pop %v4841
        %v4843 = vmul.f32 %v4780, 1.442695
        %v4844 = vpow.pop %v4843
        %v4845 = vadd.f32 %v4782, 1.0
        %v4846 = vadd.f32 %v4784, 1.0
        %v4847 = vadd.f32 %v4786, 1.0
        %v4848 = vadd.f32 %v4788, 1.0
        %v4849 = vadd.f32 %v4790, 1.0
        %v4850 = vadd.f32 %v4792, 1.0
        %v4851 = vadd.f32 %v4794, 1.0
        %v4852 = vadd.f32 %v4796, 1.0
        %v4853 = vadd.f32 %v4798, 1.0
        %v4854 = vadd.f32 %v4800, 1.0
        %v4855 = vadd.f32 %v4802, 1.0
        %v4856 = vadd.f32 %v4804, 1.0
        %v4857 = vadd.f32 %v4806, 1.0
        %v4858 = vadd.f32 %v4808, 1.0
        %v4859 = vadd.f32 %v4810, 1.0
        %v4860 = vadd.f32 %v4812, 1.0
        %v4861 = vadd.f32 %v4814, 1.0
        %v4862 = vadd.f32 %v4816, 1.0
        %v4863 = vadd.f32 %v4818, 1.0
        %v4864 = vadd.f32 %v4820, 1.0
        %v4865 = vadd.f32 %v4822, 1.0
        %v4866 = vadd.f32 %v4824, 1.0
        %v4867 = vadd.f32 %v4826, 1.0
        %v4868 = vadd.f32 %v4828, 1.0
        %v4869 = vadd.f32 %v4830, 1.0
        %v4870 = vadd.f32 %v4832, 1.0
        %v4871 = vadd.f32 %v4834, 1.0
        %v4872 = vadd.f32 %v4836, 1.0
        %v4873 = vadd.f32 %v4838, 1.0
        %v4874 = vadd.f32 %v4840, 1.0
        %v4875 = vadd.f32 %v4842, 1.0
        %v4876 = vadd.f32 %v4844, 1.0
        %v4877 = vrcp.pop %v4845
        %v4878 = vmul.f32 1.0, %v4877
        %v4879 = vrcp.pop %v4846
        %v4880 = vmul.f32 1.0, %v4879
        %v4881 = vrcp.pop %v4847
        %v4882 = vmul.f32 1.0, %v4881
        %v4883 = vrcp.pop %v4848
        %v4884 = vmul.f32 1.0, %v4883
        %v4885 = vrcp.pop %v4849
        %v4886 = vmul.f32 1.0, %v4885
        %v4887 = vrcp.pop %v4850
        %v4888 = vmul.f32 1.0, %v4887
        %v4889 = vrcp.pop %v4851
        %v4890 = vmul.f32 1.0, %v4889
        %v4891 = vrcp.pop %v4852
        %v4892 = vmul.f32 1.0, %v4891
        %v4893 = vrcp.pop %v4853
        %v4894 = vmul.f32 1.0, %v4893
        %v4895 = vrcp.pop %v4854
        %v4896 = vmul.f32 1.0, %v4895
        %v4897 = vrcp.pop %v4855
        %v4898 = vmul.f32 1.0, %v4897
        %v4899 = vrcp.pop %v4856
        %v4900 = vmul.f32 1.0, %v4899
        %v4901 = vrcp.pop %v4857
        %v4902 = vmul.f32 1.0, %v4901
        %v4903 = vrcp.pop %v4858
        %v4904 = vmul.f32 1.0, %v4903
        %v4905 = vrcp.pop %v4859
        %v4906 = vmul.f32 1.0, %v4905
        %v4907 = vrcp.pop %v4860
        %v4908 = vmul.f32 1.0, %v4907
        %v4909 = vrcp.pop %v4861
        %v4910 = vmul.f32 1.0, %v4909
        %v4911 = vrcp.pop %v4862
        %v4912 = vmul.f32 1.0, %v4911
        %v4913 = vrcp.pop %v4863
        %v4914 = vmul.f32 1.0, %v4913
        %v4915 = vrcp.pop %v4864
        %v4916 = vmul.f32 1.0, %v4915
        %v4917 = vrcp.pop %v4865
        %v4918 = vmul.f32 1.0, %v4917
        %v4919 = vrcp.pop %v4866
        %v4920 = vmul.f32 1.0, %v4919
        %v4921 = vrcp.pop %v4867
        %v4922 = vmul.f32 1.0, %v4921
        %v4923 = vrcp.pop %v4868
        %v4924 = vmul.f32 1.0, %v4923
        %v4925 = vrcp.pop %v4869
        %v4926 = vmul.f32 1.0, %v4925
        %v4927 = vrcp.pop %v4870
        %v4928 = vmul.f32 1.0, %v4927
        %v4929 = vrcp.pop %v4871
        %v4930 = vmul.f32 1.0, %v4929
        %v4931 = vrcp.pop %v4872
        %v4932 = vmul.f32 1.0, %v4931
        %v4933 = vrcp.pop %v4873
        %v4934 = vmul.f32 1.0, %v4933
        %v4935 = vrcp.pop %v4874
        %v4936 = vmul.f32 1.0, %v4935
        %v4937 = vrcp.pop %v4875
        %v4938 = vmul.f32 1.0, %v4937
        %v4939 = vrcp.pop %v4876
        %v4940 = vmul.f32 1.0, %v4939
        %v4941 = vmul.f32 %v4717, %v4878
        %v4942 = vmul.f32 %v4718, %v4880
        %v4943 = vmul.f32 %v4719, %v4882
        %v4944 = vmul.f32 %v4720, %v4884
        %v4945 = vmul.f32 %v4721, %v4886
        %v4946 = vmul.f32 %v4722, %v4888
        %v4947 = vmul.f32 %v4723, %v4890
        %v4948 = vmul.f32 %v4724, %v4892
        %v4949 = vmul.f32 %v4725, %v4894
        %v4950 = vmul.f32 %v4726, %v4896
        %v4951 = vmul.f32 %v4727, %v4898
        %v4952 = vmul.f32 %v4728, %v4900
        %v4953 = vmul.f32 %v4729, %v4902
        %v4954 = vmul.f32 %v4730, %v4904
        %v4955 = vmul.f32 %v4731, %v4906
        %v4956 = vmul.f32 %v4732, %v4908
        %v4957 = vmul.f32 %v4733, %v4910
        %v4958 = vmul.f32 %v4734, %v4912
        %v4959 = vmul.f32 %v4735, %v4914
        %v4960 = vmul.f32 %v4736, %v4916
        %v4961 = vmul.f32 %v4737, %v4918
        %v4962 = vmul.f32 %v4738, %v4920
        %v4963 = vmul.f32 %v4739, %v4922
        %v4964 = vmul.f32 %v4740, %v4924
        %v4965 = vmul.f32 %v4741, %v4926
        %v4966 = vmul.f32 %v4742, %v4928
        %v4967 = vmul.f32 %v4743, %v4930
        %v4968 = vmul.f32 %v4744, %v4932
        %v4969 = vmul.f32 %v4745, %v4934
        %v4970 = vmul.f32 %v4746, %v4936
        %v4971 = vmul.f32 %v4747, %v4938
        %v4972 = vmul.f32 %v4748, %v4940
        %v4973 = vld [vmem:[%s5] sm:$0x3]
        %v4974 = vld [vmem:[#allocation5] sm:$0x1]
        %4976 = vset.pattern.permute.xlu0 0
        %4977 = vperm.xlu0 %4976, %v4974
        %v4978 = vpop.permute.xlu0 %4977
        %v4980 = vlaneseq
        %v4981 = vshrl.u32 %v4980, 7
        %v4982 = vsub.s32 0, %v4981
        %v4983 = vrot.slane %v4978, %v4982
        %v4985 = vlaneseq
        %v4986 = vshrl.u32 %v4985, 7
        %v4987 = vsub.s32 0, %v4986
        %v4988 = vrot.slane %v4973, %v4987
        %v4989 = vlaneseq
        %v4990 = vshrl.u32 %v4989, 7
        %v4991 = vsub.s32 1, %v4990
        %v4992 = vrot.slane %v4973, %v4991
        %4995 = vmatprep.subr.mxu0 %v4942
        %4996 = vmatpush1.xpose.msra.mxu0 %v4941
        %4997 = vmatprep.subr.mxu0 %v4944
        %4998 = vmatpush1.xpose.msra.mxu0 %v4943
        %4999 = vmatprep.subr.mxu0 %v4946
        %5000 = vmatpush1.xpose.msra.mxu0 %v4945
        %5001 = vmatprep.subr.mxu0 %v4948
        %5002 = vmatpush1.xpose.msra.mxu0 %v4947
        %5003 = vmatprep.subr.mxu0 %v4950
        %5004 = vmatpush1.xpose.msra.mxu0 %v4949
        %5005 = vmatprep.subr.mxu0 %v4952
        %5006 = vmatpush1.xpose.msra.mxu0 %v4951
        %5007 = vmatprep.subr.mxu0 %v4954
        %5008 = vmatpush1.xpose.msra.mxu0 %v4953
        %5009 = vmatprep.subr.mxu0 %v4956
        %5010 = vmatpush1.xpose.msra.mxu0 %v4955
        %5011 = vmatprep.subr.mxu0 %v4958
        %5012 = vmatpush1.xpose.msra.mxu0 %v4957
        %5013 = vmatprep.subr.mxu0 %v4960
        %5014 = vmatpush1.xpose.msra.mxu0 %v4959
        %5015 = vmatprep.subr.mxu0 %v4962
        %5016 = vmatpush1.xpose.msra.mxu0 %v4961
        %5017 = vmatprep.subr.mxu0 %v4964
        %5018 = vmatpush1.xpose.msra.mxu0 %v4963
        %5019 = vmatprep.subr.mxu0 %v4966
        %5020 = vmatpush1.xpose.msra.mxu0 %v4965
        %5021 = vmatprep.subr.mxu0 %v4968
        %5022 = vmatpush1.xpose.msra.mxu0 %v4967
        %5023 = vmatprep.subr.mxu0 %v4970
        %5024 = vmatpush1.xpose.msra.mxu0 %v4969
        %5025 = vmatprep.subr.mxu0 %v4972
        %5026 = vmatpush1.xpose.msra.mxu0 %v4971
        %5027 = vmatprep.subr.mxu0 0.0
        %5028 = vmatpush1.xpose.msra.mxu0 0.0
        %5029 = vmatprep.subr.mxu0 0.0
        %5030 = vmatpush1.xpose.msra.mxu0 0.0
        %5031 = vmatprep.subr.mxu0 0.0
        %5032 = vmatpush1.xpose.msra.mxu0 0.0
        %5033 = vmatprep.subr.mxu0 0.0
        %5034 = vmatpush1.xpose.msra.mxu0 0.0
        %5035 = vmatprep.subr.mxu0 0.0
        %5036 = vmatpush1.xpose.msra.mxu0 0.0
        %5037 = vmatprep.subr.mxu0 0.0
        %5038 = vmatpush1.xpose.msra.mxu0 0.0
        %5039 = vmatprep.subr.mxu0 0.0
        %5040 = vmatpush1.xpose.msra.mxu0 0.0
        %5041 = vmatprep.subr.mxu0 0.0
        %5042 = vmatpush1.xpose.msra.mxu0 0.0
        %5043 = vmatprep.subr.mxu0 0.0
        %5044 = vmatpush1.xpose.msra.mxu0 0.0
        %5045 = vmatprep.subr.mxu0 0.0
        %5046 = vmatpush1.xpose.msra.mxu0 0.0
        %5047 = vmatprep.subr.mxu0 0.0
        %5048 = vmatpush1.xpose.msra.mxu0 0.0
        %5049 = vmatprep.subr.mxu0 0.0
        %5050 = vmatpush1.xpose.msra.mxu0 0.0
        %5051 = vmatprep.subr.mxu0 0.0
        %5052 = vmatpush1.xpose.msra.mxu0 0.0
        %5053 = vmatprep.subr.mxu0 0.0
        %5054 = vmatpush1.xpose.msra.mxu0 0.0
        %5055 = vmatprep.subr.mxu0 0.0
        %5056 = vmatpush1.xpose.msra.mxu0 0.0
        %5057 = vmatprep.subr.mxu0 0.0
        %5058 = vmatpush1.xpose.msra.mxu0 0.0
        %5059 = vmatprep.mubr.f32.mxu0 %v4992
        %5060 = vmatmul.mubr.f32.gmra.mrb[0].mxu0 %v4988
        %v5061 = vpop.f32.mrb[0].mxu0
        %v5062 = vadd.f32 %v4983, %v5061
        %v5063 = vpop.f32.mrb[0].mxu0
        %5064 = vdwg.mxu0
        %s5065 = sadd.s32 %s40, %s41
        %s5066 = smul.u32 %s5065, 128
        %v5067 = vlaneseq
        %v5068 = vand.u32 %v5067, 127
        %v5069 = vstv %s5066
        %v5070 = vadd.s32 %v5069, %v5068
        %vm5071 = vcmp.lt.s32.totalorder %v5070, 64
        %v5072 = vsel %vm5071, %v5062, -1e+30
        %5073 = vst [vmem:[%s485] sm:$0x1] %v5072
        %v5074 = vld [vmem:[#allocation2] sm:$0x1]
        %vm5075 = vcmask 1040384
        %v5076 = vsel %vm5075, %v5072, -inf
        %5077 = vmax.xlane.f32.xlu0 %v5076
        %v5078 = vpop.xlane.xlu0 %5077
        %v5079 = vmax.f32 %v5074, %v5078
        %v5080 = vsub.f32 %v5074, %v5079
        %v5081 = vmul.f32 %v5080, 1.442695
        %v5082 = vpow.pop %v5081
        %5084 = vset.pattern.permute.xlu0 0
        %5085 = vperm.xlu0 %5084, %v5079
        %v5086 = vpop.permute.xlu0 %5085
        %v5088 = vlaneseq
        %v5089 = vshrl.u32 %v5088, 7
        %v5090 = vsub.s32 0, %v5089
        %v5091 = vrot.slane %v5086, %v5090
        %v5092 = vsub.f32 %v5072, %v5091
        %v5093 = vmul.f32 %v5092, 1.442695
        %v5094 = vpow.pop %v5093
        %v5095 = vld [vmem:[#allocation3] sm:$0x1]
        %v5096 = vmul.f32 %v5082, %v5095
        %v5097 = vsel %vm5075, %v5094, 0.0
        %5098 = vadd.xlane.f32.xlu0 %v5097
        %v5099 = vpop.xlane.xlu0 %5098
        %v5100 = vadd.f32 %v5096, %v5099
        %vm5101 = vcmask 0
        %5102 = vst.msk [vmem:[#allocation3] sm:$0x1] %vm5101, %v5100
        %v5103 = vld [vmem:[#allocation4] sm:$0xf]
        %5105 = vset.pattern.permute.xlu0 0
        %5106 = vperm.xlu0 %5105, %v5082
        %v5107 = vpop.permute.xlu0 %5106
        %v5109 = vlaneseq
        %v5110 = vshrl.u32 %v5109, 7
        %v5111 = vsub.s32 0, %v5110
        %v5112 = vrot.slane %v5107, %v5111
        %v5113 = vmul.f32 %v5112, %v5103
        %v5114 = vpack.c.bf16 %v5094, %v5094
        %5115 = vmatprep.subr.bf16.mxu0 %v3444
        %5116 = vmatpush1.bf16.msra.mxu0 %v3443
        %5117 = vmatprep.subr.bf16.mxu0 %v3448
        %5118 = vmatpush1.bf16.msra.mxu0 %v3447
        %5119 = vmatprep.subr.bf16.mxu0 %v3452
        %5120 = vmatpush1.bf16.msra.mxu0 %v3451
        %5121 = vmatprep.subr.bf16.mxu0 %v3456
        %5122 = vmatpush1.bf16.msra.mxu0 %v3455
        %5123 = vmatprep.subr.bf16.mxu0 %v3460
        %5124 = vmatpush1.bf16.msra.mxu0 %v3459
        %5125 = vmatprep.subr.bf16.mxu0 %v3464
        %5126 = vmatpush1.bf16.msra.mxu0 %v3463
        %5127 = vmatprep.subr.bf16.mxu0 %v3468
        %5128 = vmatpush1.bf16.msra.mxu0 %v3467
        %5129 = vmatprep.subr.bf16.mxu0 %v3472
        %5130 = vmatpush1.bf16.msra.mxu0 %v3471
        %5131 = vmatprep.subr.bf16.mxu0 0
        %5132 = vmatpush1.bf16.msra.mxu0 0
        %5133 = vmatprep.subr.bf16.mxu0 0
        %5134 = vmatpush1.bf16.msra.mxu0 0
        %5135 = vmatprep.subr.bf16.mxu0 0
        %5136 = vmatpush1.bf16.msra.mxu0 0
        %5137 = vmatprep.subr.bf16.mxu0 0
        %5138 = vmatpush1.bf16.msra.mxu0 0
        %5139 = vmatprep.subr.bf16.mxu0 0
        %5140 = vmatpush1.bf16.msra.mxu0 0
        %5141 = vmatprep.subr.bf16.mxu0 0
        %5142 = vmatpush1.bf16.msra.mxu0 0
        %5143 = vmatprep.subr.bf16.mxu0 0
        %5144 = vmatpush1.bf16.msra.mxu0 0
        %5145 = vmatprep.subr.bf16.mxu0 0
        %5146 = vmatpush1.bf16.msra.mxu0 0
        %5147 = vmatprep.mubr.bf16.mxu0 0
        %5148 = vmatmul.mubr.bf16.gmra.mrb[0].mxu0 %v5114
        %v5149 = vpop.f32.mrb[0].mxu0
        %v5150 = vadd.f32 0.0, %v5149
        %v5151 = vpop.f32.mrb[0].mxu0
        %v5152 = vadd.f32 0.0, %v5151
        %v5153 = vpop.f32.mrb[0].mxu0
        %v5154 = vpop.f32.mrb[0].mxu0
        %5155 = vdwg.mxu0
        %5156 = vmatprep.subr.bf16.mxu0 %v3446
        %5157 = vmatpush1.bf16.msra.mxu0 %v3445
        %5158 = vmatprep.subr.bf16.mxu0 %v3450
        %5159 = vmatpush1.bf16.msra.mxu0 %v3449
        %5160 = vmatprep.subr.bf16.mxu0 %v3454
        %5161 = vmatpush1.bf16.msra.mxu0 %v3453
        %5162 = vmatprep.subr.bf16.mxu0 %v3458
        %5163 = vmatpush1.bf16.msra.mxu0 %v3457
        %5164 = vmatprep.subr.bf16.mxu0 %v3462
        %5165 = vmatpush1.bf16.msra.mxu0 %v3461
        %5166 = vmatprep.subr.bf16.mxu0 %v3466
        %5167 = vmatpush1.bf16.msra.mxu0 %v3465
        %5168 = vmatprep.subr.bf16.mxu0 %v3470
        %5169 = vmatpush1.bf16.msra.mxu0 %v3469
        %5170 = vmatprep.subr.bf16.mxu0 %v3474
        %5171 = vmatpush1.bf16.msra.mxu0 %v3473
        %5172 = vmatprep.subr.bf16.mxu0 0
        %5173 = vmatpush1.bf16.msra.mxu0 0
        %5174 = vmatprep.subr.bf16.mxu0 0
        %5175 = vmatpush1.bf16.msra.mxu0 0
        %5176 = vmatprep.subr.bf16.mxu0 0
        %5177 = vmatpush1.bf16.msra.mxu0 0
        %5178 = vmatprep.subr.bf16.mxu0 0
        %5179 = vmatpush1.bf16.msra.mxu0 0
        %5180 = vmatprep.subr.bf16.mxu0 0
        %5181 = vmatpush1.bf16.msra.mxu0 0
        %5182 = vmatprep.subr.bf16.mxu0 0
        %5183 = vmatpush1.bf16.msra.mxu0 0
        %5184 = vmatprep.subr.bf16.mxu0 0
        %5185 = vmatpush1.bf16.msra.mxu0 0
        %5186 = vmatprep.subr.bf16.mxu0 0
        %5187 = vmatpush1.bf16.msra.mxu0 0
        %5188 = vmatprep.mubr.bf16.mxu0 0
        %5189 = vmatmul.mubr.bf16.gmra.mrb[0].mxu0 %v5114
        %v5190 = vpop.f32.mrb[0].mxu0
        %v5191 = vadd.f32 0.0, %v5190
        %v5192 = vpop.f32.mrb[0].mxu0
        %v5193 = vadd.f32 0.0, %v5192
        %v5194 = vpop.f32.mrb[0].mxu0
        %v5195 = vpop.f32.mrb[0].mxu0
        %5196 = vdwg.mxu0
        %v5201 = vcombine.low %v5150, %v5152
        %v5202 = vcombine.low %v5191, %v5193
        %v5204 = vunpack.c.l.s4 1966171168
        %v5205 = vunpack.c.0.s8 %v5204
        %v5206 = vlaneseq
        %v5207 = vshrl.u32 %v5206, 7
        %v5208 = vsub.s32 %v5205, %v5207
        %v5209 = vrot.slane %v5201, %v5208
        %v5211 = vunpack.c.l.s4 1966171168
        %v5212 = vunpack.c.0.s8 %v5211
        %v5213 = vlaneseq
        %v5214 = vshrl.u32 %v5213, 7
        %v5215 = vsub.s32 %v5212, %v5214
        %v5216 = vrot.slane %v5202, %v5215
        %v5217 = vcombine.low %v5209, %v5216
        %v5219 = vunpack.c.l.s4 1966171168
        %v5220 = vunpack.c.0.s8 %v5219
        %v5221 = vlaneseq
        %v5222 = vshrl.u32 %v5221, 7
        %v5223 = vsub.s32 %v5220, %v5222
        %v5224 = vrot.slane %v5217, %v5223
        %v5226 = vadd.f32 %v5113, %v5224
        %v5227 = vlaneseq
        %vm5228 = vcmp.ge.s32.totalorder %v5227, 0
        %vm5229 = vcmp.lt.s32.totalorder %v5227, 512
        %vm5230 = vmand %vm5228, %vm5229
        %5231 = vst.msk [vmem:[#allocation4] sm:$0xf] %vm5230, %v5226
        %5232 = vst.msk [vmem:[#allocation2] sm:$0x1] %vm5101, %v5079
        %v5233 = vld [vmem:[%s7] sm:$0xf]
        %v5236 = vunpack.c.l.s4 1966171168
        %v5237 = vunpack.c.0.s8 %v5236
        %v5238 = vlaneseq
        %v5239 = vshrl.u32 %v5238, 7
        %v5240 = vsub.s32 %v5237, %v5239
        %v5241 = vrot.slane %v5233, %v5240
        %v5242 = vcombine.high %v5241, %v5241
        %v5244 = vunpack.c.l.s4 1966171168
        %v5245 = vunpack.c.0.s8 %v5244
        %v5246 = vlaneseq
        %v5247 = vshrl.u32 %v5246, 7
        %v5248 = vsub.s32 %v5245, %v5247
        %v5249 = vrot.slane %v5241, %v5248
        %v5251 = vunpack.c.l.s4 1966171168
        %v5252 = vunpack.c.0.s8 %v5251
        %v5253 = vlaneseq
        %v5254 = vshrl.u32 %v5253, 7
        %v5255 = vsub.s32 %v5252, %v5254
        %v5256 = vrot.slane %v5242, %v5255
        %v5257 = vcombine.high %v5249, %v5249
        %v5258 = vcombine.high %v5256, %v5256
        %5263 = vmatprep.subr.bf16.mxu0 %v3444
        %5264 = vmatpush1.bf16.xpose.msra.mxu0 %v3443
        %5265 = vmatprep.subr.bf16.mxu0 %v3448
        %5266 = vmatpush1.bf16.xpose.msra.mxu0 %v3447
        %5267 = vmatprep.subr.bf16.mxu0 %v3452
        %5268 = vmatpush1.bf16.xpose.msra.mxu0 %v3451
        %5269 = vmatprep.subr.bf16.mxu0 %v3456
        %5270 = vmatpush1.bf16.xpose.msra.mxu0 %v3455
        %5271 = vmatprep.subr.bf16.mxu0 %v3460
        %5272 = vmatpush1.bf16.xpose.msra.mxu0 %v3459
        %5273 = vmatprep.subr.bf16.mxu0 %v3464
        %5274 = vmatpush1.bf16.xpose.msra.mxu0 %v3463
        %5275 = vmatprep.subr.bf16.mxu0 %v3468
        %5276 = vmatpush1.bf16.xpose.msra.mxu0 %v3467
        %5277 = vmatprep.subr.bf16.mxu0 %v3472
        %5278 = vmatpush1.bf16.xpose.msra.mxu0 %v3471
        %5279 = vmatprep.subr.bf16.mxu0 0
        %5280 = vmatpush1.bf16.xpose.msra.mxu0 0
        %5281 = vmatprep.subr.bf16.mxu0 0
        %5282 = vmatpush1.bf16.xpose.msra.mxu0 0
        %5283 = vmatprep.subr.bf16.mxu0 0
        %5284 = vmatpush1.bf16.xpose.msra.mxu0 0
        %5285 = vmatprep.subr.bf16.mxu0 0
        %5286 = vmatpush1.bf16.xpose.msra.mxu0 0
        %5287 = vmatprep.subr.bf16.mxu0 0
        %5288 = vmatpush1.bf16.xpose.msra.mxu0 0
        %5289 = vmatprep.subr.bf16.mxu0 0
        %5290 = vmatpush1.bf16.xpose.msra.mxu0 0
        %5291 = vmatprep.subr.bf16.mxu0 0
        %5292 = vmatpush1.bf16.xpose.msra.mxu0 0
        %5293 = vmatprep.subr.bf16.mxu0 0
        %5294 = vmatpush1.bf16.xpose.msra.mxu0 0
        %5295 = vmatprep.mubr.bf16.mxu0 %v5256
        %5296 = vmatmul.mubr.bf16.gmra.mrb[0].mxu0 %v5249
        %v5297 = vpop.f32.mrb[0].mxu0
        %v5298 = vadd.f32 0.0, %v5297
        %v5299 = vpop.f32.mrb[0].mxu0
        %v5300 = vpop.f32.mrb[0].mxu0
        %v5301 = vpop.f32.mrb[0].mxu0
        %5302 = vdwg.mxu0
        %5303 = vmatprep.subr.bf16.mxu0 %v3446
        %5304 = vmatpush1.bf16.xpose.msra.mxu0 %v3445
        %5305 = vmatprep.subr.bf16.mxu0 %v3450
        %5306 = vmatpush1.bf16.xpose.msra.mxu0 %v3449
        %5307 = vmatprep.subr.bf16.mxu0 %v3454
        %5308 = vmatpush1.bf16.xpose.msra.mxu0 %v3453
        %5309 = vmatprep.subr.bf16.mxu0 %v3458
        %5310 = vmatpush1.bf16.xpose.msra.mxu0 %v3457
        %5311 = vmatprep.subr.bf16.mxu0 %v3462
        %5312 = vmatpush1.bf16.xpose.msra.mxu0 %v3461
        %5313 = vmatprep.subr.bf16.mxu0 %v3466
        %5314 = vmatpush1.bf16.xpose.msra.mxu0 %v3465
        %5315 = vmatprep.subr.bf16.mxu0 %v3470
        %5316 = vmatpush1.bf16.xpose.msra.mxu0 %v3469
        %5317 = vmatprep.subr.bf16.mxu0 %v3474
        %5318 = vmatpush1.bf16.xpose.msra.mxu0 %v3473
        %5319 = vmatprep.subr.bf16.mxu0 0
        %5320 = vmatpush1.bf16.xpose.msra.mxu0 0
        %5321 = vmatprep.subr.bf16.mxu0 0
        %5322 = vmatpush1.bf16.xpose.msra.mxu0 0
        %5323 = vmatprep.subr.bf16.mxu0 0
        %5324 = vmatpush1.bf16.xpose.msra.mxu0 0
        %5325 = vmatprep.subr.bf16.mxu0 0
        %5326 = vmatpush1.bf16.xpose.msra.mxu0 0
        %5327 = vmatprep.subr.bf16.mxu0 0
        %5328 = vmatpush1.bf16.xpose.msra.mxu0 0
        %5329 = vmatprep.subr.bf16.mxu0 0
        %5330 = vmatpush1.bf16.xpose.msra.mxu0 0
        %5331 = vmatprep.subr.bf16.mxu0 0
        %5332 = vmatpush1.bf16.xpose.msra.mxu0 0
        %5333 = vmatprep.subr.bf16.mxu0 0
        %5334 = vmatpush1.bf16.xpose.msra.mxu0 0
        %5335 = vmatprep.mubr.bf16.mxu0 %v5258
        %5336 = vmatmul.mubr.bf16.gmra.mrb[0].mxu0 %v5257
        %v5337 = vpop.f32.mrb[0].mxu0
        %v5338 = vadd.f32 %v5298, %v5337
        %v5339 = vpop.f32.mrb[0].mxu0
        %v5340 = vpop.f32.mrb[0].mxu0
        %v5341 = vpop.f32.mrb[0].mxu0
        %5342 = vdwg.mxu0
        %5343 = vst [vmem:[%s492] sm:$0x3] %v5338
        // Predicated region
        $region69: #{tpu_custom_call.1} parent=51 // pred_check
          %p5344 = pneg %p521
        $region70: #{tpu_custom_call.1} parent=51 // pred_check_branch
          %5346 = sbr.rel (%p5344) target = $region72
        $region71: #{tpu_custom_call.1} parent=51 // pred_region
          %v5347 = vld [vmem:[#allocation2] sm:$0x1]
          %5348 = vst.msk [vmem:[%s516] sm:$0x1] %vm5101, %v5347
          %v5349 = vld [vmem:[#allocation3] sm:$0x1]
          %5350 = vst.msk [vmem:[%s519] sm:$0x1] %vm5101, %v5349
          %v5351 = vld [vmem:[#allocation4] sm:$0xf]
          %5352 = vst.msk [vmem:[%s509] sm:$0xf] %vm5230, %v5351
        $region72: #{tpu_custom_call.1} parent=51 // pred_fallthru
          _
        %s5353 = sand.u32 %s233, 1
        %s5354 = scalar_lea.sflag [#allocation8], %s5353
        %s5355 = sand.u32 %s233, 1
        %s5356 = scalar_lea.vmem [#allocation12], %s5355
        %s5357 = sand.u32 %s36, 1
        %s5358 = scalar_lea.sflag [#allocation14], %s5357
        %s5359 = sand.u32 %s261, 1
        %s5360 = smul.addr %s5359, 2
        %s5361 = scalar_lea.vmem [#allocation13], %s5360
        %p5362 = scmp.lt.s32.totalorder %s40, 1
        %s5363 = scalar_select %p5362, %s40, 1
        %s5364 = scalar_lea.vmem %s10, %s5363
        %p5365 = scmp.lt.s32.totalorder %s40, 1
        %s5366 = scalar_select %p5365, %s40, 1
        %s5367 = scalar_lea.vmem %s11, %s5366
        %s5368 = sand.u32 %s36, 1
        %s5369 = scalar_lea.sflag [#allocation14], %s5368
        %s5370 = sand.u32 %s339, 1
        %s5371 = smul.addr %s5370, 4
        %s5372 = scalar_lea.vmem [#allocation15], %s5371
        // Predicated region
        $region73: #{tpu_custom_call.1} parent=51 // pred_check
          %p5373 = pneg %p243
        $region74: #{tpu_custom_call.1} parent=51 // pred_check_branch
          %5375 = sbr.rel (%p5373) target = $region76
        $region75: #{tpu_custom_call.1} parent=51 // pred_region
          %s5376 = sadd.s32 %s40, %s41
          %s5378 = ssub.s32 16, 16
          %5379 = vsyncadd %s5354, %s5378
          %s5380 = smul.addr %s5376, 16
          %s5381 = scalar_lea.hbm %s8, %s5380
          %s5383 = sshll.u32 %s5356, 4
          %s5384 = int_to_ptr.vmem [resolvable:$true] %s5383
          %5386 = dma.vmem_to_hbm [thread:$0]  %s5384, 16, %s5381, %s5354
        $region76: #{tpu_custom_call.1} parent=51 // pred_fallthru
          _
        // Predicated region
        $region77: #{tpu_custom_call.1} parent=51 // pred_check
          %p5387 = pneg %p271
        $region78: #{tpu_custom_call.1} parent=51 // pred_check_branch
          %5389 = sbr.rel (%p5387) target = $region80
        $region79: #{tpu_custom_call.1} parent=51 // pred_region
          %s5390 = sadd.s32 %s40, %s41
          %s5392 = ssub.s32 32, 32
          %5393 = vsyncadd %s5358, %s5392
          %s5394 = smul.addr %s5390, 32
          %s5395 = scalar_lea.hbm %s9, %s5394
          %s5397 = sshll.u32 %s5361, 4
          %s5398 = int_to_ptr.vmem [resolvable:$true] %s5397
          %5400 = dma.vmem_to_hbm [thread:$0]  %s5398, 32, %s5395, %s5358
        $region80: #{tpu_custom_call.1} parent=51 // pred_fallthru
          _
        // Predicated region
        $region81: #{tpu_custom_call.1} parent=51 // pred_check
          %p5401 = pneg %p297
        $region82: #{tpu_custom_call.1} parent=51 // pred_check_branch
          %5403 = sbr.rel (%p5401) target = $region84
        $region83: #{tpu_custom_call.1} parent=51 // pred_region
          _
        $region84: #{tpu_custom_call.1} parent=51 // pred_fallthru
          _
        // Predicated region
        $region85: #{tpu_custom_call.1} parent=51 // pred_check
          %p5404 = pneg %p323
        $region86: #{tpu_custom_call.1} parent=51 // pred_check_branch
          %5406 = sbr.rel (%p5404) target = $region88
        $region87: #{tpu_custom_call.1} parent=51 // pred_region
          _
        $region88: #{tpu_custom_call.1} parent=51 // pred_fallthru
          _
        // Predicated region
        $region89: #{tpu_custom_call.1} parent=51 // pred_check
          %p5407 = pneg %p349
        $region90: #{tpu_custom_call.1} parent=51 // pred_check_branch
          %5409 = sbr.rel (%p5407) target = $region92
        $region91: #{tpu_custom_call.1} parent=51 // pred_region
          %s5411 = ssub.s32 64, 64
          %5412 = vsyncadd %s5369, %s5411
          %s5413 = smul.addr %s40, 4
          %s5414 = smul.addr %s5413, 16
          %s5415 = scalar_lea.hbm %s12, %s5414
          %s5417 = sshll.u32 %s5372, 4
          %s5418 = int_to_ptr.vmem [resolvable:$true] %s5417
          %5420 = dma.vmem_to_hbm [thread:$0]  %s5418, 64, %s5415, %s5369
        $region92: #{tpu_custom_call.1} parent=51 // pred_fallthru
          _
      $region52: #{tpu_custom_call.1} parent=5 // pred_fallthru
        _
      %p5421 = scmp.le.s32.totalorder 2, %s31
      // Predicated region
      $region93: #{tpu_custom_call.1} parent=5 // pred_check
        %p5422 = pneg %p5421
      $region94: #{tpu_custom_call.1} parent=5 // pred_check_branch
        %5424 = sbr.rel (%p5422) target = $region96
      $region95: #{tpu_custom_call.1} parent=5 // pred_region
        %s5425 = ssub.s32 %s31, 2
        // Predicated region
        $region97: #{tpu_custom_call.1} parent=95 // pred_check
          %p5426 = pneg %p249
        $region98: #{tpu_custom_call.1} parent=95 // pred_check_branch
          %5428 = sbr.rel (%p5426) target = $region100
        $region99: #{tpu_custom_call.1} parent=95 // pred_region
          %s5429 = sand.u32 %s234, 1
          %s5430 = scalar_lea.sflag [#allocation8], %s5429
          %s5431 = sand.u32 %s234, 1
          %s5432 = scalar_lea.vmem [#allocation12], %s5431
          %5433 = dma.done %s5430, 16
        $region100: #{tpu_custom_call.1} parent=95 // pred_fallthru
          _
        // Predicated region
        $region101: #{tpu_custom_call.1} parent=95 // pred_check
          %p5434 = pneg %p277
        $region102: #{tpu_custom_call.1} parent=95 // pred_check_branch
          %5436 = sbr.rel (%p5434) target = $region104
        $region103: #{tpu_custom_call.1} parent=95 // pred_region
          %s5437 = sand.u32 %s37, 1
          %s5438 = scalar_lea.sflag [#allocation14], %s5437
          %s5439 = sand.u32 %s262, 1
          %s5440 = smul.addr %s5439, 2
          %s5441 = scalar_lea.vmem [#allocation13], %s5440
          %5442 = dma.done %s5438, 32
        $region104: #{tpu_custom_call.1} parent=95 // pred_fallthru
          _
        // Predicated region
        $region105: #{tpu_custom_call.1} parent=95 // pred_check
          %p5443 = pneg %p303
        $region106: #{tpu_custom_call.1} parent=95 // pred_check_branch
          %5445 = sbr.rel (%p5443) target = $region108
        $region107: #{tpu_custom_call.1} parent=95 // pred_region
          %p5446 = scmp.lt.s32.totalorder %s42, 1
          %s5447 = scalar_select %p5446, %s42, 1
          %s5448 = scalar_lea.vmem %s10, %s5447
        $region108: #{tpu_custom_call.1} parent=95 // pred_fallthru
          _
        // Predicated region
        $region109: #{tpu_custom_call.1} parent=95 // pred_check
          %p5449 = pneg %p329
        $region110: #{tpu_custom_call.1} parent=95 // pred_check_branch
          %5451 = sbr.rel (%p5449) target = $region112
        $region111: #{tpu_custom_call.1} parent=95 // pred_region
          %p5452 = scmp.lt.s32.totalorder %s42, 1
          %s5453 = scalar_select %p5452, %s42, 1
          %s5454 = scalar_lea.vmem %s11, %s5453
        $region112: #{tpu_custom_call.1} parent=95 // pred_fallthru
          _
        // Predicated region
        $region113: #{tpu_custom_call.1} parent=95 // pred_check
          %p5455 = pneg %p355
        $region114: #{tpu_custom_call.1} parent=95 // pred_check_branch
          %5457 = sbr.rel (%p5455) target = $region116
        $region115: #{tpu_custom_call.1} parent=95 // pred_region
          %s5458 = sand.u32 %s37, 1
          %s5459 = scalar_lea.sflag [#allocation14], %s5458
          %s5460 = sand.u32 %s340, 1
          %s5461 = smul.addr %s5460, 4
          %s5462 = scalar_lea.vmem [#allocation15], %s5461
          %5463 = dma.done %s5459, 64
        $region116: #{tpu_custom_call.1} parent=95 // pred_fallthru
          _
      $region96: #{tpu_custom_call.1} parent=5 // pred_fallthru
        _
    $region6: #{tpu_custom_call.1} parent=1 // loop_footer
      %s35 = sadd.s32 1, %s31
    $region7: #{tpu_custom_call.1} parent=1 // loop_footer_branch
      %30 = sbr.rel target = $region3
    $region8: #{tpu_custom_call.1} parent=1 // loop_exit
      _
    %5464 = vsyncpa [#allocation7], 1
    %s5465 = scalar_lea.sflag [#allocation7], 1
    %5466 = vsyncpa %s5465, 1
    %5467 = vsyncpa [#allocation10], 1
    %5468 = vsyncpa [#allocation8], 1
    %s5469 = scalar_lea.sflag [#allocation8], 1
    %5470 = vsyncpa %s5469, 1
    %5471 = vsyncpa [#allocation14], 1
    %s5472 = scalar_lea.sflag [#allocation14], 1
    %5473 = vsyncpa %s5472, 1

</llo_original>
